<compile_context>
chip_gen: v7x
topology: tpu7x:2x2x1
jax: 0.10.0
libtpu: 0.0.40
codegen_flags: <defaults>
</compile_context>

<pallas_src>
import jax
import jax.numpy as jnp
from jax.experimental import pallas as pl
from jax.experimental.pallas import tpu as pltpu

# ----------------------------- problem sizes --------------------------------
N = 16            # nodes / rows per instance (BatchNorm + MSE statistics group)
IN_DIM = 32       # in_dim
HIDDEN = 32       # hidden_dim
OUT_DIM = 16      # out_dim
NUM_LAYERS = 2    # num_layers of HGNN
BN_EPS = 1e-5
INV_N = 1.0 / float(N)
INV_LOSS = 1.0 / float(N * OUT_DIM)

BATCH_BLOCK = 8   # instances per grid step -> M = BATCH_BLOCK*N = 128 stacked rows.
                  # (Use 16 -> M=256 to fill a full v6e/v7x MXU pass when batches allow.)


def _align8(n: int) -> int:
    return ((n + 7) // 8) * 8


def _align_up(n: int, m: int) -> int:
    return ((n + m - 1) // m) * m


# --------------------- packed parameter buffer layout (lane-dense) -----------
P_COLS = 128
LANE_W_MLP = 0
LANE_W_LAY0 = HIDDEN                         # layer i weights at lanes HIDDEN*(i+1)
LANE_W_OUT = HIDDEN * (NUM_LAYERS + 1)       # 96
assert LANE_W_OUT + OUT_DIM <= P_COLS, "param layout assumes (L+1)*HIDDEN + OUT_DIM <= 128"
W_ROWS = max(IN_DIM, HIDDEN)                 # 32 rows of weight matrices
ROW_VEC = W_ROWS                             # biases row
ROW_BN = W_ROWS + 1                          # gamma | beta row
ROW_MISC = W_ROWS + 2                        # PReLU slopes row
P_ROWS = _align8(W_ROWS + 3)                 # 40

# --------------------- packed per-instance data layout -----------------------
DCOL_H = 0                                   # lanes [0:16)   hypergraph matrix rows
DCOL_HE = N                                  # lanes [16:48)  node features
DCOL_X = N + IN_DIM                          # lanes [48:64)  regression targets
DATA_COLS = N + IN_DIM + OUT_DIM             # 64

# --------------------- packed lane-dense output layout -----------------------
OCOL_ENC = 0                                 # lanes [0:32)   enc
OCOL_Y = HIDDEN                              # lanes [32:48)  x_prime
OCOL_LOSS = HIDDEN + OUT_DIM                 # lanes [48:64)  per-instance loss (broadcast)
OUT_COLS = 128                               # padded to a full lane tile -> dense writeback


def pack_params(params):
    """Pack the 9 tensor params into one lane-dense [P_ROWS, 128] f32 buffer (one-time)."""
    (w_mlp, b_mlp, gamma, beta, w_lay, b_lay, a_lay, w_out, b_out) = params
    P = jnp.zeros((P_ROWS, P_COLS), jnp.float32)
    P = P.at[0:IN_DIM, LANE_W_MLP:LANE_W_MLP + HIDDEN].set(w_mlp)
    for i in range(NUM_LAYERS):
        P = P.at[0:HIDDEN, LANE_W_LAY0 + i * HIDDEN:LANE_W_LAY0 + (i + 1) * HIDDEN].set(w_lay[i])
    P = P.at[0:HIDDEN, LANE_W_OUT:LANE_W_OUT + OUT_DIM].set(w_out)
    P = P.at[ROW_VEC, 0:HIDDEN].set(b_mlp.reshape(HIDDEN))
    for i in range(NUM_LAYERS):
        P = P.at[ROW_VEC, HIDDEN * (i + 1):HIDDEN * (i + 2)].set(b_lay[i].reshape(HIDDEN))
    P = P.at[ROW_VEC, LANE_W_OUT:LANE_W_OUT + OUT_DIM].set(b_out.reshape(OUT_DIM))
    P = P.at[ROW_BN, 0:HIDDEN].set(gamma.reshape(HIDDEN))
    P = P.at[ROW_BN, HIDDEN:2 * HIDDEN].set(beta.reshape(HIDDEN))
    P = P.at[ROW_MISC, 0:NUM_LAYERS].set(a_lay.reshape(NUM_LAYERS).astype(jnp.float32))
    return P


# --------------------------------- kernel -----------------------------------
def predictor_kernel(data_ref, p_ref, out_ref):
    f32 = jnp.float32
    BI = data_ref.shape[0]
    M = BI * N                                               # stacked rows for shared matmuls

    Hm = data_ref[:, :, DCOL_H:DCOL_H + N]                   # (BI, N, N)
    he = data_ref[:, :, DCOL_HE:DCOL_HE + IN_DIM]            # (BI, N, IN)
    xt = data_ref[:, :, DCOL_X:DCOL_X + OUT_DIM]             # (BI, N, OUT)

    # ---- mlp: Linear(in, hidden) on the stacked M rows -> LeakyReLU(0.1) ----
    w_mlp = p_ref[0:IN_DIM, LANE_W_MLP:LANE_W_MLP + HIDDEN]
    b_mlp = p_ref[ROW_VEC:ROW_VEC + 1, 0:HIDDEN]
    h = jnp.dot(he.reshape(M, IN_DIM), w_mlp, preferred_element_type=f32) + b_mlp
    h = jnp.where(h >= 0, h, 0.1 * h)

    # ---- BatchNorm1d (training stats), per instance (16-row groups), folded ----
    gamma = p_ref[ROW_BN:ROW_BN + 1, 0:HIDDEN]
    beta = p_ref[ROW_BN:ROW_BN + 1, HIDDEN:2 * HIDDEN]
    h3 = h.reshape(BI, N, HIDDEN)
    mean = jnp.sum(h3, axis=1, keepdims=True) * INV_N                         # (BI,1,H)
    ctr = h3 - mean
    var = jnp.sum(ctr * ctr, axis=1, keepdims=True) * INV_N                   # two-pass var
    scale = gamma * jax.lax.rsqrt(var + BN_EPS)                               # (BI,1,H)
    shift = beta - mean * scale
    X = h3 * scale + shift                                                    # (BI,N,H)

    # ---- HGNN conv stack: X <- H @ (X W_i + b_i); PReLU between layers ----
    for i in range(NUM_LAYERS):                      # static unroll
        w_i = p_ref[0:HIDDEN, LANE_W_LAY0 + i * HIDDEN:LANE_W_LAY0 + (i + 1) * HIDDEN]
        b_i = p_ref[ROW_VEC:ROW_VEC + 1, HIDDEN * (i + 1):HIDDEN * (i + 2)]
        XW = jnp.dot(X.reshape(M, HIDDEN), w_i, preferred_element_type=f32) + b_i
        Xi = jnp.einsum('bnm,bmd->bnd', Hm, XW.reshape(BI, N, HIDDEN),
                        preferred_element_type=f32)
        if i < NUM_LAYERS - 1:
            a = p_ref[ROW_MISC:ROW_MISC + 1, i:i + 1]        # (1,1) PReLU slope
            Xi2 = Xi.reshape(M, HIDDEN)
            Xi = jnp.where(Xi2 >= 0, Xi2, a * Xi2).reshape(BI, N, HIDDEN)
        X = Xi
    enc = X                                                  # (BI, N, H)

    # ---- head: Linear(hidden, out_dim) on F.leaky_relu(enc) (slope 0.01) ----
    w_out = p_ref[0:HIDDEN, LANE_W_OUT:LANE_W_OUT + OUT_DIM]
    b_out = p_ref[ROW_VEC:ROW_VEC + 1, LANE_W_OUT:LANE_W_OUT + OUT_DIM]
    e2 = enc.reshape(M, HIDDEN)
    y = (jnp.dot(jnp.where(e2 >= 0, e2, 0.01 * e2), w_out,
                 preferred_element_type=f32) + b_out).reshape(BI, N, OUT_DIM)

    # ---- per-instance MSE loss (mean over N*OUT_DIM elements) ----
    diff = y - xt
    sq = diff * diff
    loss = jnp.sum(jnp.sum(sq, axis=2, keepdims=True), axis=1, keepdims=True) * INV_LOSS

    # ---- single lane-dense output slab: [enc | x_prime | loss | 0-pad] ----
    out_ref[:, :, OCOL_ENC:OCOL_ENC + HIDDEN] = enc
    out_ref[:, :, OCOL_Y:OCOL_Y + OUT_DIM] = y
    out_ref[:, :, OCOL_LOSS:OCOL_LOSS + OUT_DIM] = jnp.broadcast_to(loss, (BI, N, OUT_DIM))
    out_ref[:, :, OCOL_LOSS + OUT_DIM:OUT_COLS] = jnp.zeros(
        (BI, N, OUT_COLS - OCOL_LOSS - OUT_DIM), f32)


# -------------------------------- wrappers ------------------------------------
def _cost_estimate(n_instances):
    m = n_instances * N
    flops = m * (2 * IN_DIM * HIDDEN
                 + NUM_LAYERS * (2 * HIDDEN * HIDDEN + 2 * N * HIDDEN)
                 + 2 * HIDDEN * OUT_DIM)
    bytes_accessed = 4 * (n_instances * N * DATA_COLS + P_ROWS * P_COLS
                          + n_instances * N * OUT_COLS)
    return pl.CostEstimate(flops=int(flops),
                           transcendentals=int(n_instances * HIDDEN),
                           bytes_accessed=int(bytes_accessed))


@jax.jit
def predictor_forward_batched(H, he_rep, x, packed_params):
    """Batched forward.  H:(B,N,N), he_rep:(B,N,IN), x:(B,N,OUT)
       -> (loss:(B,), x_prime:(B,N,OUT), enc:(B,N,H)) — per-instance semantics."""
    B = H.shape[0]
    Bp = _align_up(B, BATCH_BLOCK)
    data = jnp.concatenate([H, he_rep, x], axis=-1).astype(jnp.float32)     # (B, N, 64)
    if Bp != B:                                                             # pad instance count
        data = jnp.concatenate(
            [data, jnp.zeros((Bp - B, N, DATA_COLS), jnp.float32)], axis=0)

    grid_spec = pltpu.PrefetchScalarGridSpec(
        num_scalar_prefetch=0,
        grid=(Bp // BATCH_BLOCK,),
        in_specs=[
            pl.BlockSpec((BATCH_BLOCK, N, DATA_COLS), lambda b: (b, 0, 0)),
            pl.BlockSpec((P_ROWS, P_COLS), lambda b: (0, 0)),   # constant index -> resident
        ],
        out_specs=pl.BlockSpec((BATCH_BLOCK, N, OUT_COLS), lambda b: (b, 0, 0)),
    )
    out = pl.pallas_call(
        predictor_kernel,
        out_shape=jax.ShapeDtypeStruct((Bp, N, OUT_COLS), jnp.float32),
        grid_spec=grid_spec,
        compiler_params=pltpu.CompilerParams(
            dimension_semantics=("parallel",),          # shard instance blocks over TCs (v7x)
            vmem_limit_bytes=32 * 1024 * 1024),
        cost_estimate=_cost_estimate(Bp),
    )(data, packed_params)

    out = out[:B]
    enc = out[:, :, OCOL_ENC:OCOL_ENC + HIDDEN]
    x_prime = out[:, :, OCOL_Y:OCOL_Y + OUT_DIM]
    loss = out[:, 0, OCOL_LOSS]
    return loss, x_prime, enc


def predictor_forward(H, he_rep, x, packed_params):
    """Module-faithful single-instance forward: (scalar loss, x_prime, enc)."""
    loss, x_prime, enc = predictor_forward_batched(H[None], he_rep[None], x[None], packed_params)
    return loss[0], x_prime[0], enc[0]


# ------------------------------ pure-JAX reference ---------------------------
def reference_forward(H, he_rep, x, params):
    (w_mlp, b_mlp, gamma, beta, w_lay, b_lay, a_lay, w_out, b_out) = params
    h = he_rep @ w_mlp + b_mlp
    h = jnp.where(h >= 0, h, 0.1 * h)
    mean = jnp.mean(h, axis=0, keepdims=True)
    var = jnp.mean((h - mean) ** 2, axis=0, keepdims=True)
    h = (h - mean) / jnp.sqrt(var + BN_EPS) * gamma + beta
    X = h
    for i in range(NUM_LAYERS):
        Xi = H @ (X @ w_lay[i] + b_lay[i])
        if i < NUM_LAYERS - 1:
            a = a_lay[i, 0, 0]
            Xi = jnp.where(Xi >= 0, Xi, a * Xi)
        X = Xi
    enc = X
    y = jnp.where(enc >= 0, enc, 0.01 * enc) @ w_out + b_out
    loss = jnp.mean((y - x) ** 2)
    return loss, y, enc


def make_params(key):
    ks = jax.random.split(key, 8)
    w_mlp = 0.1 * jax.random.normal(ks[0], (IN_DIM, HIDDEN), jnp.float32)
    b_mlp = 0.01 * jax.random.normal(ks[1], (1, HIDDEN), jnp.float32)
    gamma = jnp.ones((1, HIDDEN), jnp.float32)        # BatchNorm1d affine init
    beta = jnp.zeros((1, HIDDEN), jnp.float32)
    w_lay = 0.1 * jax.random.normal(ks[2], (NUM_LAYERS, HIDDEN, HIDDEN), jnp.float32)
    b_lay = 0.01 * jax.random.normal(ks[3], (NUM_LAYERS, 1, HIDDEN), jnp.float32)
    a_lay = jnp.full((NUM_LAYERS, 1, 1), 0.25, jnp.float32)   # PReLU init 0.25
    w_out = 0.1 * jax.random.normal(ks[4], (HIDDEN, OUT_DIM), jnp.float32)
    b_out = 0.01 * jax.random.normal(ks[5], (1, OUT_DIM), jnp.float32)
    return (w_mlp, b_mlp, gamma, beta, w_lay, b_lay, a_lay, w_out, b_out)


if __name__ == "__main__":
    key = jax.random.PRNGKey(0)
    k_h, k_he, k_x, k_p = jax.random.split(key, 4)
    B = 16    # instances stacked per call (grid = 2 blocks of 8 -> both v7x TCs used)

    # Synthetic row-normalized nonnegative hypergraph adjacencies [B, N, N].
    H_raw = jnp.abs(jax.random.normal(k_h, (B, N, N), jnp.float32))
    H = H_raw / jnp.sum(H_raw, axis=2, keepdims=True)
    he_rep = jax.random.normal(k_he, (B, N, IN_DIM), jnp.float32)
    x = jax.random.normal(k_x, (B, N, OUT_DIM), jnp.float32)
    params = make_params(k_p)
    packed_params = pack_params(params)               # one-time, amortized cost

    loss, x_prime, enc = predictor_forward_batched(H, he_rep, x, packed_params)
    jax.block_until_ready((loss, x_prime, enc))

    loss_r, xp_r, enc_r = jax.vmap(reference_forward, in_axes=(0, 0, 0, None))(
        H, he_rep, x, params)
    assert jnp.allclose(loss, loss_r, atol=1e-3, rtol=1e-3)
    assert jnp.allclose(x_prime, xp_r, atol=1e-3, rtol=1e-3)
    assert jnp.allclose(enc, enc_r, atol=1e-3, rtol=1e-3)

    # Module-faithful single-instance API (also exercises the batch-padding path).
    l0, xp0, e0 = predictor_forward(H[0], he_rep[0], x[0], packed_params)
    jax.block_until_ready((l0, xp0, e0))
    assert jnp.allclose(l0, loss_r[0], atol=1e-3, rtol=1e-3)
    assert jnp.allclose(xp0, xp_r[0], atol=1e-3, rtol=1e-3)
    assert jnp.allclose(e0, enc_r[0], atol=1e-3, rtol=1e-3)

    print("KERNEL_OK")
</pallas_src>

<mosaic_0001>
module attributes {stable_mosaic.version = 11 : i64} {
  func.func @predictor_kernel(%arg0: i32, %arg1: memref<8x16x64xf32, #tpu.memory_space<vmem>>, %arg2: memref<40x128xf32, #tpu.memory_space<vmem>>, %arg3: memref<8x16x128xf32, #tpu.memory_space<vmem>>) attributes {dimension_semantics = [#tpu.dimension_semantics<parallel>], iteration_bounds = array<i64: 2>, scalar_prefetch = 0 : i64, scratch_operands = 0 : i64, tpu.core_type = #tpu.core_type<tc>, window_params = [{transform_indices = @transform_0, window_bounds = array<i64: 8, 16, 64>}, {pipeline_mode = #tpu.pipeline_mode<synchronous>, transform_indices = @transform_1, window_bounds = array<i64: 40, 128>}, {transform_indices = @transform_2, window_bounds = array<i64: 8, 16, 128>}]} {
    %c0 = arith.constant 0 : index
    %c0_0 = arith.constant 0 : index
    %c0_1 = arith.constant 0 : index
    %0 = vector.load %arg1[%c0, %c0_0, %c0_1] : memref<8x16x64xf32, #tpu.memory_space<vmem>>, vector<8x16x16xf32>
    %c0_2 = arith.constant 0 : index
    %c0_3 = arith.constant 0 : index
    %c16 = arith.constant 16 : index
    %1 = vector.load %arg1[%c0_2, %c0_3, %c16] : memref<8x16x64xf32, #tpu.memory_space<vmem>>, vector<8x16x32xf32>
    %c0_4 = arith.constant 0 : index
    %c0_5 = arith.constant 0 : index
    %c48 = arith.constant 48 : index
    %2 = vector.load %arg1[%c0_4, %c0_5, %c48] : memref<8x16x64xf32, #tpu.memory_space<vmem>>, vector<8x16x16xf32>
    %c0_6 = arith.constant 0 : index
    %c0_7 = arith.constant 0 : index
    %3 = vector.load %arg2[%c0_6, %c0_7] : memref<40x128xf32, #tpu.memory_space<vmem>>, vector<32x32xf32>
    %c32 = arith.constant 32 : index
    %c0_8 = arith.constant 0 : index
    %4 = vector.load %arg2[%c32, %c0_8] : memref<40x128xf32, #tpu.memory_space<vmem>>, vector<1x32xf32>
    %5 = vector.shape_cast %1 : vector<8x16x32xf32> to vector<128x32xf32>
    %cst = arith.constant dense<0.000000e+00> : vector<128x32xf32>
    %6 = tpu.matmul %5, %3, %cst {dimension_numbers = #tpu.dot_dimension_numbers<[1], [0], [0], [1], [0, 0, 1, 1], [], []>} : vector<128x32xf32>, vector<32x32xf32>, vector<128x32xf32> -> vector<128x32xf32>
    %7 = vector.broadcast %4 : vector<1x32xf32> to vector<128x32xf32>
    %8 = arith.addf %6, %7 : vector<128x32xf32>
    %cst_9 = arith.constant 0.000000e+00 : f32
    %9 = vector.broadcast %cst_9 : f32 to vector<128x32xf32>
    %10 = arith.cmpf oge, %8, %9 : vector<128x32xf32>
    %cst_10 = arith.constant 1.000000e-01 : f32
    %11 = vector.broadcast %cst_10 : f32 to vector<128x32xf32>
    %12 = arith.mulf %11, %8 : vector<128x32xf32>
    %13 = arith.select %10, %8, %12 : vector<128x32xi1>, vector<128x32xf32>
    %c33 = arith.constant 33 : index
    %c0_11 = arith.constant 0 : index
    %14 = vector.load %arg2[%c33, %c0_11] : memref<40x128xf32, #tpu.memory_space<vmem>>, vector<1x32xf32>
    %c33_12 = arith.constant 33 : index
    %c32_13 = arith.constant 32 : index
    %15 = vector.load %arg2[%c33_12, %c32_13] : memref<40x128xf32, #tpu.memory_space<vmem>>, vector<1x32xf32>
    %16 = vector.shape_cast %13 : vector<128x32xf32> to vector<8x16x32xf32>
    %cst_14 = arith.constant dense<0.000000e+00> : vector<8x32xf32>
    %17 = vector.multi_reduction <add>, %16, %cst_14 [1] : vector<8x16x32xf32> to vector<8x32xf32>
    %18 = vector.shape_cast %17 : vector<8x32xf32> to vector<8x1x32xf32>
    %cst_15 = arith.constant 6.250000e-02 : f32
    %19 = vector.broadcast %cst_15 : f32 to vector<8x1x32xf32>
    %20 = arith.mulf %18, %19 : vector<8x1x32xf32>
    %21 = vector.broadcast %20 : vector<8x1x32xf32> to vector<8x16x32xf32>
    %22 = arith.subf %16, %21 : vector<8x16x32xf32>
    %23 = arith.mulf %22, %22 : vector<8x16x32xf32>
    %cst_16 = arith.constant dense<0.000000e+00> : vector<8x32xf32>
    %24 = vector.multi_reduction <add>, %23, %cst_16 [1] : vector<8x16x32xf32> to vector<8x32xf32>
    %25 = vector.shape_cast %24 : vector<8x32xf32> to vector<8x1x32xf32>
    %cst_17 = arith.constant 6.250000e-02 : f32
    %26 = vector.broadcast %cst_17 : f32 to vector<8x1x32xf32>
    %27 = arith.mulf %25, %26 : vector<8x1x32xf32>
    %cst_18 = arith.constant 9.99999974E-6 : f32
    %28 = vector.broadcast %cst_18 : f32 to vector<8x1x32xf32>
    %29 = arith.addf %27, %28 : vector<8x1x32xf32>
    %30 = math.rsqrt %29 : vector<8x1x32xf32>
    %31 = vector.shape_cast %14 : vector<1x32xf32> to vector<1x1x32xf32>
    %32 = vector.broadcast %31 : vector<1x1x32xf32> to vector<8x1x32xf32>
    %33 = arith.mulf %32, %30 : vector<8x1x32xf32>
    %34 = arith.mulf %20, %33 : vector<8x1x32xf32>
    %35 = vector.shape_cast %15 : vector<1x32xf32> to vector<1x1x32xf32>
    %36 = vector.broadcast %35 : vector<1x1x32xf32> to vector<8x1x32xf32>
    %37 = arith.subf %36, %34 : vector<8x1x32xf32>
    %38 = vector.broadcast %33 : vector<8x1x32xf32> to vector<8x16x32xf32>
    %39 = arith.mulf %16, %38 : vector<8x16x32xf32>
    %40 = vector.broadcast %37 : vector<8x1x32xf32> to vector<8x16x32xf32>
    %41 = arith.addf %39, %40 : vector<8x16x32xf32>
    %c0_19 = arith.constant 0 : index
    %c32_20 = arith.constant 32 : index
    %42 = vector.load %arg2[%c0_19, %c32_20] : memref<40x128xf32, #tpu.memory_space<vmem>>, vector<32x32xf32>
    %c32_21 = arith.constant 32 : index
    %c32_22 = arith.constant 32 : index
    %43 = vector.load %arg2[%c32_21, %c32_22] : memref<40x128xf32, #tpu.memory_space<vmem>>, vector<1x32xf32>
    %44 = vector.shape_cast %41 : vector<8x16x32xf32> to vector<128x32xf32>
    %cst_23 = arith.constant dense<0.000000e+00> : vector<128x32xf32>
    %45 = tpu.matmul %44, %42, %cst_23 {dimension_numbers = #tpu.dot_dimension_numbers<[1], [0], [0], [1], [0, 0, 1, 1], [], []>} : vector<128x32xf32>, vector<32x32xf32>, vector<128x32xf32> -> vector<128x32xf32>
    %46 = vector.broadcast %43 : vector<1x32xf32> to vector<128x32xf32>
    %47 = arith.addf %45, %46 : vector<128x32xf32>
    %48 = vector.shape_cast %47 : vector<128x32xf32> to vector<8x16x32xf32>
    "tpu.trace_start"() <{level = 10 : i32, message = "bnm,bmd->bnd"}> : () -> ()
    %cst_24 = arith.constant dense<0.000000e+00> : vector<8x16x32xf32>
    %49 = tpu.matmul %0, %48, %cst_24 {dimension_numbers = #tpu.dot_dimension_numbers<[2], [1], [1], [2], [0, 0, 0, 1, 1, 2], [0], [0]>} : vector<8x16x16xf32>, vector<8x16x32xf32>, vector<8x16x32xf32> -> vector<8x16x32xf32>
    "tpu.trace_stop"() : () -> ()
    %c34 = arith.constant 34 : index
    %c0_25 = arith.constant 0 : index
    %50 = vector.load %arg2[%c34, %c0_25] : memref<40x128xf32, #tpu.memory_space<vmem>>, vector<1x1xf32>
    %51 = vector.shape_cast %49 : vector<8x16x32xf32> to vector<128x32xf32>
    %cst_26 = arith.constant 0.000000e+00 : f32
    %52 = vector.broadcast %cst_26 : f32 to vector<128x32xf32>
    %53 = arith.cmpf oge, %51, %52 : vector<128x32xf32>
    %54 = vector.broadcast %50 : vector<1x1xf32> to vector<128x32xf32>
    %55 = arith.mulf %54, %51 : vector<128x32xf32>
    %56 = arith.select %53, %51, %55 : vector<128x32xi1>, vector<128x32xf32>
    %57 = vector.shape_cast %56 : vector<128x32xf32> to vector<8x16x32xf32>
    %c0_27 = arith.constant 0 : index
    %c64 = arith.constant 64 : index
    %58 = vector.load %arg2[%c0_27, %c64] : memref<40x128xf32, #tpu.memory_space<vmem>>, vector<32x32xf32>
    %c32_28 = arith.constant 32 : index
    %c64_29 = arith.constant 64 : index
    %59 = vector.load %arg2[%c32_28, %c64_29] : memref<40x128xf32, #tpu.memory_space<vmem>>, vector<1x32xf32>
    %60 = vector.shape_cast %57 : vector<8x16x32xf32> to vector<128x32xf32>
    %cst_30 = arith.constant dense<0.000000e+00> : vector<128x32xf32>
    %61 = tpu.matmul %60, %58, %cst_30 {dimension_numbers = #tpu.dot_dimension_numbers<[1], [0], [0], [1], [0, 0, 1, 1], [], []>} : vector<128x32xf32>, vector<32x32xf32>, vector<128x32xf32> -> vector<128x32xf32>
    %62 = vector.broadcast %59 : vector<1x32xf32> to vector<128x32xf32>
    %63 = arith.addf %61, %62 : vector<128x32xf32>
    %64 = vector.shape_cast %63 : vector<128x32xf32> to vector<8x16x32xf32>
    "tpu.trace_start"() <{level = 10 : i32, message = "bnm,bmd->bnd"}> : () -> ()
    %cst_31 = arith.constant dense<0.000000e+00> : vector<8x16x32xf32>
    %65 = tpu.matmul %0, %64, %cst_31 {dimension_numbers = #tpu.dot_dimension_numbers<[2], [1], [1], [2], [0, 0, 0, 1, 1, 2], [0], [0]>} : vector<8x16x16xf32>, vector<8x16x32xf32>, vector<8x16x32xf32> -> vector<8x16x32xf32>
    "tpu.trace_stop"() : () -> ()
    %c0_32 = arith.constant 0 : index
    %c96 = arith.constant 96 : index
    %66 = vector.load %arg2[%c0_32, %c96] : memref<40x128xf32, #tpu.memory_space<vmem>>, vector<32x16xf32>
    %c32_33 = arith.constant 32 : index
    %c96_34 = arith.constant 96 : index
    %67 = vector.load %arg2[%c32_33, %c96_34] : memref<40x128xf32, #tpu.memory_space<vmem>>, vector<1x16xf32>
    %68 = vector.shape_cast %65 : vector<8x16x32xf32> to vector<128x32xf32>
    %cst_35 = arith.constant 0.000000e+00 : f32
    %69 = vector.broadcast %cst_35 : f32 to vector<128x32xf32>
    %70 = arith.cmpf oge, %68, %69 : vector<128x32xf32>
    %cst_36 = arith.constant 0.00999999977 : f32
    %71 = vector.broadcast %cst_36 : f32 to vector<128x32xf32>
    %72 = arith.mulf %71, %68 : vector<128x32xf32>
    %73 = arith.select %70, %68, %72 : vector<128x32xi1>, vector<128x32xf32>
    %cst_37 = arith.constant dense<0.000000e+00> : vector<128x16xf32>
    %74 = tpu.matmul %73, %66, %cst_37 {dimension_numbers = #tpu.dot_dimension_numbers<[1], [0], [0], [1], [0, 0, 1, 1], [], []>} : vector<128x32xf32>, vector<32x16xf32>, vector<128x16xf32> -> vector<128x16xf32>
    %75 = vector.broadcast %67 : vector<1x16xf32> to vector<128x16xf32>
    %76 = arith.addf %74, %75 : vector<128x16xf32>
    %77 = vector.shape_cast %76 : vector<128x16xf32> to vector<8x16x16xf32>
    %78 = arith.subf %77, %2 : vector<8x16x16xf32>
    %79 = arith.mulf %78, %78 : vector<8x16x16xf32>
    %cst_38 = arith.constant dense<0.000000e+00> : vector<8x16xf32>
    %80 = vector.multi_reduction <add>, %79, %cst_38 [2] : vector<8x16x16xf32> to vector<8x16xf32>
    %81 = vector.shape_cast %80 : vector<8x16xf32> to vector<8x16x1xf32>
    %cst_39 = arith.constant dense<0.000000e+00> : vector<8x1xf32>
    %82 = vector.multi_reduction <add>, %81, %cst_39 [1] : vector<8x16x1xf32> to vector<8x1xf32>
    %83 = vector.shape_cast %82 : vector<8x1xf32> to vector<8x1x1xf32>
    %cst_40 = arith.constant 3.906250e-03 : f32
    %84 = vector.broadcast %cst_40 : f32 to vector<8x1x1xf32>
    %85 = arith.mulf %83, %84 : vector<8x1x1xf32>
    %c0_41 = arith.constant 0 : index
    %c0_42 = arith.constant 0 : index
    %c0_43 = arith.constant 0 : index
    %86 = vector.load %arg3[%c0_41, %c0_42, %c0_43] : memref<8x16x128xf32, #tpu.memory_space<vmem>>, vector<8x16x32xf32>
    tpu.vector_store %arg3[%c0_41, %c0_42, %c0_43], %65 {strides = array<i32>} : memref<8x16x128xf32, #tpu.memory_space<vmem>>, vector<8x16x32xf32>,
    %c0_44 = arith.constant 0 : index
    %c0_45 = arith.constant 0 : index
    %c32_46 = arith.constant 32 : index
    %87 = vector.load %arg3[%c0_44, %c0_45, %c32_46] : memref<8x16x128xf32, #tpu.memory_space<vmem>>, vector<8x16x16xf32>
    tpu.vector_store %arg3[%c0_44, %c0_45, %c32_46], %77 {strides = array<i32>} : memref<8x16x128xf32, #tpu.memory_space<vmem>>, vector<8x16x16xf32>,
    %88 = vector.shape_cast %85 : vector<8x1x1xf32> to vector<8x1x1xf32>
    %89 = vector.broadcast %88 : vector<8x1x1xf32> to vector<8x16x16xf32>
    %c0_47 = arith.constant 0 : index
    %c0_48 = arith.constant 0 : index
    %c48_49 = arith.constant 48 : index
    %90 = vector.load %arg3[%c0_47, %c0_48, %c48_49] : memref<8x16x128xf32, #tpu.memory_space<vmem>>, vector<8x16x16xf32>
    tpu.vector_store %arg3[%c0_47, %c0_48, %c48_49], %89 {strides = array<i32>} : memref<8x16x128xf32, #tpu.memory_space<vmem>>, vector<8x16x16xf32>,
    %cst_50 = arith.constant 0.000000e+00 : f32
    %91 = vector.broadcast %cst_50 : f32 to vector<8x16x64xf32>
    %c0_51 = arith.constant 0 : index
    %c0_52 = arith.constant 0 : index
    %c64_53 = arith.constant 64 : index
    %92 = vector.load %arg3[%c0_51, %c0_52, %c64_53] : memref<8x16x128xf32, #tpu.memory_space<vmem>>, vector<8x16x64xf32>
    tpu.vector_store %arg3[%c0_51, %c0_52, %c64_53], %91 {strides = array<i32>} : memref<8x16x128xf32, #tpu.memory_space<vmem>>, vector<8x16x64xf32>,
    return
  }
  func.func @transform_0(%arg0: i32) -> (i32, i32, i32) {
    %c0_i32 = arith.constant 0 : i32
    %c0_i32_0 = arith.constant 0 : i32
    %c0_i32_1 = arith.constant 0 : i32
    return %arg0, %c0_i32, %c0_i32_0 : i32, i32, i32
  }
  func.func @transform_1(%arg0: i32) -> (i32, i32) {
    %c0_i32 = arith.constant 0 : i32
    %c0_i32_0 = arith.constant 0 : i32
    %c0_i32_1 = arith.constant 0 : i32
    return %c0_i32, %c0_i32_0 : i32, i32
  }
  func.func @transform_2(%arg0: i32) -> (i32, i32, i32) {
    %c0_i32 = arith.constant 0 : i32
    %c0_i32_0 = arith.constant 0 : i32
    %c0_i32_1 = arith.constant 0 : i32
    return %arg0, %c0_i32, %c0_i32_0 : i32, i32, i32
  }
}

</mosaic_0001>

<llo_original>
// kernel: predictor_forward_batched.1
$region0: #{predictor_forward_batched.1}
  #allocation0 [shape = 'u32[]', space=smem, size = 0x4, offset = 0x4, fixed_abs, tag = 'smem constant byte address 0x4 - core index']
  #allocation1 [shape = 'u32[144,128]{1,0:T(1,128)}', space=vmem, size = 0x12000, scoped, tag = 'internal scratch']
  %s0 = inlined_call_operand.vmem [shape: f32[16,16,64], index: 0, kind: input, shape index: {}]
  %s1 = inlined_call_operand.vmem [shape: f32[40,128], index: 1, kind: input, shape index: {}]
  %s2 = inlined_call_operand.vmem [shape: f32[16,16,128], index: 2, kind: output, shape index: {}]
  %s3 = sld [smem:[#allocation0]]
  $region41: #{predictor_forward_batched.1} parent=0
    _
  %s5 = ssub.s32 1, %s3
  %s6 = scalar_select 0, %s5, %s3
  loop: start=0, step=1, limit=4
  $region2: #{predictor_forward_batched.1} parent=0 // loop_pre_header
    _
  $region3: #{predictor_forward_batched.1} parent=0 // loop_header
    %s8 = sphi 0, %s12
    %p9 = scmp.ge.s32.totalorder %s8, 4
    %s18 = sphi 0, %s20
    %s21 = sphi 0, %s18
    %s22 = sphi 0, %s21
    %s38 = sphi 0, %s22
    %s42 = sphi 0, %s42
    %s44 = sphi 0, %s42
    %s45 = sphi 0, %s44
    %s59 = sphi 0, %s45
    %s65 = sphi 0, %s67
    %s68 = sphi 0, %s65
    %s69 = sphi 0, %s68
    %s85 = sphi 0, %s69
  $region4: #{predictor_forward_batched.1} parent=0 // loop_header_branch
    %11 = sbr.rel (%p9) target = $region8
  $region5: #{predictor_forward_batched.1} parent=0 // loop_body
    %s13 = ssub.s32 %s8, 1
    %s14 = ssub.s32 %s8, 2
    %s15 = sadd.s32 %s8, 1
    %s16 = ssub.s32 %s8, %s15
    %p17 = scmp.eq.s32.totalorder %s16, 0
    %s19 = sadd.s32 %s18, 1
    %s20 = scalar_select %p17, %s18, %s19
    %p23 = pneg %p17
    %p24 = scmp.eq.s32.totalorder %s8, 1
    %p25 = por %p23, %p24
    %p26 = scmp.ne.s32.totalorder %s18, %s21
    %p27 = scmp.eq.s32.totalorder %s8, 0
    %p28 = por %p26, %p27
    %p29 = scmp.ne.s32.totalorder %s18, %s21
    %p30 = scmp.eq.s32.totalorder %s13, 1
    %p31 = por %p29, %p30
    %p32 = scmp.ne.s32.totalorder %s21, %s22
    %p33 = scmp.eq.s32.totalorder %s13, 0
    %p34 = por %p32, %p33
    %p35 = scmp.ne.s32.totalorder %s21, %s22
    %p36 = scmp.eq.s32.totalorder %s14, 1
    %p37 = por %p35, %p36
    %p39 = scmp.ne.s32.totalorder %s22, %s38
    %p40 = scmp.eq.s32.totalorder %s14, 0
    %p41 = por %p39, %p40
    %s43 = sadd.s32 %s42, 1
    %p46 = scmp.eq.s32.totalorder %s8, 1
    %p47 = scmp.ne.s32.totalorder %s42, %s44
    %p48 = scmp.eq.s32.totalorder %s8, 0
    %p49 = por %p47, %p48
    %p50 = scmp.ne.s32.totalorder %s42, %s44
    %p51 = scmp.eq.s32.totalorder %s13, 1
    %p52 = por %p50, %p51
    %p53 = scmp.ne.s32.totalorder %s44, %s45
    %p54 = scmp.eq.s32.totalorder %s13, 0
    %p55 = por %p53, %p54
    %p56 = scmp.ne.s32.totalorder %s44, %s45
    %p57 = scmp.eq.s32.totalorder %s14, 1
    %p58 = por %p56, %p57
    %p60 = scmp.ne.s32.totalorder %s45, %s59
    %p61 = scmp.eq.s32.totalorder %s14, 0
    %p62 = por %p60, %p61
    %s63 = ssub.s32 %s8, %s15
    %p64 = scmp.eq.s32.totalorder %s63, 0
    %s66 = sadd.s32 %s65, 1
    %s67 = scalar_select %p64, %s65, %s66
    %p70 = pneg %p64
    %p71 = scmp.eq.s32.totalorder %s8, 1
    %p72 = por %p70, %p71
    %p73 = scmp.ne.s32.totalorder %s65, %s68
    %p74 = scmp.eq.s32.totalorder %s8, 0
    %p75 = por %p73, %p74
    %p76 = scmp.ne.s32.totalorder %s65, %s68
    %p77 = scmp.eq.s32.totalorder %s13, 1
    %p78 = por %p76, %p77
    %p79 = scmp.ne.s32.totalorder %s68, %s69
    %p80 = scmp.eq.s32.totalorder %s13, 0
    %p81 = por %p79, %p80
    %p82 = scmp.ne.s32.totalorder %s68, %s69
    %p83 = scmp.eq.s32.totalorder %s14, 1
    %p84 = por %p82, %p83
    %p86 = scmp.ne.s32.totalorder %s69, %s85
    %p87 = scmp.eq.s32.totalorder %s14, 0
    %p88 = por %p86, %p87
    %p89 = scmp.le.s32.totalorder 1, %s8
    %p90 = scmp.lt.s32.totalorder %s8, 3
    %p91 = pnand %p89, %p90
    %p92 = pneg %p91
    // Predicated region
    $region9: #{predictor_forward_batched.1} parent=5 // pred_check
      _
    $region10: #{predictor_forward_batched.1} parent=5 // pred_check_branch
      %94 = sbr.rel (%p91) target = $region12
    $region11: #{predictor_forward_batched.1} parent=5 // pred_region
      %s95 = ssub.s32 %s8, 1
      // Predicated region
      $region13: #{predictor_forward_batched.1} parent=11 // pred_check
        %p96 = pneg %p55
      $region14: #{predictor_forward_batched.1} parent=11 // pred_check_branch
        %98 = sbr.rel (%p96) target = $region16
      $region15: #{predictor_forward_batched.1} parent=11 // pred_region
        _
      $region16: #{predictor_forward_batched.1} parent=11 // pred_fallthru
        _
    $region12: #{predictor_forward_batched.1} parent=5 // pred_fallthru
      _
    %p99 = scmp.lt.s32.totalorder %s8, 2
    // Predicated region
    $region17: #{predictor_forward_batched.1} parent=5 // pred_check
      %p100 = pneg %p99
    $region18: #{predictor_forward_batched.1} parent=5 // pred_check_branch
      %102 = sbr.rel (%p100) target = $region20
    $region19: #{predictor_forward_batched.1} parent=5 // pred_region
      // Predicated region
      $region21: #{predictor_forward_batched.1} parent=19 // pred_check
        %p103 = pneg %p28
      $region22: #{predictor_forward_batched.1} parent=19 // pred_check_branch
        %105 = sbr.rel (%p103) target = $region24
      $region23: #{predictor_forward_batched.1} parent=19 // pred_region
        %s106 = smul.u32 8, %s8
        %p107 = scmp.lt.s32.totalorder %s106, 15
        %s108 = scalar_select %p107, %s106, 15
        %s109 = smul.addr %s108, 2
        %s110 = smul.addr %s109, 8
        %s111 = scalar_lea.vmem %s0, %s110
        %s112 = smul.u32 8, %s8
      $region24: #{predictor_forward_batched.1} parent=19 // pred_fallthru
        _
    $region20: #{predictor_forward_batched.1} parent=5 // pred_fallthru
      _
    %p113 = scmp.le.s32.totalorder 1, %s8
    %p114 = scmp.lt.s32.totalorder %s8, 3
    %p115 = pnand %p113, %p114
    %p116 = pneg %p115
    // Predicated region
    $region25: #{predictor_forward_batched.1} parent=5 // pred_check
      _
    $region26: #{predictor_forward_batched.1} parent=5 // pred_check_branch
      %118 = sbr.rel (%p115) target = $region28
    $region27: #{predictor_forward_batched.1} parent=5 // pred_region
      %s119 = ssub.s32 %s8, 1
      %s120 = smul.u32 8, %s13
      %p121 = scmp.lt.s32.totalorder %s120, 15
      %s122 = scalar_select %p121, %s120, 15
      %s123 = smul.addr %s122, 2
      %s124 = smul.addr %s123, 8
      %s125 = scalar_lea.vmem %s0, %s124
      %p126 = pneg %p34
      %p127 = pneg %p31
      %p128 = pneg %p55
      %p129 = pneg %p52
      %p130 = pneg %p81
      %p131 = pneg %p78
      %s132 = smul.u32 8, %s13
      %p133 = scmp.lt.s32.totalorder %s132, 15
      %s134 = scalar_select %p133, %s132, 15
      %s135 = smul.addr %s134, 2
      %s136 = smul.addr %s135, 8
      %s137 = scalar_lea.vmem %s2, %s136
      %s138 = smul.u32 8, %s13
      %p139 = scmp.lt.s32.totalorder %s138, 15
      %s140 = scalar_select %p139, %s138, 15
      %s141 = smul.addr %s140, 2
      %s142 = smul.addr %s141, 8
      %s143 = scalar_lea.vmem %s0, %s142
      %s144 = smul.u32 8, %s13
      %s145 = smul.u32 8, %s13
      %p146 = scmp.lt.s32.totalorder %s145, 15
      %s147 = scalar_select %p146, %s145, 15
      %s148 = smul.addr %s147, 2
      %s149 = smul.addr %s148, 8
      %s150 = scalar_lea.vmem %s2, %s149
      %s151 = smul.u32 8, %s13
      %v152 = vld [vmem:[%s143] sm:$0xff]
      %v153 = vld [vmem:[%s143 + $0x8] sm:$0xff]
      %v154 = vld [vmem:[%s143 + $0x10] sm:$0xff]
      %v155 = vld [vmem:[%s143 + $0x18] sm:$0xff]
      %v156 = vld [vmem:[%s143 + $0x20] sm:$0xff]
      %v157 = vld [vmem:[%s143 + $0x28] sm:$0xff]
      %v158 = vld [vmem:[%s143 + $0x30] sm:$0xff]
      %v159 = vld [vmem:[%s143 + $0x38] sm:$0xff]
      %v160 = vld [vmem:[%s143 + $0x40] sm:$0xff]
      %v161 = vld [vmem:[%s143 + $0x48] sm:$0xff]
      %v162 = vld [vmem:[%s143 + $0x50] sm:$0xff]
      %v163 = vld [vmem:[%s143 + $0x58] sm:$0xff]
      %v164 = vld [vmem:[%s143 + $0x60] sm:$0xff]
      %v165 = vld [vmem:[%s143 + $0x68] sm:$0xff]
      %v166 = vld [vmem:[%s143 + $0x70] sm:$0xff]
      %v167 = vld [vmem:[%s143 + $0x78] sm:$0xff]
      %v168 = vld [vmem:[%s1] sm:$0xff]
      %v169 = vld [vmem:[%s1 + $0x8] sm:$0xff]
      %v170 = vld [vmem:[%s1 + $0x10] sm:$0xff]
      %v171 = vld [vmem:[%s1 + $0x18] sm:$0xff]
      %v172 = vld [vmem:[%s1 + $0x20] sm:$0x1]
      %v173 = vlaneseq
      %v174 = vshrl.u32 %v173, 7
      %v175 = vsub.s32 0, %v174
      %v176 = vrot.slane %v172, %v175
      %193 = vrot.lane.b32.xlu0 %v152, 112
      %v194 = vpop.permute.xlu0 %193
      %195 = vrot.lane.b32.xlu0 %v153, 112
      %v196 = vpop.permute.xlu0 %195
      %197 = vrot.lane.b32.xlu0 %v154, 112
      %v198 = vpop.permute.xlu0 %197
      %199 = vrot.lane.b32.xlu0 %v155, 112
      %v200 = vpop.permute.xlu0 %199
      %201 = vrot.lane.b32.xlu0 %v156, 112
      %v202 = vpop.permute.xlu0 %201
      %203 = vrot.lane.b32.xlu0 %v157, 112
      %v204 = vpop.permute.xlu0 %203
      %205 = vrot.lane.b32.xlu0 %v158, 112
      %v206 = vpop.permute.xlu0 %205
      %207 = vrot.lane.b32.xlu0 %v159, 112
      %v208 = vpop.permute.xlu0 %207
      %209 = vrot.lane.b32.xlu0 %v160, 112
      %v210 = vpop.permute.xlu0 %209
      %211 = vrot.lane.b32.xlu0 %v161, 112
      %v212 = vpop.permute.xlu0 %211
      %213 = vrot.lane.b32.xlu0 %v162, 112
      %v214 = vpop.permute.xlu0 %213
      %215 = vrot.lane.b32.xlu0 %v163, 112
      %v216 = vpop.permute.xlu0 %215
      %217 = vrot.lane.b32.xlu0 %v164, 112
      %v218 = vpop.permute.xlu0 %217
      %219 = vrot.lane.b32.xlu0 %v165, 112
      %v220 = vpop.permute.xlu0 %219
      %221 = vrot.lane.b32.xlu0 %v166, 112
      %v222 = vpop.permute.xlu0 %221
      %223 = vrot.lane.b32.xlu0 %v167, 112
      %v224 = vpop.permute.xlu0 %223
      %vm225 = vcmask 261120
      %v226 = vsel %vm225, %v194, 0
      %v228 = vsel %vm225, %v196, 0
      %v230 = vsel %vm225, %v198, 0
      %v232 = vsel %vm225, %v200, 0
      %v234 = vsel %vm225, %v202, 0
      %v236 = vsel %vm225, %v204, 0
      %v238 = vsel %vm225, %v206, 0
      %v240 = vsel %vm225, %v208, 0
      %v242 = vsel %vm225, %v210, 0
      %v244 = vsel %vm225, %v212, 0
      %v246 = vsel %vm225, %v214, 0
      %v248 = vsel %vm225, %v216, 0
      %v250 = vsel %vm225, %v218, 0
      %v252 = vsel %vm225, %v220, 0
      %v254 = vsel %vm225, %v222, 0
      %v256 = vsel %vm225, %v224, 0
      %258 = vmatprep.subr.mxu0 0.0
      %259 = vmatpush1.msra.mxu0 %v168
      %260 = vmatprep.subr.mxu0 0.0
      %261 = vmatpush1.msra.mxu0 %v169
      %262 = vmatprep.subr.mxu0 0.0
      %263 = vmatpush1.msra.mxu0 %v170
      %264 = vmatprep.subr.mxu0 0.0
      %265 = vmatpush1.msra.mxu0 %v171
      %266 = vmatprep.subr.mxu0 0.0
      %267 = vmatpush1.msra.mxu0 0.0
      %268 = vmatprep.subr.mxu0 0.0
      %269 = vmatpush1.msra.mxu0 0.0
      %270 = vmatprep.subr.mxu0 0.0
      %271 = vmatpush1.msra.mxu0 0.0
      %272 = vmatprep.subr.mxu0 0.0
      %273 = vmatpush1.msra.mxu0 0.0
      %274 = vmatprep.subr.mxu0 0.0
      %275 = vmatpush1.msra.mxu0 0.0
      %276 = vmatprep.subr.mxu0 0.0
      %277 = vmatpush1.msra.mxu0 0.0
      %278 = vmatprep.subr.mxu0 0.0
      %279 = vmatpush1.msra.mxu0 0.0
      %280 = vmatprep.subr.mxu0 0.0
      %281 = vmatpush1.msra.mxu0 0.0
      %282 = vmatprep.subr.mxu0 0.0
      %283 = vmatpush1.msra.mxu0 0.0
      %284 = vmatprep.subr.mxu0 0.0
      %285 = vmatpush1.msra.mxu0 0.0
      %286 = vmatprep.subr.mxu0 0.0
      %287 = vmatpush1.msra.mxu0 0.0
      %288 = vmatprep.subr.mxu0 0.0
      %289 = vmatpush1.msra.mxu0 0.0
      %290 = vmatprep.subr.mxu0 0.0
      %291 = vmatpush1.msra.mxu0 0.0
      %292 = vmatprep.subr.mxu0 0.0
      %293 = vmatpush1.msra.mxu0 0.0
      %294 = vmatprep.subr.mxu0 0.0
      %295 = vmatpush1.msra.mxu0 0.0
      %296 = vmatprep.subr.mxu0 0.0
      %297 = vmatpush1.msra.mxu0 0.0
      %298 = vmatprep.subr.mxu0 0.0
      %299 = vmatpush1.msra.mxu0 0.0
      %300 = vmatprep.subr.mxu0 0.0
      %301 = vmatpush1.msra.mxu0 0.0
      %302 = vmatprep.subr.mxu0 0.0
      %303 = vmatpush1.msra.mxu0 0.0
      %304 = vmatprep.subr.mxu0 0.0
      %305 = vmatpush1.msra.mxu0 0.0
      %306 = vmatprep.subr.mxu0 0.0
      %307 = vmatpush1.msra.mxu0 0.0
      %308 = vmatprep.subr.mxu0 0.0
      %309 = vmatpush1.msra.mxu0 0.0
      %310 = vmatprep.subr.mxu0 0.0
      %311 = vmatpush1.msra.mxu0 0.0
      %312 = vmatprep.subr.mxu0 0.0
      %313 = vmatpush1.msra.mxu0 0.0
      %314 = vmatprep.subr.mxu0 0.0
      %315 = vmatpush1.msra.mxu0 0.0
      %316 = vmatprep.subr.mxu0 0.0
      %317 = vmatpush1.msra.mxu0 0.0
      %318 = vmatprep.subr.mxu0 0.0
      %319 = vmatpush1.msra.mxu0 0.0
      %320 = vmatprep.subr.mxu0 0.0
      %321 = vmatpush1.msra.mxu0 0.0
      %322 = vmatprep.mubr.f32.mxu0 0.0
      %323 = vmatmul.mubr.f32.gmra.mrb[0].mxu0 %v226
      %v324 = vpop.f32.mrb[0].mxu0
      %v325 = vadd.f32 %v176, %v324
      %v326 = vpop.f32.mrb[0].mxu0
      %327 = vmatprep.mubr.f32.mxu0 0.0
      %328 = vmatmul.mubr.f32.gmra.mrb[0].mxu0 %v228
      %v329 = vpop.f32.mrb[0].mxu0
      %v330 = vadd.f32 %v176, %v329
      %v331 = vpop.f32.mrb[0].mxu0
      %332 = vmatprep.mubr.f32.mxu0 0.0
      %333 = vmatmul.mubr.f32.gmra.mrb[0].mxu0 %v230
      %v334 = vpop.f32.mrb[0].mxu0
      %v335 = vadd.f32 %v176, %v334
      %v336 = vpop.f32.mrb[0].mxu0
      %337 = vmatprep.mubr.f32.mxu0 0.0
      %338 = vmatmul.mubr.f32.gmra.mrb[0].mxu0 %v232
      %v339 = vpop.f32.mrb[0].mxu0
      %v340 = vadd.f32 %v176, %v339
      %v341 = vpop.f32.mrb[0].mxu0
      %342 = vmatprep.mubr.f32.mxu0 0.0
      %343 = vmatmul.mubr.f32.gmra.mrb[0].mxu0 %v234
      %v344 = vpop.f32.mrb[0].mxu0
      %v345 = vadd.f32 %v176, %v344
      %v346 = vpop.f32.mrb[0].mxu0
      %347 = vmatprep.mubr.f32.mxu0 0.0
      %348 = vmatmul.mubr.f32.gmra.mrb[0].mxu0 %v236
      %v349 = vpop.f32.mrb[0].mxu0
      %v350 = vadd.f32 %v176, %v349
      %v351 = vpop.f32.mrb[0].mxu0
      %352 = vmatprep.mubr.f32.mxu0 0.0
      %353 = vmatmul.mubr.f32.gmra.mrb[0].mxu0 %v238
      %v354 = vpop.f32.mrb[0].mxu0
      %v355 = vadd.f32 %v176, %v354
      %v356 = vpop.f32.mrb[0].mxu0
      %357 = vmatprep.mubr.f32.mxu0 0.0
      %358 = vmatmul.mubr.f32.gmra.mrb[0].mxu0 %v240
      %v359 = vpop.f32.mrb[0].mxu0
      %v360 = vadd.f32 %v176, %v359
      %v361 = vpop.f32.mrb[0].mxu0
      %362 = vmatprep.mubr.f32.mxu0 0.0
      %363 = vmatmul.mubr.f32.gmra.mrb[0].mxu0 %v242
      %v364 = vpop.f32.mrb[0].mxu0
      %v365 = vadd.f32 %v176, %v364
      %v366 = vpop.f32.mrb[0].mxu0
      %367 = vmatprep.mubr.f32.mxu0 0.0
      %368 = vmatmul.mubr.f32.gmra.mrb[0].mxu0 %v244
      %v369 = vpop.f32.mrb[0].mxu0
      %v370 = vadd.f32 %v176, %v369
      %v371 = vpop.f32.mrb[0].mxu0
      %372 = vmatprep.mubr.f32.mxu0 0.0
      %373 = vmatmul.mubr.f32.gmra.mrb[0].mxu0 %v246
      %v374 = vpop.f32.mrb[0].mxu0
      %v375 = vadd.f32 %v176, %v374
      %v376 = vpop.f32.mrb[0].mxu0
      %377 = vmatprep.mubr.f32.mxu0 0.0
      %378 = vmatmul.mubr.f32.gmra.mrb[0].mxu0 %v248
      %v379 = vpop.f32.mrb[0].mxu0
      %v380 = vadd.f32 %v176, %v379
      %v381 = vpop.f32.mrb[0].mxu0
      %382 = vmatprep.mubr.f32.mxu0 0.0
      %383 = vmatmul.mubr.f32.gmra.mrb[0].mxu0 %v250
      %v384 = vpop.f32.mrb[0].mxu0
      %v385 = vadd.f32 %v176, %v384
      %v386 = vpop.f32.mrb[0].mxu0
      %387 = vmatprep.mubr.f32.mxu0 0.0
      %388 = vmatmul.mubr.f32.gmra.mrb[0].mxu0 %v252
      %v389 = vpop.f32.mrb[0].mxu0
      %v390 = vadd.f32 %v176, %v389
      %v391 = vpop.f32.mrb[0].mxu0
      %392 = vmatprep.mubr.f32.mxu0 0.0
      %393 = vmatmul.mubr.f32.gmra.mrb[0].mxu0 %v254
      %v394 = vpop.f32.mrb[0].mxu0
      %v395 = vadd.f32 %v176, %v394
      %v396 = vpop.f32.mrb[0].mxu0
      %397 = vmatprep.mubr.f32.mxu0 0.0
      %398 = vmatmul.mubr.f32.gmra.mrb[0].mxu0 %v256
      %v399 = vpop.f32.mrb[0].mxu0
      %v400 = vadd.f32 %v176, %v399
      %v401 = vpop.f32.mrb[0].mxu0
      %402 = vdwg.mxu0
      %vm403 = vcmp.ge.f32.partialorder %v325, 0.0
      %vm404 = vcmp.ge.f32.partialorder %v330, 0.0
      %vm405 = vcmp.ge.f32.partialorder %v335, 0.0
      %vm406 = vcmp.ge.f32.partialorder %v340, 0.0
      %vm407 = vcmp.ge.f32.partialorder %v345, 0.0
      %vm408 = vcmp.ge.f32.partialorder %v350, 0.0
      %vm409 = vcmp.ge.f32.partialorder %v355, 0.0
      %vm410 = vcmp.ge.f32.partialorder %v360, 0.0
      %vm411 = vcmp.ge.f32.partialorder %v365, 0.0
      %vm412 = vcmp.ge.f32.partialorder %v370, 0.0
      %vm413 = vcmp.ge.f32.partialorder %v375, 0.0
      %vm414 = vcmp.ge.f32.partialorder %v380, 0.0
      %vm415 = vcmp.ge.f32.partialorder %v385, 0.0
      %vm416 = vcmp.ge.f32.partialorder %v390, 0.0
      %vm417 = vcmp.ge.f32.partialorder %v395, 0.0
      %vm418 = vcmp.ge.f32.partialorder %v400, 0.0
      %v419 = vmul.f32 %v325, 0.1
      %v420 = vmul.f32 %v330, 0.1
      %v421 = vmul.f32 %v335, 0.1
      %v422 = vmul.f32 %v340, 0.1
      %v423 = vmul.f32 %v345, 0.1
      %v424 = vmul.f32 %v350, 0.1
      %v425 = vmul.f32 %v355, 0.1
      %v426 = vmul.f32 %v360, 0.1
      %v427 = vmul.f32 %v365, 0.1
      %v428 = vmul.f32 %v370, 0.1
      %v429 = vmul.f32 %v375, 0.1
      %v430 = vmul.f32 %v380, 0.1
      %v431 = vmul.f32 %v385, 0.1
      %v432 = vmul.f32 %v390, 0.1
      %v433 = vmul.f32 %v395, 0.1
      %v434 = vmul.f32 %v400, 0.1
      %v435 = vsel %vm403, %v325, %v419
      %v436 = vsel %vm404, %v330, %v420
      %v437 = vsel %vm405, %v335, %v421
      %v438 = vsel %vm406, %v340, %v422
      %v439 = vsel %vm407, %v345, %v423
      %v440 = vsel %vm408, %v350, %v424
      %v441 = vsel %vm409, %v355, %v425
      %v442 = vsel %vm410, %v360, %v426
      %v443 = vsel %vm411, %v365, %v427
      %v444 = vsel %vm412, %v370, %v428
      %v445 = vsel %vm413, %v375, %v429
      %v446 = vsel %vm414, %v380, %v430
      %v447 = vsel %vm415, %v385, %v431
      %v448 = vsel %vm416, %v390, %v432
      %v449 = vsel %vm417, %v395, %v433
      %v450 = vsel %vm418, %v400, %v434
      %v451 = vld [vmem:[%s1 + $0x21] sm:$0x1]
      %v452 = vsel %vm225, %v435, 0.0
      %v453 = vsel %vm225, %v436, 0.0
      %v454 = vadd.f32 %v452, %v453
      %v455 = vrot.slane %v454, 4
      %v456 = vadd.f32 %v454, %v455
      %v457 = vrot.slane %v456, 2
      %v458 = vadd.f32 %v456, %v457
      %v459 = vrot.slane %v458, 1
      %v460 = vadd.f32 %v458, %v459
      %v461 = vsel %vm225, %v437, 0.0
      %v462 = vsel %vm225, %v438, 0.0
      %v463 = vadd.f32 %v461, %v462
      %v464 = vrot.slane %v463, 4
      %v465 = vadd.f32 %v463, %v464
      %v466 = vrot.slane %v465, 2
      %v467 = vadd.f32 %v465, %v466
      %v468 = vrot.slane %v467, 1
      %v469 = vadd.f32 %v467, %v468
      %v470 = vsel %vm225, %v439, 0.0
      %v471 = vsel %vm225, %v440, 0.0
      %v472 = vadd.f32 %v470, %v471
      %v473 = vrot.slane %v472, 4
      %v474 = vadd.f32 %v472, %v473
      %v475 = vrot.slane %v474, 2
      %v476 = vadd.f32 %v474, %v475
      %v477 = vrot.slane %v476, 1
      %v478 = vadd.f32 %v476, %v477
      %v479 = vsel %vm225, %v441, 0.0
      %v480 = vsel %vm225, %v442, 0.0
      %v481 = vadd.f32 %v479, %v480
      %v482 = vrot.slane %v481, 4
      %v483 = vadd.f32 %v481, %v482
      %v484 = vrot.slane %v483, 2
      %v485 = vadd.f32 %v483, %v484
      %v486 = vrot.slane %v485, 1
      %v487 = vadd.f32 %v485, %v486
      %v488 = vsel %vm225, %v443, 0.0
      %v489 = vsel %vm225, %v444, 0.0
      %v490 = vadd.f32 %v488, %v489
      %v491 = vrot.slane %v490, 4
      %v492 = vadd.f32 %v490, %v491
      %v493 = vrot.slane %v492, 2
      %v494 = vadd.f32 %v492, %v493
      %v495 = vrot.slane %v494, 1
      %v496 = vadd.f32 %v494, %v495
      %v497 = vsel %vm225, %v445, 0.0
      %v498 = vsel %vm225, %v446, 0.0
      %v499 = vadd.f32 %v497, %v498
      %v500 = vrot.slane %v499, 4
      %v501 = vadd.f32 %v499, %v500
      %v502 = vrot.slane %v501, 2
      %v503 = vadd.f32 %v501, %v502
      %v504 = vrot.slane %v503, 1
      %v505 = vadd.f32 %v503, %v504
      %v506 = vsel %vm225, %v447, 0.0
      %v507 = vsel %vm225, %v448, 0.0
      %v508 = vadd.f32 %v506, %v507
      %v509 = vrot.slane %v508, 4
      %v510 = vadd.f32 %v508, %v509
      %v511 = vrot.slane %v510, 2
      %v512 = vadd.f32 %v510, %v511
      %v513 = vrot.slane %v512, 1
      %v514 = vadd.f32 %v512, %v513
      %v515 = vsel %vm225, %v449, 0.0
      %v516 = vsel %vm225, %v450, 0.0
      %v517 = vadd.f32 %v515, %v516
      %v518 = vrot.slane %v517, 4
      %v519 = vadd.f32 %v517, %v518
      %v520 = vrot.slane %v519, 2
      %v521 = vadd.f32 %v519, %v520
      %v522 = vrot.slane %v521, 1
      %v523 = vadd.f32 %v521, %v522
      %v524 = vmul.f32 %v460, 0.0625
      %v525 = vmul.f32 %v469, 0.0625
      %v526 = vmul.f32 %v478, 0.0625
      %v527 = vmul.f32 %v487, 0.0625
      %v528 = vmul.f32 %v496, 0.0625
      %v529 = vmul.f32 %v505, 0.0625
      %v530 = vmul.f32 %v514, 0.0625
      %v531 = vmul.f32 %v523, 0.0625
      %v532 = vsub.f32 %v435, %v524
      %v533 = vsub.f32 %v436, %v524
      %v534 = vsub.f32 %v437, %v525
      %v535 = vsub.f32 %v438, %v525
      %v536 = vsub.f32 %v439, %v526
      %v537 = vsub.f32 %v440, %v526
      %v538 = vsub.f32 %v441, %v527
      %v539 = vsub.f32 %v442, %v527
      %v540 = vsub.f32 %v443, %v528
      %v541 = vsub.f32 %v444, %v528
      %v542 = vsub.f32 %v445, %v529
      %v543 = vsub.f32 %v446, %v529
      %v544 = vsub.f32 %v447, %v530
      %v545 = vsub.f32 %v448, %v530
      %v546 = vsub.f32 %v449, %v531
      %v547 = vsub.f32 %v450, %v531
      %v548 = vmul.f32 %v532, %v532
      %v549 = vmul.f32 %v533, %v533
      %v550 = vmul.f32 %v534, %v534
      %v551 = vmul.f32 %v535, %v535
      %v552 = vmul.f32 %v536, %v536
      %v553 = vmul.f32 %v537, %v537
      %v554 = vmul.f32 %v538, %v538
      %v555 = vmul.f32 %v539, %v539
      %v556 = vmul.f32 %v540, %v540
      %v557 = vmul.f32 %v541, %v541
      %v558 = vmul.f32 %v542, %v542
      %v559 = vmul.f32 %v543, %v543
      %v560 = vmul.f32 %v544, %v544
      %v561 = vmul.f32 %v545, %v545
      %v562 = vmul.f32 %v546, %v546
      %v563 = vmul.f32 %v547, %v547
      %v564 = vsel %vm225, %v548, 0.0
      %v565 = vsel %vm225, %v549, 0.0
      %v566 = vadd.f32 %v564, %v565
      %v567 = vrot.slane %v566, 4
      %v568 = vadd.f32 %v566, %v567
      %v569 = vrot.slane %v568, 2
      %v570 = vadd.f32 %v568, %v569
      %v571 = vrot.slane %v570, 1
      %v572 = vadd.f32 %v570, %v571
      %v573 = vsel %vm225, %v550, 0.0
      %v574 = vsel %vm225, %v551, 0.0
      %v575 = vadd.f32 %v573, %v574
      %v576 = vrot.slane %v575, 4
      %v577 = vadd.f32 %v575, %v576
      %v578 = vrot.slane %v577, 2
      %v579 = vadd.f32 %v577, %v578
      %v580 = vrot.slane %v579, 1
      %v581 = vadd.f32 %v579, %v580
      %v582 = vsel %vm225, %v552, 0.0
      %v583 = vsel %vm225, %v553, 0.0
      %v584 = vadd.f32 %v582, %v583
      %v585 = vrot.slane %v584, 4
      %v586 = vadd.f32 %v584, %v585
      %v587 = vrot.slane %v586, 2
      %v588 = vadd.f32 %v586, %v587
      %v589 = vrot.slane %v588, 1
      %v590 = vadd.f32 %v588, %v589
      %v591 = vsel %vm225, %v554, 0.0
      %v592 = vsel %vm225, %v555, 0.0
      %v593 = vadd.f32 %v591, %v592
      %v594 = vrot.slane %v593, 4
      %v595 = vadd.f32 %v593, %v594
      %v596 = vrot.slane %v595, 2
      %v597 = vadd.f32 %v595, %v596
      %v598 = vrot.slane %v597, 1
      %v599 = vadd.f32 %v597, %v598
      %v600 = vsel %vm225, %v556, 0.0
      %v601 = vsel %vm225, %v557, 0.0
      %v602 = vadd.f32 %v600, %v601
      %v603 = vrot.slane %v602, 4
      %v604 = vadd.f32 %v602, %v603
      %v605 = vrot.slane %v604, 2
      %v606 = vadd.f32 %v604, %v605
      %v607 = vrot.slane %v606, 1
      %v608 = vadd.f32 %v606, %v607
      %v609 = vsel %vm225, %v558, 0.0
      %v610 = vsel %vm225, %v559, 0.0
      %v611 = vadd.f32 %v609, %v610
      %v612 = vrot.slane %v611, 4
      %v613 = vadd.f32 %v611, %v612
      %v614 = vrot.slane %v613, 2
      %v615 = vadd.f32 %v613, %v614
      %v616 = vrot.slane %v615, 1
      %v617 = vadd.f32 %v615, %v616
      %v618 = vsel %vm225, %v560, 0.0
      %v619 = vsel %vm225, %v561, 0.0
      %v620 = vadd.f32 %v618, %v619
      %v621 = vrot.slane %v620, 4
      %v622 = vadd.f32 %v620, %v621
      %v623 = vrot.slane %v622, 2
      %v624 = vadd.f32 %v622, %v623
      %v625 = vrot.slane %v624, 1
      %v626 = vadd.f32 %v624, %v625
      %v627 = vsel %vm225, %v562, 0.0
      %v628 = vsel %vm225, %v563, 0.0
      %v629 = vadd.f32 %v627, %v628
      %v630 = vrot.slane %v629, 4
      %v631 = vadd.f32 %v629, %v630
      %v632 = vrot.slane %v631, 2
      %v633 = vadd.f32 %v631, %v632
      %v634 = vrot.slane %v633, 1
      %v635 = vadd.f32 %v633, %v634
      %v636 = vmul.f32 %v572, 0.0625
      %v637 = vmul.f32 %v581, 0.0625
      %v638 = vmul.f32 %v590, 0.0625
      %v639 = vmul.f32 %v599, 0.0625
      %v640 = vmul.f32 %v608, 0.0625
      %v641 = vmul.f32 %v617, 0.0625
      %v642 = vmul.f32 %v626, 0.0625
      %v643 = vmul.f32 %v635, 0.0625
      %v644 = vadd.f32 %v636, 1e-05
      %v645 = vadd.f32 %v637, 1e-05
      %v646 = vadd.f32 %v638, 1e-05
      %v647 = vadd.f32 %v639, 1e-05
      %v648 = vadd.f32 %v640, 1e-05
      %v649 = vadd.f32 %v641, 1e-05
      %v650 = vadd.f32 %v642, 1e-05
      %v651 = vadd.f32 %v643, 1e-05
      %v652 = vrsqrt.pop %v644
      %v653 = vrsqrt.pop %v645
      %v654 = vrsqrt.pop %v646
      %v655 = vrsqrt.pop %v647
      %v656 = vrsqrt.pop %v648
      %v657 = vrsqrt.pop %v649
      %v658 = vrsqrt.pop %v650
      %v659 = vrsqrt.pop %v651
      %v660 = vmul.f32 %v451, %v652
      %v661 = vmul.f32 %v451, %v653
      %v662 = vmul.f32 %v451, %v654
      %v663 = vmul.f32 %v451, %v655
      %v664 = vmul.f32 %v451, %v656
      %v665 = vmul.f32 %v451, %v657
      %v666 = vmul.f32 %v451, %v658
      %v667 = vmul.f32 %v451, %v659
      %v668 = vmul.f32 %v524, %v660
      %v669 = vmul.f32 %v525, %v661
      %v670 = vmul.f32 %v526, %v662
      %v671 = vmul.f32 %v527, %v663
      %v672 = vmul.f32 %v528, %v664
      %v673 = vmul.f32 %v529, %v665
      %v674 = vmul.f32 %v530, %v666
      %v675 = vmul.f32 %v531, %v667
      %684 = vrot.lane.b32.xlu0 %v668, 32
      %v685 = vpop.permute.xlu0 %684
      %686 = vrot.lane.b32.xlu0 %v669, 32
      %v687 = vpop.permute.xlu0 %686
      %688 = vrot.lane.b32.xlu0 %v670, 32
      %v689 = vpop.permute.xlu0 %688
      %690 = vrot.lane.b32.xlu0 %v671, 32
      %v691 = vpop.permute.xlu0 %690
      %692 = vrot.lane.b32.xlu0 %v672, 32
      %v693 = vpop.permute.xlu0 %692
      %694 = vrot.lane.b32.xlu0 %v673, 32
      %v695 = vpop.permute.xlu0 %694
      %696 = vrot.lane.b32.xlu0 %v674, 32
      %v697 = vpop.permute.xlu0 %696
      %698 = vrot.lane.b32.xlu0 %v675, 32
      %v699 = vpop.permute.xlu0 %698
      %v708 = vsub.f32 %v451, %v685
      %v709 = vsub.f32 %v451, %v687
      %v710 = vsub.f32 %v451, %v689
      %v711 = vsub.f32 %v451, %v691
      %v712 = vsub.f32 %v451, %v693
      %v713 = vsub.f32 %v451, %v695
      %v714 = vsub.f32 %v451, %v697
      %v715 = vsub.f32 %v451, %v699
      %v716 = vlaneseq
      %v717 = vshrl.u32 %v716, 7
      %v718 = vsub.s32 0, %v717
      %v719 = vrot.slane %v660, %v718
      %v720 = vlaneseq
      %v721 = vshrl.u32 %v720, 7
      %v722 = vsub.s32 0, %v721
      %v723 = vrot.slane %v661, %v722
      %v724 = vlaneseq
      %v725 = vshrl.u32 %v724, 7
      %v726 = vsub.s32 0, %v725
      %v727 = vrot.slane %v662, %v726
      %v728 = vlaneseq
      %v729 = vshrl.u32 %v728, 7
      %v730 = vsub.s32 0, %v729
      %v731 = vrot.slane %v663, %v730
      %v732 = vlaneseq
      %v733 = vshrl.u32 %v732, 7
      %v734 = vsub.s32 0, %v733
      %v735 = vrot.slane %v664, %v734
      %v736 = vlaneseq
      %v737 = vshrl.u32 %v736, 7
      %v738 = vsub.s32 0, %v737
      %v739 = vrot.slane %v665, %v738
      %v740 = vlaneseq
      %v741 = vshrl.u32 %v740, 7
      %v742 = vsub.s32 0, %v741
      %v743 = vrot.slane %v666, %v742
      %v744 = vlaneseq
      %v745 = vshrl.u32 %v744, 7
      %v746 = vsub.s32 0, %v745
      %v747 = vrot.slane %v667, %v746
      %v748 = vmul.f32 %v435, %v719
      %v749 = vmul.f32 %v436, %v719
      %v750 = vmul.f32 %v437, %v723
      %v751 = vmul.f32 %v438, %v723
      %v752 = vmul.f32 %v439, %v727
      %v753 = vmul.f32 %v440, %v727
      %v754 = vmul.f32 %v441, %v731
      %v755 = vmul.f32 %v442, %v731
      %v756 = vmul.f32 %v443, %v735
      %v757 = vmul.f32 %v444, %v735
      %v758 = vmul.f32 %v445, %v739
      %v759 = vmul.f32 %v446, %v739
      %v760 = vmul.f32 %v447, %v743
      %v761 = vmul.f32 %v448, %v743
      %v762 = vmul.f32 %v449, %v747
      %v763 = vmul.f32 %v450, %v747
      %v764 = vlaneseq
      %v765 = vshrl.u32 %v764, 7
      %v766 = vsub.s32 0, %v765
      %v767 = vrot.slane %v708, %v766
      %v768 = vlaneseq
      %v769 = vshrl.u32 %v768, 7
      %v770 = vsub.s32 0, %v769
      %v771 = vrot.slane %v709, %v770
      %v772 = vlaneseq
      %v773 = vshrl.u32 %v772, 7
      %v774 = vsub.s32 0, %v773
      %v775 = vrot.slane %v710, %v774
      %v776 = vlaneseq
      %v777 = vshrl.u32 %v776, 7
      %v778 = vsub.s32 0, %v777
      %v779 = vrot.slane %v711, %v778
      %v780 = vlaneseq
      %v781 = vshrl.u32 %v780, 7
      %v782 = vsub.s32 0, %v781
      %v783 = vrot.slane %v712, %v782
      %v784 = vlaneseq
      %v785 = vshrl.u32 %v784, 7
      %v786 = vsub.s32 0, %v785
      %v787 = vrot.slane %v713, %v786
      %v788 = vlaneseq
      %v789 = vshrl.u32 %v788, 7
      %v790 = vsub.s32 0, %v789
      %v791 = vrot.slane %v714, %v790
      %v792 = vlaneseq
      %v793 = vshrl.u32 %v792, 7
      %v794 = vsub.s32 0, %v793
      %v795 = vrot.slane %v715, %v794
      %804 = vrot.lane.b32.xlu0 %v767, 96
      %v805 = vpop.permute.xlu0 %804
      %806 = vrot.lane.b32.xlu0 %v771, 96
      %v807 = vpop.permute.xlu0 %806
      %808 = vrot.lane.b32.xlu0 %v775, 96
      %v809 = vpop.permute.xlu0 %808
      %810 = vrot.lane.b32.xlu0 %v779, 96
      %v811 = vpop.permute.xlu0 %810
      %812 = vrot.lane.b32.xlu0 %v783, 96
      %v813 = vpop.permute.xlu0 %812
      %814 = vrot.lane.b32.xlu0 %v787, 96
      %v815 = vpop.permute.xlu0 %814
      %816 = vrot.lane.b32.xlu0 %v791, 96
      %v817 = vpop.permute.xlu0 %816
      %818 = vrot.lane.b32.xlu0 %v795, 96
      %v819 = vpop.permute.xlu0 %818
      %v828 = vadd.f32 %v748, %v805
      %v829 = vadd.f32 %v749, %v805
      %v830 = vadd.f32 %v750, %v807
      %v831 = vadd.f32 %v751, %v807
      %v832 = vadd.f32 %v752, %v809
      %v833 = vadd.f32 %v753, %v809
      %v834 = vadd.f32 %v754, %v811
      %v835 = vadd.f32 %v755, %v811
      %v836 = vadd.f32 %v756, %v813
      %v837 = vadd.f32 %v757, %v813
      %v838 = vadd.f32 %v758, %v815
      %v839 = vadd.f32 %v759, %v815
      %v840 = vadd.f32 %v760, %v817
      %v841 = vadd.f32 %v761, %v817
      %v842 = vadd.f32 %v762, %v819
      %v843 = vadd.f32 %v763, %v819
      %848 = vrot.lane.b32.xlu0 %v168, 96
      %v849 = vpop.permute.xlu0 %848
      %850 = vrot.lane.b32.xlu0 %v169, 96
      %v851 = vpop.permute.xlu0 %850
      %852 = vrot.lane.b32.xlu0 %v170, 96
      %v853 = vpop.permute.xlu0 %852
      %854 = vrot.lane.b32.xlu0 %v171, 96
      %v855 = vpop.permute.xlu0 %854
      %861 = vrot.lane.b32.xlu0 %v176, 96
      %v862 = vpop.permute.xlu0 %861
      %v865 = vsel %vm225, %v828, 0
      %v868 = vsel %vm225, %v829, 0
      %v871 = vsel %vm225, %v830, 0
      %v874 = vsel %vm225, %v831, 0
      %v877 = vsel %vm225, %v832, 0
      %v880 = vsel %vm225, %v833, 0
      %v883 = vsel %vm225, %v834, 0
      %v886 = vsel %vm225, %v835, 0
      %v889 = vsel %vm225, %v836, 0
      %v892 = vsel %vm225, %v837, 0
      %v895 = vsel %vm225, %v838, 0
      %v898 = vsel %vm225, %v839, 0
      %v901 = vsel %vm225, %v840, 0
      %v904 = vsel %vm225, %v841, 0
      %v907 = vsel %vm225, %v842, 0
      %v910 = vsel %vm225, %v843, 0
      %912 = vmatprep.subr.mxu0 0.0
      %913 = vmatpush1.msra.mxu0 %v849
      %914 = vmatprep.subr.mxu0 0.0
      %915 = vmatpush1.msra.mxu0 %v851
      %916 = vmatprep.subr.mxu0 0.0
      %917 = vmatpush1.msra.mxu0 %v853
      %918 = vmatprep.subr.mxu0 0.0
      %919 = vmatpush1.msra.mxu0 %v855
      %920 = vmatprep.subr.mxu0 0.0
      %921 = vmatpush1.msra.mxu0 0.0
      %922 = vmatprep.subr.mxu0 0.0
      %923 = vmatpush1.msra.mxu0 0.0
      %924 = vmatprep.subr.mxu0 0.0
      %925 = vmatpush1.msra.mxu0 0.0
      %926 = vmatprep.subr.mxu0 0.0
      %927 = vmatpush1.msra.mxu0 0.0
      %928 = vmatprep.subr.mxu0 0.0
      %929 = vmatpush1.msra.mxu0 0.0
      %930 = vmatprep.subr.mxu0 0.0
      %931 = vmatpush1.msra.mxu0 0.0
      %932 = vmatprep.subr.mxu0 0.0
      %933 = vmatpush1.msra.mxu0 0.0
      %934 = vmatprep.subr.mxu0 0.0
      %935 = vmatpush1.msra.mxu0 0.0
      %936 = vmatprep.subr.mxu0 0.0
      %937 = vmatpush1.msra.mxu0 0.0
      %938 = vmatprep.subr.mxu0 0.0
      %939 = vmatpush1.msra.mxu0 0.0
      %940 = vmatprep.subr.mxu0 0.0
      %941 = vmatpush1.msra.mxu0 0.0
      %942 = vmatprep.subr.mxu0 0.0
      %943 = vmatpush1.msra.mxu0 0.0
      %944 = vmatprep.subr.mxu0 0.0
      %945 = vmatpush1.msra.mxu0 0.0
      %946 = vmatprep.subr.mxu0 0.0
      %947 = vmatpush1.msra.mxu0 0.0
      %948 = vmatprep.subr.mxu0 0.0
      %949 = vmatpush1.msra.mxu0 0.0
      %950 = vmatprep.subr.mxu0 0.0
      %951 = vmatpush1.msra.mxu0 0.0
      %952 = vmatprep.subr.mxu0 0.0
      %953 = vmatpush1.msra.mxu0 0.0
      %954 = vmatprep.subr.mxu0 0.0
      %955 = vmatpush1.msra.mxu0 0.0
      %956 = vmatprep.subr.mxu0 0.0
      %957 = vmatpush1.msra.mxu0 0.0
      %958 = vmatprep.subr.mxu0 0.0
      %959 = vmatpush1.msra.mxu0 0.0
      %960 = vmatprep.subr.mxu0 0.0
      %961 = vmatpush1.msra.mxu0 0.0
      %962 = vmatprep.subr.mxu0 0.0
      %963 = vmatpush1.msra.mxu0 0.0
      %964 = vmatprep.subr.mxu0 0.0
      %965 = vmatpush1.msra.mxu0 0.0
      %966 = vmatprep.subr.mxu0 0.0
      %967 = vmatpush1.msra.mxu0 0.0
      %968 = vmatprep.subr.mxu0 0.0
      %969 = vmatpush1.msra.mxu0 0.0
      %970 = vmatprep.subr.mxu0 0.0
      %971 = vmatpush1.msra.mxu0 0.0
      %972 = vmatprep.subr.mxu0 0.0
      %973 = vmatpush1.msra.mxu0 0.0
      %974 = vmatprep.subr.mxu0 0.0
      %975 = vmatpush1.msra.mxu0 0.0
      %976 = vmatprep.mubr.f32.mxu0 0.0
      %977 = vmatmul.mubr.f32.gmra.mrb[0].mxu0 %v865
      %v978 = vpop.f32.mrb[0].mxu0
      %v979 = vadd.f32 %v862, %v978
      %v980 = vpop.f32.mrb[0].mxu0
      %981 = vmatprep.mubr.f32.mxu0 0.0
      %982 = vmatmul.mubr.f32.gmra.mrb[0].mxu0 %v868
      %v983 = vpop.f32.mrb[0].mxu0
      %v984 = vadd.f32 %v862, %v983
      %v985 = vpop.f32.mrb[0].mxu0
      %986 = vmatprep.mubr.f32.mxu0 0.0
      %987 = vmatmul.mubr.f32.gmra.mrb[0].mxu0 %v871
      %v988 = vpop.f32.mrb[0].mxu0
      %v989 = vadd.f32 %v862, %v988
      %v990 = vpop.f32.mrb[0].mxu0
      %991 = vmatprep.mubr.f32.mxu0 0.0
      %992 = vmatmul.mubr.f32.gmra.mrb[0].mxu0 %v874
      %v993 = vpop.f32.mrb[0].mxu0
      %v994 = vadd.f32 %v862, %v993
      %v995 = vpop.f32.mrb[0].mxu0
      %996 = vmatprep.mubr.f32.mxu0 0.0
      %997 = vmatmul.mubr.f32.gmra.mrb[0].mxu0 %v877
      %v998 = vpop.f32.mrb[0].mxu0
      %v999 = vadd.f32 %v862, %v998
      %v1000 = vpop.f32.mrb[0].mxu0
      %1001 = vmatprep.mubr.f32.mxu0 0.0
      %1002 = vmatmul.mubr.f32.gmra.mrb[0].mxu0 %v880
      %v1003 = vpop.f32.mrb[0].mxu0
      %v1004 = vadd.f32 %v862, %v1003
      %v1005 = vpop.f32.mrb[0].mxu0
      %1006 = vmatprep.mubr.f32.mxu0 0.0
      %1007 = vmatmul.mubr.f32.gmra.mrb[0].mxu0 %v883
      %v1008 = vpop.f32.mrb[0].mxu0
      %v1009 = vadd.f32 %v862, %v1008
      %v1010 = vpop.f32.mrb[0].mxu0
      %1011 = vmatprep.mubr.f32.mxu0 0.0
      %1012 = vmatmul.mubr.f32.gmra.mrb[0].mxu0 %v886
      %v1013 = vpop.f32.mrb[0].mxu0
      %v1014 = vadd.f32 %v862, %v1013
      %v1015 = vpop.f32.mrb[0].mxu0
      %1016 = vmatprep.mubr.f32.mxu0 0.0
      %1017 = vmatmul.mubr.f32.gmra.mrb[0].mxu0 %v889
      %v1018 = vpop.f32.mrb[0].mxu0
      %v1019 = vadd.f32 %v862, %v1018
      %v1020 = vpop.f32.mrb[0].mxu0
      %1021 = vmatprep.mubr.f32.mxu0 0.0
      %1022 = vmatmul.mubr.f32.gmra.mrb[0].mxu0 %v892
      %v1023 = vpop.f32.mrb[0].mxu0
      %v1024 = vadd.f32 %v862, %v1023
      %v1025 = vpop.f32.mrb[0].mxu0
      %1026 = vmatprep.mubr.f32.mxu0 0.0
      %1027 = vmatmul.mubr.f32.gmra.mrb[0].mxu0 %v895
      %v1028 = vpop.f32.mrb[0].mxu0
      %v1029 = vadd.f32 %v862, %v1028
      %v1030 = vpop.f32.mrb[0].mxu0
      %1031 = vmatprep.mubr.f32.mxu0 0.0
      %1032 = vmatmul.mubr.f32.gmra.mrb[0].mxu0 %v898
      %v1033 = vpop.f32.mrb[0].mxu0
      %v1034 = vadd.f32 %v862, %v1033
      %v1035 = vpop.f32.mrb[0].mxu0
      %1036 = vmatprep.mubr.f32.mxu0 0.0
      %1037 = vmatmul.mubr.f32.gmra.mrb[0].mxu0 %v901
      %v1038 = vpop.f32.mrb[0].mxu0
      %v1039 = vadd.f32 %v862, %v1038
      %v1040 = vpop.f32.mrb[0].mxu0
      %1041 = vmatprep.mubr.f32.mxu0 0.0
      %1042 = vmatmul.mubr.f32.gmra.mrb[0].mxu0 %v904
      %v1043 = vpop.f32.mrb[0].mxu0
      %v1044 = vadd.f32 %v862, %v1043
      %v1045 = vpop.f32.mrb[0].mxu0
      %1046 = vmatprep.mubr.f32.mxu0 0.0
      %1047 = vmatmul.mubr.f32.gmra.mrb[0].mxu0 %v907
      %v1048 = vpop.f32.mrb[0].mxu0
      %v1049 = vadd.f32 %v862, %v1048
      %v1050 = vpop.f32.mrb[0].mxu0
      %1051 = vmatprep.mubr.f32.mxu0 0.0
      %1052 = vmatmul.mubr.f32.gmra.mrb[0].mxu0 %v910
      %v1053 = vpop.f32.mrb[0].mxu0
      %v1054 = vadd.f32 %v862, %v1053
      %v1055 = vpop.f32.mrb[0].mxu0
      %1056 = vdwg.mxu0
      %vm1057 = vcmask 130048
      %v1058 = vsel %vm1057, %v152, 0
      %v1060 = vsel %vm1057, %v153, 0
      %1062 = vmatprep.subr.mxu0 0.0
      %1063 = vmatpush1.msra.mxu0 %v979
      %1064 = vmatprep.subr.mxu0 0.0
      %1065 = vmatpush1.msra.mxu0 %v984
      %1066 = vmatprep.subr.mxu0 0.0
      %1067 = vmatpush1.msra.mxu0 0.0
      %1068 = vmatprep.subr.mxu0 0.0
      %1069 = vmatpush1.msra.mxu0 0.0
      %1070 = vmatprep.subr.mxu0 0.0
      %1071 = vmatpush1.msra.mxu0 0.0
      %1072 = vmatprep.subr.mxu0 0.0
      %1073 = vmatpush1.msra.mxu0 0.0
      %1074 = vmatprep.subr.mxu0 0.0
      %1075 = vmatpush1.msra.mxu0 0.0
      %1076 = vmatprep.subr.mxu0 0.0
      %1077 = vmatpush1.msra.mxu0 0.0
      %1078 = vmatprep.subr.mxu0 0.0
      %1079 = vmatpush1.msra.mxu0 0.0
      %1080 = vmatprep.subr.mxu0 0.0
      %1081 = vmatpush1.msra.mxu0 0.0
      %1082 = vmatprep.subr.mxu0 0.0
      %1083 = vmatpush1.msra.mxu0 0.0
      %1084 = vmatprep.subr.mxu0 0.0
      %1085 = vmatpush1.msra.mxu0 0.0
      %1086 = vmatprep.subr.mxu0 0.0
      %1087 = vmatpush1.msra.mxu0 0.0
      %1088 = vmatprep.subr.mxu0 0.0
      %1089 = vmatpush1.msra.mxu0 0.0
      %1090 = vmatprep.subr.mxu0 0.0
      %1091 = vmatpush1.msra.mxu0 0.0
      %1092 = vmatprep.subr.mxu0 0.0
      %1093 = vmatpush1.msra.mxu0 0.0
      %1094 = vmatprep.subr.mxu0 0.0
      %1095 = vmatpush1.msra.mxu0 0.0
      %1096 = vmatprep.subr.mxu0 0.0
      %1097 = vmatpush1.msra.mxu0 0.0
      %1098 = vmatprep.subr.mxu0 0.0
      %1099 = vmatpush1.msra.mxu0 0.0
      %1100 = vmatprep.subr.mxu0 0.0
      %1101 = vmatpush1.msra.mxu0 0.0
      %1102 = vmatprep.subr.mxu0 0.0
      %1103 = vmatpush1.msra.mxu0 0.0
      %1104 = vmatprep.subr.mxu0 0.0
      %1105 = vmatpush1.msra.mxu0 0.0
      %1106 = vmatprep.subr.mxu0 0.0
      %1107 = vmatpush1.msra.mxu0 0.0
      %1108 = vmatprep.subr.mxu0 0.0
      %1109 = vmatpush1.msra.mxu0 0.0
      %1110 = vmatprep.subr.mxu0 0.0
      %1111 = vmatpush1.msra.mxu0 0.0
      %1112 = vmatprep.subr.mxu0 0.0
      %1113 = vmatpush1.msra.mxu0 0.0
      %1114 = vmatprep.subr.mxu0 0.0
      %1115 = vmatpush1.msra.mxu0 0.0
      %1116 = vmatprep.subr.mxu0 0.0
      %1117 = vmatpush1.msra.mxu0 0.0
      %1118 = vmatprep.subr.mxu0 0.0
      %1119 = vmatpush1.msra.mxu0 0.0
      %1120 = vmatprep.subr.mxu0 0.0
      %1121 = vmatpush1.msra.mxu0 0.0
      %1122 = vmatprep.subr.mxu0 0.0
      %1123 = vmatpush1.msra.mxu0 0.0
      %1124 = vmatprep.subr.mxu0 0.0
      %1125 = vmatpush1.msra.mxu0 0.0
      %1126 = vmatprep.mubr.f32.mxu0 0.0
      %1127 = vmatmul.mubr.f32.gmra.mrb[0].mxu0 %v1058
      %v1128 = vpop.f32.mrb[0].mxu0
      %v1129 = vadd.f32 0.0, %v1128
      %v1130 = vpop.f32.mrb[0].mxu0
      %1131 = vmatprep.mubr.f32.mxu0 0.0
      %1132 = vmatmul.mubr.f32.gmra.mrb[0].mxu0 %v1060
      %v1133 = vpop.f32.mrb[0].mxu0
      %v1134 = vadd.f32 0.0, %v1133
      %v1135 = vpop.f32.mrb[0].mxu0
      %1136 = vdwg.mxu0
      %v1137 = vsel %vm1057, %v154, 0
      %v1139 = vsel %vm1057, %v155, 0
      %1141 = vmatprep.subr.mxu0 0.0
      %1142 = vmatpush1.msra.mxu0 %v989
      %1143 = vmatprep.subr.mxu0 0.0
      %1144 = vmatpush1.msra.mxu0 %v994
      %1145 = vmatprep.subr.mxu0 0.0
      %1146 = vmatpush1.msra.mxu0 0.0
      %1147 = vmatprep.subr.mxu0 0.0
      %1148 = vmatpush1.msra.mxu0 0.0
      %1149 = vmatprep.subr.mxu0 0.0
      %1150 = vmatpush1.msra.mxu0 0.0
      %1151 = vmatprep.subr.mxu0 0.0
      %1152 = vmatpush1.msra.mxu0 0.0
      %1153 = vmatprep.subr.mxu0 0.0
      %1154 = vmatpush1.msra.mxu0 0.0
      %1155 = vmatprep.subr.mxu0 0.0
      %1156 = vmatpush1.msra.mxu0 0.0
      %1157 = vmatprep.subr.mxu0 0.0
      %1158 = vmatpush1.msra.mxu0 0.0
      %1159 = vmatprep.subr.mxu0 0.0
      %1160 = vmatpush1.msra.mxu0 0.0
      %1161 = vmatprep.subr.mxu0 0.0
      %1162 = vmatpush1.msra.mxu0 0.0
      %1163 = vmatprep.subr.mxu0 0.0
      %1164 = vmatpush1.msra.mxu0 0.0
      %1165 = vmatprep.subr.mxu0 0.0
      %1166 = vmatpush1.msra.mxu0 0.0
      %1167 = vmatprep.subr.mxu0 0.0
      %1168 = vmatpush1.msra.mxu0 0.0
      %1169 = vmatprep.subr.mxu0 0.0
      %1170 = vmatpush1.msra.mxu0 0.0
      %1171 = vmatprep.subr.mxu0 0.0
      %1172 = vmatpush1.msra.mxu0 0.0
      %1173 = vmatprep.subr.mxu0 0.0
      %1174 = vmatpush1.msra.mxu0 0.0
      %1175 = vmatprep.subr.mxu0 0.0
      %1176 = vmatpush1.msra.mxu0 0.0
      %1177 = vmatprep.subr.mxu0 0.0
      %1178 = vmatpush1.msra.mxu0 0.0
      %1179 = vmatprep.subr.mxu0 0.0
      %1180 = vmatpush1.msra.mxu0 0.0
      %1181 = vmatprep.subr.mxu0 0.0
      %1182 = vmatpush1.msra.mxu0 0.0
      %1183 = vmatprep.subr.mxu0 0.0
      %1184 = vmatpush1.msra.mxu0 0.0
      %1185 = vmatprep.subr.mxu0 0.0
      %1186 = vmatpush1.msra.mxu0 0.0
      %1187 = vmatprep.subr.mxu0 0.0
      %1188 = vmatpush1.msra.mxu0 0.0
      %1189 = vmatprep.subr.mxu0 0.0
      %1190 = vmatpush1.msra.mxu0 0.0
      %1191 = vmatprep.subr.mxu0 0.0
      %1192 = vmatpush1.msra.mxu0 0.0
      %1193 = vmatprep.subr.mxu0 0.0
      %1194 = vmatpush1.msra.mxu0 0.0
      %1195 = vmatprep.subr.mxu0 0.0
      %1196 = vmatpush1.msra.mxu0 0.0
      %1197 = vmatprep.subr.mxu0 0.0
      %1198 = vmatpush1.msra.mxu0 0.0
      %1199 = vmatprep.subr.mxu0 0.0
      %1200 = vmatpush1.msra.mxu0 0.0
      %1201 = vmatprep.subr.mxu0 0.0
      %1202 = vmatpush1.msra.mxu0 0.0
      %1203 = vmatprep.subr.mxu0 0.0
      %1204 = vmatpush1.msra.mxu0 0.0
      %1205 = vmatprep.mubr.f32.mxu0 0.0
      %1206 = vmatmul.mubr.f32.gmra.mrb[0].mxu0 %v1137
      %v1207 = vpop.f32.mrb[0].mxu0
      %v1208 = vadd.f32 0.0, %v1207
      %v1209 = vpop.f32.mrb[0].mxu0
      %1210 = vmatprep.mubr.f32.mxu0 0.0
      %1211 = vmatmul.mubr.f32.gmra.mrb[0].mxu0 %v1139
      %v1212 = vpop.f32.mrb[0].mxu0
      %v1213 = vadd.f32 0.0, %v1212
      %v1214 = vpop.f32.mrb[0].mxu0
      %1215 = vdwg.mxu0
      %v1216 = vsel %vm1057, %v156, 0
      %v1218 = vsel %vm1057, %v157, 0
      %1220 = vmatprep.subr.mxu0 0.0
      %1221 = vmatpush1.msra.mxu0 %v999
      %1222 = vmatprep.subr.mxu0 0.0
      %1223 = vmatpush1.msra.mxu0 %v1004
      %1224 = vmatprep.subr.mxu0 0.0
      %1225 = vmatpush1.msra.mxu0 0.0
      %1226 = vmatprep.subr.mxu0 0.0
      %1227 = vmatpush1.msra.mxu0 0.0
      %1228 = vmatprep.subr.mxu0 0.0
      %1229 = vmatpush1.msra.mxu0 0.0
      %1230 = vmatprep.subr.mxu0 0.0
      %1231 = vmatpush1.msra.mxu0 0.0
      %1232 = vmatprep.subr.mxu0 0.0
      %1233 = vmatpush1.msra.mxu0 0.0
      %1234 = vmatprep.subr.mxu0 0.0
      %1235 = vmatpush1.msra.mxu0 0.0
      %1236 = vmatprep.subr.mxu0 0.0
      %1237 = vmatpush1.msra.mxu0 0.0
      %1238 = vmatprep.subr.mxu0 0.0
      %1239 = vmatpush1.msra.mxu0 0.0
      %1240 = vmatprep.subr.mxu0 0.0
      %1241 = vmatpush1.msra.mxu0 0.0
      %1242 = vmatprep.subr.mxu0 0.0
      %1243 = vmatpush1.msra.mxu0 0.0
      %1244 = vmatprep.subr.mxu0 0.0
      %1245 = vmatpush1.msra.mxu0 0.0
      %1246 = vmatprep.subr.mxu0 0.0
      %1247 = vmatpush1.msra.mxu0 0.0
      %1248 = vmatprep.subr.mxu0 0.0
      %1249 = vmatpush1.msra.mxu0 0.0
      %1250 = vmatprep.subr.mxu0 0.0
      %1251 = vmatpush1.msra.mxu0 0.0
      %1252 = vmatprep.subr.mxu0 0.0
      %1253 = vmatpush1.msra.mxu0 0.0
      %1254 = vmatprep.subr.mxu0 0.0
      %1255 = vmatpush1.msra.mxu0 0.0
      %1256 = vmatprep.subr.mxu0 0.0
      %1257 = vmatpush1.msra.mxu0 0.0
      %1258 = vmatprep.subr.mxu0 0.0
      %1259 = vmatpush1.msra.mxu0 0.0
      %1260 = vmatprep.subr.mxu0 0.0
      %1261 = vmatpush1.msra.mxu0 0.0
      %1262 = vmatprep.subr.mxu0 0.0
      %1263 = vmatpush1.msra.mxu0 0.0
      %1264 = vmatprep.subr.mxu0 0.0
      %1265 = vmatpush1.msra.mxu0 0.0
      %1266 = vmatprep.subr.mxu0 0.0
      %1267 = vmatpush1.msra.mxu0 0.0
      %1268 = vmatprep.subr.mxu0 0.0
      %1269 = vmatpush1.msra.mxu0 0.0
      %1270 = vmatprep.subr.mxu0 0.0
      %1271 = vmatpush1.msra.mxu0 0.0
      %1272 = vmatprep.subr.mxu0 0.0
      %1273 = vmatpush1.msra.mxu0 0.0
      %1274 = vmatprep.subr.mxu0 0.0
      %1275 = vmatpush1.msra.mxu0 0.0
      %1276 = vmatprep.subr.mxu0 0.0
      %1277 = vmatpush1.msra.mxu0 0.0
      %1278 = vmatprep.subr.mxu0 0.0
      %1279 = vmatpush1.msra.mxu0 0.0
      %1280 = vmatprep.subr.mxu0 0.0
      %1281 = vmatpush1.msra.mxu0 0.0
      %1282 = vmatprep.subr.mxu0 0.0
      %1283 = vmatpush1.msra.mxu0 0.0
      %1284 = vmatprep.mubr.f32.mxu0 0.0
      %1285 = vmatmul.mubr.f32.gmra.mrb[0].mxu0 %v1216
      %v1286 = vpop.f32.mrb[0].mxu0
      %v1287 = vadd.f32 0.0, %v1286
      %v1288 = vpop.f32.mrb[0].mxu0
      %1289 = vmatprep.mubr.f32.mxu0 0.0
      %1290 = vmatmul.mubr.f32.gmra.mrb[0].mxu0 %v1218
      %v1291 = vpop.f32.mrb[0].mxu0
      %v1292 = vadd.f32 0.0, %v1291
      %v1293 = vpop.f32.mrb[0].mxu0
      %1294 = vdwg.mxu0
      %v1295 = vsel %vm1057, %v158, 0
      %v1297 = vsel %vm1057, %v159, 0
      %1299 = vmatprep.subr.mxu0 0.0
      %1300 = vmatpush1.msra.mxu0 %v1009
      %1301 = vmatprep.subr.mxu0 0.0
      %1302 = vmatpush1.msra.mxu0 %v1014
      %1303 = vmatprep.subr.mxu0 0.0
      %1304 = vmatpush1.msra.mxu0 0.0
      %1305 = vmatprep.subr.mxu0 0.0
      %1306 = vmatpush1.msra.mxu0 0.0
      %1307 = vmatprep.subr.mxu0 0.0
      %1308 = vmatpush1.msra.mxu0 0.0
      %1309 = vmatprep.subr.mxu0 0.0
      %1310 = vmatpush1.msra.mxu0 0.0
      %1311 = vmatprep.subr.mxu0 0.0
      %1312 = vmatpush1.msra.mxu0 0.0
      %1313 = vmatprep.subr.mxu0 0.0
      %1314 = vmatpush1.msra.mxu0 0.0
      %1315 = vmatprep.subr.mxu0 0.0
      %1316 = vmatpush1.msra.mxu0 0.0
      %1317 = vmatprep.subr.mxu0 0.0
      %1318 = vmatpush1.msra.mxu0 0.0
      %1319 = vmatprep.subr.mxu0 0.0
      %1320 = vmatpush1.msra.mxu0 0.0
      %1321 = vmatprep.subr.mxu0 0.0
      %1322 = vmatpush1.msra.mxu0 0.0
      %1323 = vmatprep.subr.mxu0 0.0
      %1324 = vmatpush1.msra.mxu0 0.0
      %1325 = vmatprep.subr.mxu0 0.0
      %1326 = vmatpush1.msra.mxu0 0.0
      %1327 = vmatprep.subr.mxu0 0.0
      %1328 = vmatpush1.msra.mxu0 0.0
      %1329 = vmatprep.subr.mxu0 0.0
      %1330 = vmatpush1.msra.mxu0 0.0
      %1331 = vmatprep.subr.mxu0 0.0
      %1332 = vmatpush1.msra.mxu0 0.0
      %1333 = vmatprep.subr.mxu0 0.0
      %1334 = vmatpush1.msra.mxu0 0.0
      %1335 = vmatprep.subr.mxu0 0.0
      %1336 = vmatpush1.msra.mxu0 0.0
      %1337 = vmatprep.subr.mxu0 0.0
      %1338 = vmatpush1.msra.mxu0 0.0
      %1339 = vmatprep.subr.mxu0 0.0
      %1340 = vmatpush1.msra.mxu0 0.0
      %1341 = vmatprep.subr.mxu0 0.0
      %1342 = vmatpush1.msra.mxu0 0.0
      %1343 = vmatprep.subr.mxu0 0.0
      %1344 = vmatpush1.msra.mxu0 0.0
      %1345 = vmatprep.subr.mxu0 0.0
      %1346 = vmatpush1.msra.mxu0 0.0
      %1347 = vmatprep.subr.mxu0 0.0
      %1348 = vmatpush1.msra.mxu0 0.0
      %1349 = vmatprep.subr.mxu0 0.0
      %1350 = vmatpush1.msra.mxu0 0.0
      %1351 = vmatprep.subr.mxu0 0.0
      %1352 = vmatpush1.msra.mxu0 0.0
      %1353 = vmatprep.subr.mxu0 0.0
      %1354 = vmatpush1.msra.mxu0 0.0
      %1355 = vmatprep.subr.mxu0 0.0
      %1356 = vmatpush1.msra.mxu0 0.0
      %1357 = vmatprep.subr.mxu0 0.0
      %1358 = vmatpush1.msra.mxu0 0.0
      %1359 = vmatprep.subr.mxu0 0.0
      %1360 = vmatpush1.msra.mxu0 0.0
      %1361 = vmatprep.subr.mxu0 0.0
      %1362 = vmatpush1.msra.mxu0 0.0
      %1363 = vmatprep.mubr.f32.mxu0 0.0
      %1364 = vmatmul.mubr.f32.gmra.mrb[0].mxu0 %v1295
      %v1365 = vpop.f32.mrb[0].mxu0
      %v1366 = vadd.f32 0.0, %v1365
      %v1367 = vpop.f32.mrb[0].mxu0
      %1368 = vmatprep.mubr.f32.mxu0 0.0
      %1369 = vmatmul.mubr.f32.gmra.mrb[0].mxu0 %v1297
      %v1370 = vpop.f32.mrb[0].mxu0
      %v1371 = vadd.f32 0.0, %v1370
      %v1372 = vpop.f32.mrb[0].mxu0
      %1373 = vdwg.mxu0
      %v1374 = vsel %vm1057, %v160, 0
      %v1376 = vsel %vm1057, %v161, 0
      %1378 = vmatprep.subr.mxu0 0.0
      %1379 = vmatpush1.msra.mxu0 %v1019
      %1380 = vmatprep.subr.mxu0 0.0
      %1381 = vmatpush1.msra.mxu0 %v1024
      %1382 = vmatprep.subr.mxu0 0.0
      %1383 = vmatpush1.msra.mxu0 0.0
      %1384 = vmatprep.subr.mxu0 0.0
      %1385 = vmatpush1.msra.mxu0 0.0
      %1386 = vmatprep.subr.mxu0 0.0
      %1387 = vmatpush1.msra.mxu0 0.0
      %1388 = vmatprep.subr.mxu0 0.0
      %1389 = vmatpush1.msra.mxu0 0.0
      %1390 = vmatprep.subr.mxu0 0.0
      %1391 = vmatpush1.msra.mxu0 0.0
      %1392 = vmatprep.subr.mxu0 0.0
      %1393 = vmatpush1.msra.mxu0 0.0
      %1394 = vmatprep.subr.mxu0 0.0
      %1395 = vmatpush1.msra.mxu0 0.0
      %1396 = vmatprep.subr.mxu0 0.0
      %1397 = vmatpush1.msra.mxu0 0.0
      %1398 = vmatprep.subr.mxu0 0.0
      %1399 = vmatpush1.msra.mxu0 0.0
      %1400 = vmatprep.subr.mxu0 0.0
      %1401 = vmatpush1.msra.mxu0 0.0
      %1402 = vmatprep.subr.mxu0 0.0
      %1403 = vmatpush1.msra.mxu0 0.0
      %1404 = vmatprep.subr.mxu0 0.0
      %1405 = vmatpush1.msra.mxu0 0.0
      %1406 = vmatprep.subr.mxu0 0.0
      %1407 = vmatpush1.msra.mxu0 0.0
      %1408 = vmatprep.subr.mxu0 0.0
      %1409 = vmatpush1.msra.mxu0 0.0
      %1410 = vmatprep.subr.mxu0 0.0
      %1411 = vmatpush1.msra.mxu0 0.0
      %1412 = vmatprep.subr.mxu0 0.0
      %1413 = vmatpush1.msra.mxu0 0.0
      %1414 = vmatprep.subr.mxu0 0.0
      %1415 = vmatpush1.msra.mxu0 0.0
      %1416 = vmatprep.subr.mxu0 0.0
      %1417 = vmatpush1.msra.mxu0 0.0
      %1418 = vmatprep.subr.mxu0 0.0
      %1419 = vmatpush1.msra.mxu0 0.0
      %1420 = vmatprep.subr.mxu0 0.0
      %1421 = vmatpush1.msra.mxu0 0.0
      %1422 = vmatprep.subr.mxu0 0.0
      %1423 = vmatpush1.msra.mxu0 0.0
      %1424 = vmatprep.subr.mxu0 0.0
      %1425 = vmatpush1.msra.mxu0 0.0
      %1426 = vmatprep.subr.mxu0 0.0
      %1427 = vmatpush1.msra.mxu0 0.0
      %1428 = vmatprep.subr.mxu0 0.0
      %1429 = vmatpush1.msra.mxu0 0.0
      %1430 = vmatprep.subr.mxu0 0.0
      %1431 = vmatpush1.msra.mxu0 0.0
      %1432 = vmatprep.subr.mxu0 0.0
      %1433 = vmatpush1.msra.mxu0 0.0
      %1434 = vmatprep.subr.mxu0 0.0
      %1435 = vmatpush1.msra.mxu0 0.0
      %1436 = vmatprep.subr.mxu0 0.0
      %1437 = vmatpush1.msra.mxu0 0.0
      %1438 = vmatprep.subr.mxu0 0.0
      %1439 = vmatpush1.msra.mxu0 0.0
      %1440 = vmatprep.subr.mxu0 0.0
      %1441 = vmatpush1.msra.mxu0 0.0
      %1442 = vmatprep.mubr.f32.mxu0 0.0
      %1443 = vmatmul.mubr.f32.gmra.mrb[0].mxu0 %v1374
      %v1444 = vpop.f32.mrb[0].mxu0
      %v1445 = vadd.f32 0.0, %v1444
      %v1446 = vpop.f32.mrb[0].mxu0
      %1447 = vmatprep.mubr.f32.mxu0 0.0
      %1448 = vmatmul.mubr.f32.gmra.mrb[0].mxu0 %v1376
      %v1449 = vpop.f32.mrb[0].mxu0
      %v1450 = vadd.f32 0.0, %v1449
      %v1451 = vpop.f32.mrb[0].mxu0
      %1452 = vdwg.mxu0
      %v1453 = vsel %vm1057, %v162, 0
      %v1455 = vsel %vm1057, %v163, 0
      %1457 = vmatprep.subr.mxu0 0.0
      %1458 = vmatpush1.msra.mxu0 %v1029
      %1459 = vmatprep.subr.mxu0 0.0
      %1460 = vmatpush1.msra.mxu0 %v1034
      %1461 = vmatprep.subr.mxu0 0.0
      %1462 = vmatpush1.msra.mxu0 0.0
      %1463 = vmatprep.subr.mxu0 0.0
      %1464 = vmatpush1.msra.mxu0 0.0
      %1465 = vmatprep.subr.mxu0 0.0
      %1466 = vmatpush1.msra.mxu0 0.0
      %1467 = vmatprep.subr.mxu0 0.0
      %1468 = vmatpush1.msra.mxu0 0.0
      %1469 = vmatprep.subr.mxu0 0.0
      %1470 = vmatpush1.msra.mxu0 0.0
      %1471 = vmatprep.subr.mxu0 0.0
      %1472 = vmatpush1.msra.mxu0 0.0
      %1473 = vmatprep.subr.mxu0 0.0
      %1474 = vmatpush1.msra.mxu0 0.0
      %1475 = vmatprep.subr.mxu0 0.0
      %1476 = vmatpush1.msra.mxu0 0.0
      %1477 = vmatprep.subr.mxu0 0.0
      %1478 = vmatpush1.msra.mxu0 0.0
      %1479 = vmatprep.subr.mxu0 0.0
      %1480 = vmatpush1.msra.mxu0 0.0
      %1481 = vmatprep.subr.mxu0 0.0
      %1482 = vmatpush1.msra.mxu0 0.0
      %1483 = vmatprep.subr.mxu0 0.0
      %1484 = vmatpush1.msra.mxu0 0.0
      %1485 = vmatprep.subr.mxu0 0.0
      %1486 = vmatpush1.msra.mxu0 0.0
      %1487 = vmatprep.subr.mxu0 0.0
      %1488 = vmatpush1.msra.mxu0 0.0
      %1489 = vmatprep.subr.mxu0 0.0
      %1490 = vmatpush1.msra.mxu0 0.0
      %1491 = vmatprep.subr.mxu0 0.0
      %1492 = vmatpush1.msra.mxu0 0.0
      %1493 = vmatprep.subr.mxu0 0.0
      %1494 = vmatpush1.msra.mxu0 0.0
      %1495 = vmatprep.subr.mxu0 0.0
      %1496 = vmatpush1.msra.mxu0 0.0
      %1497 = vmatprep.subr.mxu0 0.0
      %1498 = vmatpush1.msra.mxu0 0.0
      %1499 = vmatprep.subr.mxu0 0.0
      %1500 = vmatpush1.msra.mxu0 0.0
      %1501 = vmatprep.subr.mxu0 0.0
      %1502 = vmatpush1.msra.mxu0 0.0
      %1503 = vmatprep.subr.mxu0 0.0
      %1504 = vmatpush1.msra.mxu0 0.0
      %1505 = vmatprep.subr.mxu0 0.0
      %1506 = vmatpush1.msra.mxu0 0.0
      %1507 = vmatprep.subr.mxu0 0.0
      %1508 = vmatpush1.msra.mxu0 0.0
      %1509 = vmatprep.subr.mxu0 0.0
      %1510 = vmatpush1.msra.mxu0 0.0
      %1511 = vmatprep.subr.mxu0 0.0
      %1512 = vmatpush1.msra.mxu0 0.0
      %1513 = vmatprep.subr.mxu0 0.0
      %1514 = vmatpush1.msra.mxu0 0.0
      %1515 = vmatprep.subr.mxu0 0.0
      %1516 = vmatpush1.msra.mxu0 0.0
      %1517 = vmatprep.subr.mxu0 0.0
      %1518 = vmatpush1.msra.mxu0 0.0
      %1519 = vmatprep.subr.mxu0 0.0
      %1520 = vmatpush1.msra.mxu0 0.0
      %1521 = vmatprep.mubr.f32.mxu0 0.0
      %1522 = vmatmul.mubr.f32.gmra.mrb[0].mxu0 %v1453
      %v1523 = vpop.f32.mrb[0].mxu0
      %v1524 = vadd.f32 0.0, %v1523
      %v1525 = vpop.f32.mrb[0].mxu0
      %1526 = vmatprep.mubr.f32.mxu0 0.0
      %1527 = vmatmul.mubr.f32.gmra.mrb[0].mxu0 %v1455
      %v1528 = vpop.f32.mrb[0].mxu0
      %v1529 = vadd.f32 0.0, %v1528
      %v1530 = vpop.f32.mrb[0].mxu0
      %1531 = vdwg.mxu0
      %v1532 = vsel %vm1057, %v164, 0
      %v1534 = vsel %vm1057, %v165, 0
      %1536 = vmatprep.subr.mxu0 0.0
      %1537 = vmatpush1.msra.mxu0 %v1039
      %1538 = vmatprep.subr.mxu0 0.0
      %1539 = vmatpush1.msra.mxu0 %v1044
      %1540 = vmatprep.subr.mxu0 0.0
      %1541 = vmatpush1.msra.mxu0 0.0
      %1542 = vmatprep.subr.mxu0 0.0
      %1543 = vmatpush1.msra.mxu0 0.0
      %1544 = vmatprep.subr.mxu0 0.0
      %1545 = vmatpush1.msra.mxu0 0.0
      %1546 = vmatprep.subr.mxu0 0.0
      %1547 = vmatpush1.msra.mxu0 0.0
      %1548 = vmatprep.subr.mxu0 0.0
      %1549 = vmatpush1.msra.mxu0 0.0
      %1550 = vmatprep.subr.mxu0 0.0
      %1551 = vmatpush1.msra.mxu0 0.0
      %1552 = vmatprep.subr.mxu0 0.0
      %1553 = vmatpush1.msra.mxu0 0.0
      %1554 = vmatprep.subr.mxu0 0.0
      %1555 = vmatpush1.msra.mxu0 0.0
      %1556 = vmatprep.subr.mxu0 0.0
      %1557 = vmatpush1.msra.mxu0 0.0
      %1558 = vmatprep.subr.mxu0 0.0
      %1559 = vmatpush1.msra.mxu0 0.0
      %1560 = vmatprep.subr.mxu0 0.0
      %1561 = vmatpush1.msra.mxu0 0.0
      %1562 = vmatprep.subr.mxu0 0.0
      %1563 = vmatpush1.msra.mxu0 0.0
      %1564 = vmatprep.subr.mxu0 0.0
      %1565 = vmatpush1.msra.mxu0 0.0
      %1566 = vmatprep.subr.mxu0 0.0
      %1567 = vmatpush1.msra.mxu0 0.0
      %1568 = vmatprep.subr.mxu0 0.0
      %1569 = vmatpush1.msra.mxu0 0.0
      %1570 = vmatprep.subr.mxu0 0.0
      %1571 = vmatpush1.msra.mxu0 0.0
      %1572 = vmatprep.subr.mxu0 0.0
      %1573 = vmatpush1.msra.mxu0 0.0
      %1574 = vmatprep.subr.mxu0 0.0
      %1575 = vmatpush1.msra.mxu0 0.0
      %1576 = vmatprep.subr.mxu0 0.0
      %1577 = vmatpush1.msra.mxu0 0.0
      %1578 = vmatprep.subr.mxu0 0.0
      %1579 = vmatpush1.msra.mxu0 0.0
      %1580 = vmatprep.subr.mxu0 0.0
      %1581 = vmatpush1.msra.mxu0 0.0
      %1582 = vmatprep.subr.mxu0 0.0
      %1583 = vmatpush1.msra.mxu0 0.0
      %1584 = vmatprep.subr.mxu0 0.0
      %1585 = vmatpush1.msra.mxu0 0.0
      %1586 = vmatprep.subr.mxu0 0.0
      %1587 = vmatpush1.msra.mxu0 0.0
      %1588 = vmatprep.subr.mxu0 0.0
      %1589 = vmatpush1.msra.mxu0 0.0
      %1590 = vmatprep.subr.mxu0 0.0
      %1591 = vmatpush1.msra.mxu0 0.0
      %1592 = vmatprep.subr.mxu0 0.0
      %1593 = vmatpush1.msra.mxu0 0.0
      %1594 = vmatprep.subr.mxu0 0.0
      %1595 = vmatpush1.msra.mxu0 0.0
      %1596 = vmatprep.subr.mxu0 0.0
      %1597 = vmatpush1.msra.mxu0 0.0
      %1598 = vmatprep.subr.mxu0 0.0
      %1599 = vmatpush1.msra.mxu0 0.0
      %1600 = vmatprep.mubr.f32.mxu0 0.0
      %1601 = vmatmul.mubr.f32.gmra.mrb[0].mxu0 %v1532
      %v1602 = vpop.f32.mrb[0].mxu0
      %v1603 = vadd.f32 0.0, %v1602
      %v1604 = vpop.f32.mrb[0].mxu0
      %1605 = vmatprep.mubr.f32.mxu0 0.0
      %1606 = vmatmul.mubr.f32.gmra.mrb[0].mxu0 %v1534
      %v1607 = vpop.f32.mrb[0].mxu0
      %v1608 = vadd.f32 0.0, %v1607
      %v1609 = vpop.f32.mrb[0].mxu0
      %1610 = vdwg.mxu0
      %v1611 = vsel %vm1057, %v166, 0
      %v1613 = vsel %vm1057, %v167, 0
      %1615 = vmatprep.subr.mxu0 0.0
      %1616 = vmatpush1.msra.mxu0 %v1049
      %1617 = vmatprep.subr.mxu0 0.0
      %1618 = vmatpush1.msra.mxu0 %v1054
      %1619 = vmatprep.subr.mxu0 0.0
      %1620 = vmatpush1.msra.mxu0 0.0
      %1621 = vmatprep.subr.mxu0 0.0
      %1622 = vmatpush1.msra.mxu0 0.0
      %1623 = vmatprep.subr.mxu0 0.0
      %1624 = vmatpush1.msra.mxu0 0.0
      %1625 = vmatprep.subr.mxu0 0.0
      %1626 = vmatpush1.msra.mxu0 0.0
      %1627 = vmatprep.subr.mxu0 0.0
      %1628 = vmatpush1.msra.mxu0 0.0
      %1629 = vmatprep.subr.mxu0 0.0
      %1630 = vmatpush1.msra.mxu0 0.0
      %1631 = vmatprep.subr.mxu0 0.0
      %1632 = vmatpush1.msra.mxu0 0.0
      %1633 = vmatprep.subr.mxu0 0.0
      %1634 = vmatpush1.msra.mxu0 0.0
      %1635 = vmatprep.subr.mxu0 0.0
      %1636 = vmatpush1.msra.mxu0 0.0
      %1637 = vmatprep.subr.mxu0 0.0
      %1638 = vmatpush1.msra.mxu0 0.0
      %1639 = vmatprep.subr.mxu0 0.0
      %1640 = vmatpush1.msra.mxu0 0.0
      %1641 = vmatprep.subr.mxu0 0.0
      %1642 = vmatpush1.msra.mxu0 0.0
      %1643 = vmatprep.subr.mxu0 0.0
      %1644 = vmatpush1.msra.mxu0 0.0
      %1645 = vmatprep.subr.mxu0 0.0
      %1646 = vmatpush1.msra.mxu0 0.0
      %1647 = vmatprep.subr.mxu0 0.0
      %1648 = vmatpush1.msra.mxu0 0.0
      %1649 = vmatprep.subr.mxu0 0.0
      %1650 = vmatpush1.msra.mxu0 0.0
      %1651 = vmatprep.subr.mxu0 0.0
      %1652 = vmatpush1.msra.mxu0 0.0
      %1653 = vmatprep.subr.mxu0 0.0
      %1654 = vmatpush1.msra.mxu0 0.0
      %1655 = vmatprep.subr.mxu0 0.0
      %1656 = vmatpush1.msra.mxu0 0.0
      %1657 = vmatprep.subr.mxu0 0.0
      %1658 = vmatpush1.msra.mxu0 0.0
      %1659 = vmatprep.subr.mxu0 0.0
      %1660 = vmatpush1.msra.mxu0 0.0
      %1661 = vmatprep.subr.mxu0 0.0
      %1662 = vmatpush1.msra.mxu0 0.0
      %1663 = vmatprep.subr.mxu0 0.0
      %1664 = vmatpush1.msra.mxu0 0.0
      %1665 = vmatprep.subr.mxu0 0.0
      %1666 = vmatpush1.msra.mxu0 0.0
      %1667 = vmatprep.subr.mxu0 0.0
      %1668 = vmatpush1.msra.mxu0 0.0
      %1669 = vmatprep.subr.mxu0 0.0
      %1670 = vmatpush1.msra.mxu0 0.0
      %1671 = vmatprep.subr.mxu0 0.0
      %1672 = vmatpush1.msra.mxu0 0.0
      %1673 = vmatprep.subr.mxu0 0.0
      %1674 = vmatpush1.msra.mxu0 0.0
      %1675 = vmatprep.subr.mxu0 0.0
      %1676 = vmatpush1.msra.mxu0 0.0
      %1677 = vmatprep.subr.mxu0 0.0
      %1678 = vmatpush1.msra.mxu0 0.0
      %1679 = vmatprep.mubr.f32.mxu0 0.0
      %1680 = vmatmul.mubr.f32.gmra.mrb[0].mxu0 %v1611
      %v1681 = vpop.f32.mrb[0].mxu0
      %v1682 = vadd.f32 0.0, %v1681
      %v1683 = vpop.f32.mrb[0].mxu0
      %1684 = vmatprep.mubr.f32.mxu0 0.0
      %1685 = vmatmul.mubr.f32.gmra.mrb[0].mxu0 %v1613
      %v1686 = vpop.f32.mrb[0].mxu0
      %v1687 = vadd.f32 0.0, %v1686
      %v1688 = vpop.f32.mrb[0].mxu0
      %1689 = vdwg.mxu0
      %v1690 = vld [vmem:[%s1 + $0x22] sm:$0x1]
      %vm1691 = vcmp.ge.f32.partialorder %v1129, 0.0
      %vm1692 = vcmp.ge.f32.partialorder %v1134, 0.0
      %vm1693 = vcmp.ge.f32.partialorder %v1208, 0.0
      %vm1694 = vcmp.ge.f32.partialorder %v1213, 0.0
      %vm1695 = vcmp.ge.f32.partialorder %v1287, 0.0
      %vm1696 = vcmp.ge.f32.partialorder %v1292, 0.0
      %vm1697 = vcmp.ge.f32.partialorder %v1366, 0.0
      %vm1698 = vcmp.ge.f32.partialorder %v1371, 0.0
      %vm1699 = vcmp.ge.f32.partialorder %v1445, 0.0
      %vm1700 = vcmp.ge.f32.partialorder %v1450, 0.0
      %vm1701 = vcmp.ge.f32.partialorder %v1524, 0.0
      %vm1702 = vcmp.ge.f32.partialorder %v1529, 0.0
      %vm1703 = vcmp.ge.f32.partialorder %v1603, 0.0
      %vm1704 = vcmp.ge.f32.partialorder %v1608, 0.0
      %vm1705 = vcmp.ge.f32.partialorder %v1682, 0.0
      %vm1706 = vcmp.ge.f32.partialorder %v1687, 0.0
      %s1708 = vtos %v1690
      %v1709 = vstv %s1708
      %v1711 = vmul.f32 %v1709, %v1129
      %v1712 = vmul.f32 %v1709, %v1134
      %v1713 = vmul.f32 %v1709, %v1208
      %v1714 = vmul.f32 %v1709, %v1213
      %v1715 = vmul.f32 %v1709, %v1287
      %v1716 = vmul.f32 %v1709, %v1292
      %v1717 = vmul.f32 %v1709, %v1366
      %v1718 = vmul.f32 %v1709, %v1371
      %v1719 = vmul.f32 %v1709, %v1445
      %v1720 = vmul.f32 %v1709, %v1450
      %v1721 = vmul.f32 %v1709, %v1524
      %v1722 = vmul.f32 %v1709, %v1529
      %v1723 = vmul.f32 %v1709, %v1603
      %v1724 = vmul.f32 %v1709, %v1608
      %v1725 = vmul.f32 %v1709, %v1682
      %v1726 = vmul.f32 %v1709, %v1687
      %v1727 = vsel %vm1691, %v1129, %v1711
      %v1728 = vsel %vm1692, %v1134, %v1712
      %v1729 = vsel %vm1693, %v1208, %v1713
      %v1730 = vsel %vm1694, %v1213, %v1714
      %v1731 = vsel %vm1695, %v1287, %v1715
      %v1732 = vsel %vm1696, %v1292, %v1716
      %v1733 = vsel %vm1697, %v1366, %v1717
      %v1734 = vsel %vm1698, %v1371, %v1718
      %v1735 = vsel %vm1699, %v1445, %v1719
      %v1736 = vsel %vm1700, %v1450, %v1720
      %v1737 = vsel %vm1701, %v1524, %v1721
      %v1738 = vsel %vm1702, %v1529, %v1722
      %v1739 = vsel %vm1703, %v1603, %v1723
      %v1740 = vsel %vm1704, %v1608, %v1724
      %v1741 = vsel %vm1705, %v1682, %v1725
      %v1742 = vsel %vm1706, %v1687, %v1726
      %v1743 = vld [vmem:[%s1] sm:$0xff]
      %v1744 = vld [vmem:[%s1 + $0x8] sm:$0xff]
      %v1745 = vld [vmem:[%s1 + $0x10] sm:$0xff]
      %v1746 = vld [vmem:[%s1 + $0x18] sm:$0xff]
      %v1747 = vld [vmem:[%s1 + $0x20] sm:$0x1]
      %v1748 = vlaneseq
      %v1749 = vshrl.u32 %v1748, 7
      %v1750 = vsub.s32 0, %v1749
      %v1751 = vrot.slane %v1747, %v1750
      %1756 = vrot.lane.b32.xlu0 %v1743, 64
      %v1757 = vpop.permute.xlu0 %1756
      %1758 = vrot.lane.b32.xlu0 %v1744, 64
      %v1759 = vpop.permute.xlu0 %1758
      %1760 = vrot.lane.b32.xlu0 %v1745, 64
      %v1761 = vpop.permute.xlu0 %1760
      %1762 = vrot.lane.b32.xlu0 %v1746, 64
      %v1763 = vpop.permute.xlu0 %1762
      %1769 = vrot.lane.b32.xlu0 %v1751, 64
      %v1770 = vpop.permute.xlu0 %1769
      %v1773 = vsel %vm225, %v1727, 0
      %v1776 = vsel %vm225, %v1728, 0
      %v1779 = vsel %vm225, %v1729, 0
      %v1782 = vsel %vm225, %v1730, 0
      %v1785 = vsel %vm225, %v1731, 0
      %v1788 = vsel %vm225, %v1732, 0
      %v1791 = vsel %vm225, %v1733, 0
      %v1794 = vsel %vm225, %v1734, 0
      %v1797 = vsel %vm225, %v1735, 0
      %v1800 = vsel %vm225, %v1736, 0
      %v1803 = vsel %vm225, %v1737, 0
      %v1806 = vsel %vm225, %v1738, 0
      %v1809 = vsel %vm225, %v1739, 0
      %v1812 = vsel %vm225, %v1740, 0
      %v1815 = vsel %vm225, %v1741, 0
      %v1818 = vsel %vm225, %v1742, 0
      %1820 = vmatprep.subr.mxu0 0.0
      %1821 = vmatpush1.msra.mxu0 %v1757
      %1822 = vmatprep.subr.mxu0 0.0
      %1823 = vmatpush1.msra.mxu0 %v1759
      %1824 = vmatprep.subr.mxu0 0.0
      %1825 = vmatpush1.msra.mxu0 %v1761
      %1826 = vmatprep.subr.mxu0 0.0
      %1827 = vmatpush1.msra.mxu0 %v1763
      %1828 = vmatprep.subr.mxu0 0.0
      %1829 = vmatpush1.msra.mxu0 0.0
      %1830 = vmatprep.subr.mxu0 0.0
      %1831 = vmatpush1.msra.mxu0 0.0
      %1832 = vmatprep.subr.mxu0 0.0
      %1833 = vmatpush1.msra.mxu0 0.0
      %1834 = vmatprep.subr.mxu0 0.0
      %1835 = vmatpush1.msra.mxu0 0.0
      %1836 = vmatprep.subr.mxu0 0.0
      %1837 = vmatpush1.msra.mxu0 0.0
      %1838 = vmatprep.subr.mxu0 0.0
      %1839 = vmatpush1.msra.mxu0 0.0
      %1840 = vmatprep.subr.mxu0 0.0
      %1841 = vmatpush1.msra.mxu0 0.0
      %1842 = vmatprep.subr.mxu0 0.0
      %1843 = vmatpush1.msra.mxu0 0.0
      %1844 = vmatprep.subr.mxu0 0.0
      %1845 = vmatpush1.msra.mxu0 0.0
      %1846 = vmatprep.subr.mxu0 0.0
      %1847 = vmatpush1.msra.mxu0 0.0
      %1848 = vmatprep.subr.mxu0 0.0
      %1849 = vmatpush1.msra.mxu0 0.0
      %1850 = vmatprep.subr.mxu0 0.0
      %1851 = vmatpush1.msra.mxu0 0.0
      %1852 = vmatprep.subr.mxu0 0.0
      %1853 = vmatpush1.msra.mxu0 0.0
      %1854 = vmatprep.subr.mxu0 0.0
      %1855 = vmatpush1.msra.mxu0 0.0
      %1856 = vmatprep.subr.mxu0 0.0
      %1857 = vmatpush1.msra.mxu0 0.0
      %1858 = vmatprep.subr.mxu0 0.0
      %1859 = vmatpush1.msra.mxu0 0.0
      %1860 = vmatprep.subr.mxu0 0.0
      %1861 = vmatpush1.msra.mxu0 0.0
      %1862 = vmatprep.subr.mxu0 0.0
      %1863 = vmatpush1.msra.mxu0 0.0
      %1864 = vmatprep.subr.mxu0 0.0
      %1865 = vmatpush1.msra.mxu0 0.0
      %1866 = vmatprep.subr.mxu0 0.0
      %1867 = vmatpush1.msra.mxu0 0.0
      %1868 = vmatprep.subr.mxu0 0.0
      %1869 = vmatpush1.msra.mxu0 0.0
      %1870 = vmatprep.subr.mxu0 0.0
      %1871 = vmatpush1.msra.mxu0 0.0
      %1872 = vmatprep.subr.mxu0 0.0
      %1873 = vmatpush1.msra.mxu0 0.0
      %1874 = vmatprep.subr.mxu0 0.0
      %1875 = vmatpush1.msra.mxu0 0.0
      %1876 = vmatprep.subr.mxu0 0.0
      %1877 = vmatpush1.msra.mxu0 0.0
      %1878 = vmatprep.subr.mxu0 0.0
      %1879 = vmatpush1.msra.mxu0 0.0
      %1880 = vmatprep.subr.mxu0 0.0
      %1881 = vmatpush1.msra.mxu0 0.0
      %1882 = vmatprep.subr.mxu0 0.0
      %1883 = vmatpush1.msra.mxu0 0.0
      %1884 = vmatprep.mubr.f32.mxu0 0.0
      %1885 = vmatmul.mubr.f32.gmra.mrb[0].mxu0 %v1773
      %v1886 = vpop.f32.mrb[0].mxu0
      %v1887 = vadd.f32 %v1770, %v1886
      %v1888 = vpop.f32.mrb[0].mxu0
      %1889 = vmatprep.mubr.f32.mxu0 0.0
      %1890 = vmatmul.mubr.f32.gmra.mrb[0].mxu0 %v1776
      %v1891 = vpop.f32.mrb[0].mxu0
      %v1892 = vadd.f32 %v1770, %v1891
      %v1893 = vpop.f32.mrb[0].mxu0
      %1894 = vmatprep.mubr.f32.mxu0 0.0
      %1895 = vmatmul.mubr.f32.gmra.mrb[0].mxu0 %v1779
      %v1896 = vpop.f32.mrb[0].mxu0
      %v1897 = vadd.f32 %v1770, %v1896
      %v1898 = vpop.f32.mrb[0].mxu0
      %1899 = vmatprep.mubr.f32.mxu0 0.0
      %1900 = vmatmul.mubr.f32.gmra.mrb[0].mxu0 %v1782
      %v1901 = vpop.f32.mrb[0].mxu0
      %v1902 = vadd.f32 %v1770, %v1901
      %v1903 = vpop.f32.mrb[0].mxu0
      %1904 = vmatprep.mubr.f32.mxu0 0.0
      %1905 = vmatmul.mubr.f32.gmra.mrb[0].mxu0 %v1785
      %v1906 = vpop.f32.mrb[0].mxu0
      %v1907 = vadd.f32 %v1770, %v1906
      %v1908 = vpop.f32.mrb[0].mxu0
      %1909 = vmatprep.mubr.f32.mxu0 0.0
      %1910 = vmatmul.mubr.f32.gmra.mrb[0].mxu0 %v1788
      %v1911 = vpop.f32.mrb[0].mxu0
      %v1912 = vadd.f32 %v1770, %v1911
      %v1913 = vpop.f32.mrb[0].mxu0
      %1914 = vmatprep.mubr.f32.mxu0 0.0
      %1915 = vmatmul.mubr.f32.gmra.mrb[0].mxu0 %v1791
      %v1916 = vpop.f32.mrb[0].mxu0
      %v1917 = vadd.f32 %v1770, %v1916
      %v1918 = vpop.f32.mrb[0].mxu0
      %1919 = vmatprep.mubr.f32.mxu0 0.0
      %1920 = vmatmul.mubr.f32.gmra.mrb[0].mxu0 %v1794
      %v1921 = vpop.f32.mrb[0].mxu0
      %v1922 = vadd.f32 %v1770, %v1921
      %v1923 = vpop.f32.mrb[0].mxu0
      %1924 = vmatprep.mubr.f32.mxu0 0.0
      %1925 = vmatmul.mubr.f32.gmra.mrb[0].mxu0 %v1797
      %v1926 = vpop.f32.mrb[0].mxu0
      %v1927 = vadd.f32 %v1770, %v1926
      %v1928 = vpop.f32.mrb[0].mxu0
      %1929 = vmatprep.mubr.f32.mxu0 0.0
      %1930 = vmatmul.mubr.f32.gmra.mrb[0].mxu0 %v1800
      %v1931 = vpop.f32.mrb[0].mxu0
      %v1932 = vadd.f32 %v1770, %v1931
      %v1933 = vpop.f32.mrb[0].mxu0
      %1934 = vmatprep.mubr.f32.mxu0 0.0
      %1935 = vmatmul.mubr.f32.gmra.mrb[0].mxu0 %v1803
      %v1936 = vpop.f32.mrb[0].mxu0
      %v1937 = vadd.f32 %v1770, %v1936
      %v1938 = vpop.f32.mrb[0].mxu0
      %1939 = vmatprep.mubr.f32.mxu0 0.0
      %1940 = vmatmul.mubr.f32.gmra.mrb[0].mxu0 %v1806
      %v1941 = vpop.f32.mrb[0].mxu0
      %v1942 = vadd.f32 %v1770, %v1941
      %v1943 = vpop.f32.mrb[0].mxu0
      %1944 = vmatprep.mubr.f32.mxu0 0.0
      %1945 = vmatmul.mubr.f32.gmra.mrb[0].mxu0 %v1809
      %v1946 = vpop.f32.mrb[0].mxu0
      %v1947 = vadd.f32 %v1770, %v1946
      %v1948 = vpop.f32.mrb[0].mxu0
      %1949 = vmatprep.mubr.f32.mxu0 0.0
      %1950 = vmatmul.mubr.f32.gmra.mrb[0].mxu0 %v1812
      %v1951 = vpop.f32.mrb[0].mxu0
      %v1952 = vadd.f32 %v1770, %v1951
      %v1953 = vpop.f32.mrb[0].mxu0
      %1954 = vmatprep.mubr.f32.mxu0 0.0
      %1955 = vmatmul.mubr.f32.gmra.mrb[0].mxu0 %v1815
      %v1956 = vpop.f32.mrb[0].mxu0
      %v1957 = vadd.f32 %v1770, %v1956
      %v1958 = vpop.f32.mrb[0].mxu0
      %1959 = vmatprep.mubr.f32.mxu0 0.0
      %1960 = vmatmul.mubr.f32.gmra.mrb[0].mxu0 %v1818
      %v1961 = vpop.f32.mrb[0].mxu0
      %v1962 = vadd.f32 %v1770, %v1961
      %v1963 = vpop.f32.mrb[0].mxu0
      %1964 = vdwg.mxu0
      %1965 = vmatprep.subr.mxu0 0.0
      %1966 = vmatpush1.msra.mxu0 %v1887
      %1967 = vmatprep.subr.mxu0 0.0
      %1968 = vmatpush1.msra.mxu0 %v1892
      %1969 = vmatprep.subr.mxu0 0.0
      %1970 = vmatpush1.msra.mxu0 0.0
      %1971 = vmatprep.subr.mxu0 0.0
      %1972 = vmatpush1.msra.mxu0 0.0
      %1973 = vmatprep.subr.mxu0 0.0
      %1974 = vmatpush1.msra.mxu0 0.0
      %1975 = vmatprep.subr.mxu0 0.0
      %1976 = vmatpush1.msra.mxu0 0.0
      %1977 = vmatprep.subr.mxu0 0.0
      %1978 = vmatpush1.msra.mxu0 0.0
      %1979 = vmatprep.subr.mxu0 0.0
      %1980 = vmatpush1.msra.mxu0 0.0
      %1981 = vmatprep.subr.mxu0 0.0
      %1982 = vmatpush1.msra.mxu0 0.0
      %1983 = vmatprep.subr.mxu0 0.0
      %1984 = vmatpush1.msra.mxu0 0.0
      %1985 = vmatprep.subr.mxu0 0.0
      %1986 = vmatpush1.msra.mxu0 0.0
      %1987 = vmatprep.subr.mxu0 0.0
      %1988 = vmatpush1.msra.mxu0 0.0
      %1989 = vmatprep.subr.mxu0 0.0
      %1990 = vmatpush1.msra.mxu0 0.0
      %1991 = vmatprep.subr.mxu0 0.0
      %1992 = vmatpush1.msra.mxu0 0.0
      %1993 = vmatprep.subr.mxu0 0.0
      %1994 = vmatpush1.msra.mxu0 0.0
      %1995 = vmatprep.subr.mxu0 0.0
      %1996 = vmatpush1.msra.mxu0 0.0
      %1997 = vmatprep.subr.mxu0 0.0
      %1998 = vmatpush1.msra.mxu0 0.0
      %1999 = vmatprep.subr.mxu0 0.0
      %2000 = vmatpush1.msra.mxu0 0.0
      %2001 = vmatprep.subr.mxu0 0.0
      %2002 = vmatpush1.msra.mxu0 0.0
      %2003 = vmatprep.subr.mxu0 0.0
      %2004 = vmatpush1.msra.mxu0 0.0
      %2005 = vmatprep.subr.mxu0 0.0
      %2006 = vmatpush1.msra.mxu0 0.0
      %2007 = vmatprep.subr.mxu0 0.0
      %2008 = vmatpush1.msra.mxu0 0.0
      %2009 = vmatprep.subr.mxu0 0.0
      %2010 = vmatpush1.msra.mxu0 0.0
      %2011 = vmatprep.subr.mxu0 0.0
      %2012 = vmatpush1.msra.mxu0 0.0
      %2013 = vmatprep.subr.mxu0 0.0
      %2014 = vmatpush1.msra.mxu0 0.0
      %2015 = vmatprep.subr.mxu0 0.0
      %2016 = vmatpush1.msra.mxu0 0.0
      %2017 = vmatprep.subr.mxu0 0.0
      %2018 = vmatpush1.msra.mxu0 0.0
      %2019 = vmatprep.subr.mxu0 0.0
      %2020 = vmatpush1.msra.mxu0 0.0
      %2021 = vmatprep.subr.mxu0 0.0
      %2022 = vmatpush1.msra.mxu0 0.0
      %2023 = vmatprep.subr.mxu0 0.0
      %2024 = vmatpush1.msra.mxu0 0.0
      %2025 = vmatprep.subr.mxu0 0.0
      %2026 = vmatpush1.msra.mxu0 0.0
      %2027 = vmatprep.subr.mxu0 0.0
      %2028 = vmatpush1.msra.mxu0 0.0
      %2029 = vmatprep.mubr.f32.mxu0 0.0
      %2030 = vmatmul.mubr.f32.gmra.mrb[0].mxu0 %v1058
      %v2031 = vpop.f32.mrb[0].mxu0
      %v2032 = vadd.f32 0.0, %v2031
      %v2033 = vpop.f32.mrb[0].mxu0
      %2034 = vmatprep.mubr.f32.mxu0 0.0
      %2035 = vmatmul.mubr.f32.gmra.mrb[0].mxu0 %v1060
      %v2036 = vpop.f32.mrb[0].mxu0
      %v2037 = vadd.f32 0.0, %v2036
      %v2038 = vpop.f32.mrb[0].mxu0
      %2039 = vdwg.mxu0
      %2040 = vmatprep.subr.mxu0 0.0
      %2041 = vmatpush1.msra.mxu0 %v1897
      %2042 = vmatprep.subr.mxu0 0.0
      %2043 = vmatpush1.msra.mxu0 %v1902
      %2044 = vmatprep.subr.mxu0 0.0
      %2045 = vmatpush1.msra.mxu0 0.0
      %2046 = vmatprep.subr.mxu0 0.0
      %2047 = vmatpush1.msra.mxu0 0.0
      %2048 = vmatprep.subr.mxu0 0.0
      %2049 = vmatpush1.msra.mxu0 0.0
      %2050 = vmatprep.subr.mxu0 0.0
      %2051 = vmatpush1.msra.mxu0 0.0
      %2052 = vmatprep.subr.mxu0 0.0
      %2053 = vmatpush1.msra.mxu0 0.0
      %2054 = vmatprep.subr.mxu0 0.0
      %2055 = vmatpush1.msra.mxu0 0.0
      %2056 = vmatprep.subr.mxu0 0.0
      %2057 = vmatpush1.msra.mxu0 0.0
      %2058 = vmatprep.subr.mxu0 0.0
      %2059 = vmatpush1.msra.mxu0 0.0
      %2060 = vmatprep.subr.mxu0 0.0
      %2061 = vmatpush1.msra.mxu0 0.0
      %2062 = vmatprep.subr.mxu0 0.0
      %2063 = vmatpush1.msra.mxu0 0.0
      %2064 = vmatprep.subr.mxu0 0.0
      %2065 = vmatpush1.msra.mxu0 0.0
      %2066 = vmatprep.subr.mxu0 0.0
      %2067 = vmatpush1.msra.mxu0 0.0
      %2068 = vmatprep.subr.mxu0 0.0
      %2069 = vmatpush1.msra.mxu0 0.0
      %2070 = vmatprep.subr.mxu0 0.0
      %2071 = vmatpush1.msra.mxu0 0.0
      %2072 = vmatprep.subr.mxu0 0.0
      %2073 = vmatpush1.msra.mxu0 0.0
      %2074 = vmatprep.subr.mxu0 0.0
      %2075 = vmatpush1.msra.mxu0 0.0
      %2076 = vmatprep.subr.mxu0 0.0
      %2077 = vmatpush1.msra.mxu0 0.0
      %2078 = vmatprep.subr.mxu0 0.0
      %2079 = vmatpush1.msra.mxu0 0.0
      %2080 = vmatprep.subr.mxu0 0.0
      %2081 = vmatpush1.msra.mxu0 0.0
      %2082 = vmatprep.subr.mxu0 0.0
      %2083 = vmatpush1.msra.mxu0 0.0
      %2084 = vmatprep.subr.mxu0 0.0
      %2085 = vmatpush1.msra.mxu0 0.0
      %2086 = vmatprep.subr.mxu0 0.0
      %2087 = vmatpush1.msra.mxu0 0.0
      %2088 = vmatprep.subr.mxu0 0.0
      %2089 = vmatpush1.msra.mxu0 0.0
      %2090 = vmatprep.subr.mxu0 0.0
      %2091 = vmatpush1.msra.mxu0 0.0
      %2092 = vmatprep.subr.mxu0 0.0
      %2093 = vmatpush1.msra.mxu0 0.0
      %2094 = vmatprep.subr.mxu0 0.0
      %2095 = vmatpush1.msra.mxu0 0.0
      %2096 = vmatprep.subr.mxu0 0.0
      %2097 = vmatpush1.msra.mxu0 0.0
      %2098 = vmatprep.subr.mxu0 0.0
      %2099 = vmatpush1.msra.mxu0 0.0
      %2100 = vmatprep.subr.mxu0 0.0
      %2101 = vmatpush1.msra.mxu0 0.0
      %2102 = vmatprep.subr.mxu0 0.0
      %2103 = vmatpush1.msra.mxu0 0.0
      %2104 = vmatprep.mubr.f32.mxu0 0.0
      %2105 = vmatmul.mubr.f32.gmra.mrb[0].mxu0 %v1137
      %v2106 = vpop.f32.mrb[0].mxu0
      %v2107 = vadd.f32 0.0, %v2106
      %v2108 = vpop.f32.mrb[0].mxu0
      %2109 = vmatprep.mubr.f32.mxu0 0.0
      %2110 = vmatmul.mubr.f32.gmra.mrb[0].mxu0 %v1139
      %v2111 = vpop.f32.mrb[0].mxu0
      %v2112 = vadd.f32 0.0, %v2111
      %v2113 = vpop.f32.mrb[0].mxu0
      %2114 = vdwg.mxu0
      %2115 = vmatprep.subr.mxu0 0.0
      %2116 = vmatpush1.msra.mxu0 %v1907
      %2117 = vmatprep.subr.mxu0 0.0
      %2118 = vmatpush1.msra.mxu0 %v1912
      %2119 = vmatprep.subr.mxu0 0.0
      %2120 = vmatpush1.msra.mxu0 0.0
      %2121 = vmatprep.subr.mxu0 0.0
      %2122 = vmatpush1.msra.mxu0 0.0
      %2123 = vmatprep.subr.mxu0 0.0
      %2124 = vmatpush1.msra.mxu0 0.0
      %2125 = vmatprep.subr.mxu0 0.0
      %2126 = vmatpush1.msra.mxu0 0.0
      %2127 = vmatprep.subr.mxu0 0.0
      %2128 = vmatpush1.msra.mxu0 0.0
      %2129 = vmatprep.subr.mxu0 0.0
      %2130 = vmatpush1.msra.mxu0 0.0
      %2131 = vmatprep.subr.mxu0 0.0
      %2132 = vmatpush1.msra.mxu0 0.0
      %2133 = vmatprep.subr.mxu0 0.0
      %2134 = vmatpush1.msra.mxu0 0.0
      %2135 = vmatprep.subr.mxu0 0.0
      %2136 = vmatpush1.msra.mxu0 0.0
      %2137 = vmatprep.subr.mxu0 0.0
      %2138 = vmatpush1.msra.mxu0 0.0
      %2139 = vmatprep.subr.mxu0 0.0
      %2140 = vmatpush1.msra.mxu0 0.0
      %2141 = vmatprep.subr.mxu0 0.0
      %2142 = vmatpush1.msra.mxu0 0.0
      %2143 = vmatprep.subr.mxu0 0.0
      %2144 = vmatpush1.msra.mxu0 0.0
      %2145 = vmatprep.subr.mxu0 0.0
      %2146 = vmatpush1.msra.mxu0 0.0
      %2147 = vmatprep.subr.mxu0 0.0
      %2148 = vmatpush1.msra.mxu0 0.0
      %2149 = vmatprep.subr.mxu0 0.0
      %2150 = vmatpush1.msra.mxu0 0.0
      %2151 = vmatprep.subr.mxu0 0.0
      %2152 = vmatpush1.msra.mxu0 0.0
      %2153 = vmatprep.subr.mxu0 0.0
      %2154 = vmatpush1.msra.mxu0 0.0
      %2155 = vmatprep.subr.mxu0 0.0
      %2156 = vmatpush1.msra.mxu0 0.0
      %2157 = vmatprep.subr.mxu0 0.0
      %2158 = vmatpush1.msra.mxu0 0.0
      %2159 = vmatprep.subr.mxu0 0.0
      %2160 = vmatpush1.msra.mxu0 0.0
      %2161 = vmatprep.subr.mxu0 0.0
      %2162 = vmatpush1.msra.mxu0 0.0
      %2163 = vmatprep.subr.mxu0 0.0
      %2164 = vmatpush1.msra.mxu0 0.0
      %2165 = vmatprep.subr.mxu0 0.0
      %2166 = vmatpush1.msra.mxu0 0.0
      %2167 = vmatprep.subr.mxu0 0.0
      %2168 = vmatpush1.msra.mxu0 0.0
      %2169 = vmatprep.subr.mxu0 0.0
      %2170 = vmatpush1.msra.mxu0 0.0
      %2171 = vmatprep.subr.mxu0 0.0
      %2172 = vmatpush1.msra.mxu0 0.0
      %2173 = vmatprep.subr.mxu0 0.0
      %2174 = vmatpush1.msra.mxu0 0.0
      %2175 = vmatprep.subr.mxu0 0.0
      %2176 = vmatpush1.msra.mxu0 0.0
      %2177 = vmatprep.subr.mxu0 0.0
      %2178 = vmatpush1.msra.mxu0 0.0
      %2179 = vmatprep.mubr.f32.mxu0 0.0
      %2180 = vmatmul.mubr.f32.gmra.mrb[0].mxu0 %v1216
      %v2181 = vpop.f32.mrb[0].mxu0
      %v2182 = vadd.f32 0.0, %v2181
      %v2183 = vpop.f32.mrb[0].mxu0
      %2184 = vmatprep.mubr.f32.mxu0 0.0
      %2185 = vmatmul.mubr.f32.gmra.mrb[0].mxu0 %v1218
      %v2186 = vpop.f32.mrb[0].mxu0
      %v2187 = vadd.f32 0.0, %v2186
      %v2188 = vpop.f32.mrb[0].mxu0
      %2189 = vdwg.mxu0
      %2190 = vmatprep.subr.mxu0 0.0
      %2191 = vmatpush1.msra.mxu0 %v1917
      %2192 = vmatprep.subr.mxu0 0.0
      %2193 = vmatpush1.msra.mxu0 %v1922
      %2194 = vmatprep.subr.mxu0 0.0
      %2195 = vmatpush1.msra.mxu0 0.0
      %2196 = vmatprep.subr.mxu0 0.0
      %2197 = vmatpush1.msra.mxu0 0.0
      %2198 = vmatprep.subr.mxu0 0.0
      %2199 = vmatpush1.msra.mxu0 0.0
      %2200 = vmatprep.subr.mxu0 0.0
      %2201 = vmatpush1.msra.mxu0 0.0
      %2202 = vmatprep.subr.mxu0 0.0
      %2203 = vmatpush1.msra.mxu0 0.0
      %2204 = vmatprep.subr.mxu0 0.0
      %2205 = vmatpush1.msra.mxu0 0.0
      %2206 = vmatprep.subr.mxu0 0.0
      %2207 = vmatpush1.msra.mxu0 0.0
      %2208 = vmatprep.subr.mxu0 0.0
      %2209 = vmatpush1.msra.mxu0 0.0
      %2210 = vmatprep.subr.mxu0 0.0
      %2211 = vmatpush1.msra.mxu0 0.0
      %2212 = vmatprep.subr.mxu0 0.0
      %2213 = vmatpush1.msra.mxu0 0.0
      %2214 = vmatprep.subr.mxu0 0.0
      %2215 = vmatpush1.msra.mxu0 0.0
      %2216 = vmatprep.subr.mxu0 0.0
      %2217 = vmatpush1.msra.mxu0 0.0
      %2218 = vmatprep.subr.mxu0 0.0
      %2219 = vmatpush1.msra.mxu0 0.0
      %2220 = vmatprep.subr.mxu0 0.0
      %2221 = vmatpush1.msra.mxu0 0.0
      %2222 = vmatprep.subr.mxu0 0.0
      %2223 = vmatpush1.msra.mxu0 0.0
      %2224 = vmatprep.subr.mxu0 0.0
      %2225 = vmatpush1.msra.mxu0 0.0
      %2226 = vmatprep.subr.mxu0 0.0
      %2227 = vmatpush1.msra.mxu0 0.0
      %2228 = vmatprep.subr.mxu0 0.0
      %2229 = vmatpush1.msra.mxu0 0.0
      %2230 = vmatprep.subr.mxu0 0.0
      %2231 = vmatpush1.msra.mxu0 0.0
      %2232 = vmatprep.subr.mxu0 0.0
      %2233 = vmatpush1.msra.mxu0 0.0
      %2234 = vmatprep.subr.mxu0 0.0
      %2235 = vmatpush1.msra.mxu0 0.0
      %2236 = vmatprep.subr.mxu0 0.0
      %2237 = vmatpush1.msra.mxu0 0.0
      %2238 = vmatprep.subr.mxu0 0.0
      %2239 = vmatpush1.msra.mxu0 0.0
      %2240 = vmatprep.subr.mxu0 0.0
      %2241 = vmatpush1.msra.mxu0 0.0
      %2242 = vmatprep.subr.mxu0 0.0
      %2243 = vmatpush1.msra.mxu0 0.0
      %2244 = vmatprep.subr.mxu0 0.0
      %2245 = vmatpush1.msra.mxu0 0.0
      %2246 = vmatprep.subr.mxu0 0.0
      %2247 = vmatpush1.msra.mxu0 0.0
      %2248 = vmatprep.subr.mxu0 0.0
      %2249 = vmatpush1.msra.mxu0 0.0
      %2250 = vmatprep.subr.mxu0 0.0
      %2251 = vmatpush1.msra.mxu0 0.0
      %2252 = vmatprep.subr.mxu0 0.0
      %2253 = vmatpush1.msra.mxu0 0.0
      %2254 = vmatprep.mubr.f32.mxu0 0.0
      %2255 = vmatmul.mubr.f32.gmra.mrb[0].mxu0 %v1295
      %v2256 = vpop.f32.mrb[0].mxu0
      %v2257 = vadd.f32 0.0, %v2256
      %v2258 = vpop.f32.mrb[0].mxu0
      %2259 = vmatprep.mubr.f32.mxu0 0.0
      %2260 = vmatmul.mubr.f32.gmra.mrb[0].mxu0 %v1297
      %v2261 = vpop.f32.mrb[0].mxu0
      %v2262 = vadd.f32 0.0, %v2261
      %v2263 = vpop.f32.mrb[0].mxu0
      %2264 = vdwg.mxu0
      %2265 = vmatprep.subr.mxu0 0.0
      %2266 = vmatpush1.msra.mxu0 %v1927
      %2267 = vmatprep.subr.mxu0 0.0
      %2268 = vmatpush1.msra.mxu0 %v1932
      %2269 = vmatprep.subr.mxu0 0.0
      %2270 = vmatpush1.msra.mxu0 0.0
      %2271 = vmatprep.subr.mxu0 0.0
      %2272 = vmatpush1.msra.mxu0 0.0
      %2273 = vmatprep.subr.mxu0 0.0
      %2274 = vmatpush1.msra.mxu0 0.0
      %2275 = vmatprep.subr.mxu0 0.0
      %2276 = vmatpush1.msra.mxu0 0.0
      %2277 = vmatprep.subr.mxu0 0.0
      %2278 = vmatpush1.msra.mxu0 0.0
      %2279 = vmatprep.subr.mxu0 0.0
      %2280 = vmatpush1.msra.mxu0 0.0
      %2281 = vmatprep.subr.mxu0 0.0
      %2282 = vmatpush1.msra.mxu0 0.0
      %2283 = vmatprep.subr.mxu0 0.0
      %2284 = vmatpush1.msra.mxu0 0.0
      %2285 = vmatprep.subr.mxu0 0.0
      %2286 = vmatpush1.msra.mxu0 0.0
      %2287 = vmatprep.subr.mxu0 0.0
      %2288 = vmatpush1.msra.mxu0 0.0
      %2289 = vmatprep.subr.mxu0 0.0
      %2290 = vmatpush1.msra.mxu0 0.0
      %2291 = vmatprep.subr.mxu0 0.0
      %2292 = vmatpush1.msra.mxu0 0.0
      %2293 = vmatprep.subr.mxu0 0.0
      %2294 = vmatpush1.msra.mxu0 0.0
      %2295 = vmatprep.subr.mxu0 0.0
      %2296 = vmatpush1.msra.mxu0 0.0
      %2297 = vmatprep.subr.mxu0 0.0
      %2298 = vmatpush1.msra.mxu0 0.0
      %2299 = vmatprep.subr.mxu0 0.0
      %2300 = vmatpush1.msra.mxu0 0.0
      %2301 = vmatprep.subr.mxu0 0.0
      %2302 = vmatpush1.msra.mxu0 0.0
      %2303 = vmatprep.subr.mxu0 0.0
      %2304 = vmatpush1.msra.mxu0 0.0
      %2305 = vmatprep.subr.mxu0 0.0
      %2306 = vmatpush1.msra.mxu0 0.0
      %2307 = vmatprep.subr.mxu0 0.0
      %2308 = vmatpush1.msra.mxu0 0.0
      %2309 = vmatprep.subr.mxu0 0.0
      %2310 = vmatpush1.msra.mxu0 0.0
      %2311 = vmatprep.subr.mxu0 0.0
      %2312 = vmatpush1.msra.mxu0 0.0
      %2313 = vmatprep.subr.mxu0 0.0
      %2314 = vmatpush1.msra.mxu0 0.0
      %2315 = vmatprep.subr.mxu0 0.0
      %2316 = vmatpush1.msra.mxu0 0.0
      %2317 = vmatprep.subr.mxu0 0.0
      %2318 = vmatpush1.msra.mxu0 0.0
      %2319 = vmatprep.subr.mxu0 0.0
      %2320 = vmatpush1.msra.mxu0 0.0
      %2321 = vmatprep.subr.mxu0 0.0
      %2322 = vmatpush1.msra.mxu0 0.0
      %2323 = vmatprep.subr.mxu0 0.0
      %2324 = vmatpush1.msra.mxu0 0.0
      %2325 = vmatprep.subr.mxu0 0.0
      %2326 = vmatpush1.msra.mxu0 0.0
      %2327 = vmatprep.subr.mxu0 0.0
      %2328 = vmatpush1.msra.mxu0 0.0
      %2329 = vmatprep.mubr.f32.mxu0 0.0
      %2330 = vmatmul.mubr.f32.gmra.mrb[0].mxu0 %v1374
      %v2331 = vpop.f32.mrb[0].mxu0
      %v2332 = vadd.f32 0.0, %v2331
      %v2333 = vpop.f32.mrb[0].mxu0
      %2334 = vmatprep.mubr.f32.mxu0 0.0
      %2335 = vmatmul.mubr.f32.gmra.mrb[0].mxu0 %v1376
      %v2336 = vpop.f32.mrb[0].mxu0
      %v2337 = vadd.f32 0.0, %v2336
      %v2338 = vpop.f32.mrb[0].mxu0
      %2339 = vdwg.mxu0
      %2340 = vmatprep.subr.mxu0 0.0
      %2341 = vmatpush1.msra.mxu0 %v1937
      %2342 = vmatprep.subr.mxu0 0.0
      %2343 = vmatpush1.msra.mxu0 %v1942
      %2344 = vmatprep.subr.mxu0 0.0
      %2345 = vmatpush1.msra.mxu0 0.0
      %2346 = vmatprep.subr.mxu0 0.0
      %2347 = vmatpush1.msra.mxu0 0.0
      %2348 = vmatprep.subr.mxu0 0.0
      %2349 = vmatpush1.msra.mxu0 0.0
      %2350 = vmatprep.subr.mxu0 0.0
      %2351 = vmatpush1.msra.mxu0 0.0
      %2352 = vmatprep.subr.mxu0 0.0
      %2353 = vmatpush1.msra.mxu0 0.0
      %2354 = vmatprep.subr.mxu0 0.0
      %2355 = vmatpush1.msra.mxu0 0.0
      %2356 = vmatprep.subr.mxu0 0.0
      %2357 = vmatpush1.msra.mxu0 0.0
      %2358 = vmatprep.subr.mxu0 0.0
      %2359 = vmatpush1.msra.mxu0 0.0
      %2360 = vmatprep.subr.mxu0 0.0
      %2361 = vmatpush1.msra.mxu0 0.0
      %2362 = vmatprep.subr.mxu0 0.0
      %2363 = vmatpush1.msra.mxu0 0.0
      %2364 = vmatprep.subr.mxu0 0.0
      %2365 = vmatpush1.msra.mxu0 0.0
      %2366 = vmatprep.subr.mxu0 0.0
      %2367 = vmatpush1.msra.mxu0 0.0
      %2368 = vmatprep.subr.mxu0 0.0
      %2369 = vmatpush1.msra.mxu0 0.0
      %2370 = vmatprep.subr.mxu0 0.0
      %2371 = vmatpush1.msra.mxu0 0.0
      %2372 = vmatprep.subr.mxu0 0.0
      %2373 = vmatpush1.msra.mxu0 0.0
      %2374 = vmatprep.subr.mxu0 0.0
      %2375 = vmatpush1.msra.mxu0 0.0
      %2376 = vmatprep.subr.mxu0 0.0
      %2377 = vmatpush1.msra.mxu0 0.0
      %2378 = vmatprep.subr.mxu0 0.0
      %2379 = vmatpush1.msra.mxu0 0.0
      %2380 = vmatprep.subr.mxu0 0.0
      %2381 = vmatpush1.msra.mxu0 0.0
      %2382 = vmatprep.subr.mxu0 0.0
      %2383 = vmatpush1.msra.mxu0 0.0
      %2384 = vmatprep.subr.mxu0 0.0
      %2385 = vmatpush1.msra.mxu0 0.0
      %2386 = vmatprep.subr.mxu0 0.0
      %2387 = vmatpush1.msra.mxu0 0.0
      %2388 = vmatprep.subr.mxu0 0.0
      %2389 = vmatpush1.msra.mxu0 0.0
      %2390 = vmatprep.subr.mxu0 0.0
      %2391 = vmatpush1.msra.mxu0 0.0
      %2392 = vmatprep.subr.mxu0 0.0
      %2393 = vmatpush1.msra.mxu0 0.0
      %2394 = vmatprep.subr.mxu0 0.0
      %2395 = vmatpush1.msra.mxu0 0.0
      %2396 = vmatprep.subr.mxu0 0.0
      %2397 = vmatpush1.msra.mxu0 0.0
      %2398 = vmatprep.subr.mxu0 0.0
      %2399 = vmatpush1.msra.mxu0 0.0
      %2400 = vmatprep.subr.mxu0 0.0
      %2401 = vmatpush1.msra.mxu0 0.0
      %2402 = vmatprep.subr.mxu0 0.0
      %2403 = vmatpush1.msra.mxu0 0.0
      %2404 = vmatprep.mubr.f32.mxu0 0.0
      %2405 = vmatmul.mubr.f32.gmra.mrb[0].mxu0 %v1453
      %v2406 = vpop.f32.mrb[0].mxu0
      %v2407 = vadd.f32 0.0, %v2406
      %v2408 = vpop.f32.mrb[0].mxu0
      %2409 = vmatprep.mubr.f32.mxu0 0.0
      %2410 = vmatmul.mubr.f32.gmra.mrb[0].mxu0 %v1455
      %v2411 = vpop.f32.mrb[0].mxu0
      %v2412 = vadd.f32 0.0, %v2411
      %v2413 = vpop.f32.mrb[0].mxu0
      %2414 = vdwg.mxu0
      %2415 = vmatprep.subr.mxu0 0.0
      %2416 = vmatpush1.msra.mxu0 %v1947
      %2417 = vmatprep.subr.mxu0 0.0
      %2418 = vmatpush1.msra.mxu0 %v1952
      %2419 = vmatprep.subr.mxu0 0.0
      %2420 = vmatpush1.msra.mxu0 0.0
      %2421 = vmatprep.subr.mxu0 0.0
      %2422 = vmatpush1.msra.mxu0 0.0
      %2423 = vmatprep.subr.mxu0 0.0
      %2424 = vmatpush1.msra.mxu0 0.0
      %2425 = vmatprep.subr.mxu0 0.0
      %2426 = vmatpush1.msra.mxu0 0.0
      %2427 = vmatprep.subr.mxu0 0.0
      %2428 = vmatpush1.msra.mxu0 0.0
      %2429 = vmatprep.subr.mxu0 0.0
      %2430 = vmatpush1.msra.mxu0 0.0
      %2431 = vmatprep.subr.mxu0 0.0
      %2432 = vmatpush1.msra.mxu0 0.0
      %2433 = vmatprep.subr.mxu0 0.0
      %2434 = vmatpush1.msra.mxu0 0.0
      %2435 = vmatprep.subr.mxu0 0.0
      %2436 = vmatpush1.msra.mxu0 0.0
      %2437 = vmatprep.subr.mxu0 0.0
      %2438 = vmatpush1.msra.mxu0 0.0
      %2439 = vmatprep.subr.mxu0 0.0
      %2440 = vmatpush1.msra.mxu0 0.0
      %2441 = vmatprep.subr.mxu0 0.0
      %2442 = vmatpush1.msra.mxu0 0.0
      %2443 = vmatprep.subr.mxu0 0.0
      %2444 = vmatpush1.msra.mxu0 0.0
      %2445 = vmatprep.subr.mxu0 0.0
      %2446 = vmatpush1.msra.mxu0 0.0
      %2447 = vmatprep.subr.mxu0 0.0
      %2448 = vmatpush1.msra.mxu0 0.0
      %2449 = vmatprep.subr.mxu0 0.0
      %2450 = vmatpush1.msra.mxu0 0.0
      %2451 = vmatprep.subr.mxu0 0.0
      %2452 = vmatpush1.msra.mxu0 0.0
      %2453 = vmatprep.subr.mxu0 0.0
      %2454 = vmatpush1.msra.mxu0 0.0
      %2455 = vmatprep.subr.mxu0 0.0
      %2456 = vmatpush1.msra.mxu0 0.0
      %2457 = vmatprep.subr.mxu0 0.0
      %2458 = vmatpush1.msra.mxu0 0.0
      %2459 = vmatprep.subr.mxu0 0.0
      %2460 = vmatpush1.msra.mxu0 0.0
      %2461 = vmatprep.subr.mxu0 0.0
      %2462 = vmatpush1.msra.mxu0 0.0
      %2463 = vmatprep.subr.mxu0 0.0
      %2464 = vmatpush1.msra.mxu0 0.0
      %2465 = vmatprep.subr.mxu0 0.0
      %2466 = vmatpush1.msra.mxu0 0.0
      %2467 = vmatprep.subr.mxu0 0.0
      %2468 = vmatpush1.msra.mxu0 0.0
      %2469 = vmatprep.subr.mxu0 0.0
      %2470 = vmatpush1.msra.mxu0 0.0
      %2471 = vmatprep.subr.mxu0 0.0
      %2472 = vmatpush1.msra.mxu0 0.0
      %2473 = vmatprep.subr.mxu0 0.0
      %2474 = vmatpush1.msra.mxu0 0.0
      %2475 = vmatprep.subr.mxu0 0.0
      %2476 = vmatpush1.msra.mxu0 0.0
      %2477 = vmatprep.subr.mxu0 0.0
      %2478 = vmatpush1.msra.mxu0 0.0
      %2479 = vmatprep.mubr.f32.mxu0 0.0
      %2480 = vmatmul.mubr.f32.gmra.mrb[0].mxu0 %v1532
      %v2481 = vpop.f32.mrb[0].mxu0
      %v2482 = vadd.f32 0.0, %v2481
      %v2483 = vpop.f32.mrb[0].mxu0
      %2484 = vmatprep.mubr.f32.mxu0 0.0
      %2485 = vmatmul.mubr.f32.gmra.mrb[0].mxu0 %v1534
      %v2486 = vpop.f32.mrb[0].mxu0
      %v2487 = vadd.f32 0.0, %v2486
      %v2488 = vpop.f32.mrb[0].mxu0
      %2489 = vdwg.mxu0
      %2490 = vmatprep.subr.mxu0 0.0
      %2491 = vmatpush1.msra.mxu0 %v1957
      %2492 = vmatprep.subr.mxu0 0.0
      %2493 = vmatpush1.msra.mxu0 %v1962
      %2494 = vmatprep.subr.mxu0 0.0
      %2495 = vmatpush1.msra.mxu0 0.0
      %2496 = vmatprep.subr.mxu0 0.0
      %2497 = vmatpush1.msra.mxu0 0.0
      %2498 = vmatprep.subr.mxu0 0.0
      %2499 = vmatpush1.msra.mxu0 0.0
      %2500 = vmatprep.subr.mxu0 0.0
      %2501 = vmatpush1.msra.mxu0 0.0
      %2502 = vmatprep.subr.mxu0 0.0
      %2503 = vmatpush1.msra.mxu0 0.0
      %2504 = vmatprep.subr.mxu0 0.0
      %2505 = vmatpush1.msra.mxu0 0.0
      %2506 = vmatprep.subr.mxu0 0.0
      %2507 = vmatpush1.msra.mxu0 0.0
      %2508 = vmatprep.subr.mxu0 0.0
      %2509 = vmatpush1.msra.mxu0 0.0
      %2510 = vmatprep.subr.mxu0 0.0
      %2511 = vmatpush1.msra.mxu0 0.0
      %2512 = vmatprep.subr.mxu0 0.0
      %2513 = vmatpush1.msra.mxu0 0.0
      %2514 = vmatprep.subr.mxu0 0.0
      %2515 = vmatpush1.msra.mxu0 0.0
      %2516 = vmatprep.subr.mxu0 0.0
      %2517 = vmatpush1.msra.mxu0 0.0
      %2518 = vmatprep.subr.mxu0 0.0
      %2519 = vmatpush1.msra.mxu0 0.0
      %2520 = vmatprep.subr.mxu0 0.0
      %2521 = vmatpush1.msra.mxu0 0.0
      %2522 = vmatprep.subr.mxu0 0.0
      %2523 = vmatpush1.msra.mxu0 0.0
      %2524 = vmatprep.subr.mxu0 0.0
      %2525 = vmatpush1.msra.mxu0 0.0
      %2526 = vmatprep.subr.mxu0 0.0
      %2527 = vmatpush1.msra.mxu0 0.0
      %2528 = vmatprep.subr.mxu0 0.0
      %2529 = vmatpush1.msra.mxu0 0.0
      %2530 = vmatprep.subr.mxu0 0.0
      %2531 = vmatpush1.msra.mxu0 0.0
      %2532 = vmatprep.subr.mxu0 0.0
      %2533 = vmatpush1.msra.mxu0 0.0
      %2534 = vmatprep.subr.mxu0 0.0
      %2535 = vmatpush1.msra.mxu0 0.0
      %2536 = vmatprep.subr.mxu0 0.0
      %2537 = vmatpush1.msra.mxu0 0.0
      %2538 = vmatprep.subr.mxu0 0.0
      %2539 = vmatpush1.msra.mxu0 0.0
      %2540 = vmatprep.subr.mxu0 0.0
      %2541 = vmatpush1.msra.mxu0 0.0
      %2542 = vmatprep.subr.mxu0 0.0
      %2543 = vmatpush1.msra.mxu0 0.0
      %2544 = vmatprep.subr.mxu0 0.0
      %2545 = vmatpush1.msra.mxu0 0.0
      %2546 = vmatprep.subr.mxu0 0.0
      %2547 = vmatpush1.msra.mxu0 0.0
      %2548 = vmatprep.subr.mxu0 0.0
      %2549 = vmatpush1.msra.mxu0 0.0
      %2550 = vmatprep.subr.mxu0 0.0
      %2551 = vmatpush1.msra.mxu0 0.0
      %2552 = vmatprep.subr.mxu0 0.0
      %2553 = vmatpush1.msra.mxu0 0.0
      %2554 = vmatprep.mubr.f32.mxu0 0.0
      %2555 = vmatmul.mubr.f32.gmra.mrb[0].mxu0 %v1611
      %v2556 = vpop.f32.mrb[0].mxu0
      %v2557 = vadd.f32 0.0, %v2556
      %v2558 = vpop.f32.mrb[0].mxu0
      %2559 = vmatprep.mubr.f32.mxu0 0.0
      %2560 = vmatmul.mubr.f32.gmra.mrb[0].mxu0 %v1613
      %v2561 = vpop.f32.mrb[0].mxu0
      %v2562 = vadd.f32 0.0, %v2561
      %v2563 = vpop.f32.mrb[0].mxu0
      %2564 = vdwg.mxu0
      %v2565 = vld [vmem:[%s1] sm:$0xff]
      %v2566 = vld [vmem:[%s1 + $0x8] sm:$0xff]
      %v2567 = vld [vmem:[%s1 + $0x10] sm:$0xff]
      %v2568 = vld [vmem:[%s1 + $0x18] sm:$0xff]
      %v2569 = vld [vmem:[%s1 + $0x20] sm:$0x1]
      %vm2570 = vcmp.ge.f32.partialorder %v2032, 0.0
      %vm2571 = vcmp.ge.f32.partialorder %v2037, 0.0
      %vm2572 = vcmp.ge.f32.partialorder %v2107, 0.0
      %vm2573 = vcmp.ge.f32.partialorder %v2112, 0.0
      %vm2574 = vcmp.ge.f32.partialorder %v2182, 0.0
      %vm2575 = vcmp.ge.f32.partialorder %v2187, 0.0
      %vm2576 = vcmp.ge.f32.partialorder %v2257, 0.0
      %vm2577 = vcmp.ge.f32.partialorder %v2262, 0.0
      %vm2578 = vcmp.ge.f32.partialorder %v2332, 0.0
      %vm2579 = vcmp.ge.f32.partialorder %v2337, 0.0
      %vm2580 = vcmp.ge.f32.partialorder %v2407, 0.0
      %vm2581 = vcmp.ge.f32.partialorder %v2412, 0.0
      %vm2582 = vcmp.ge.f32.partialorder %v2482, 0.0
      %vm2583 = vcmp.ge.f32.partialorder %v2487, 0.0
      %vm2584 = vcmp.ge.f32.partialorder %v2557, 0.0
      %vm2585 = vcmp.ge.f32.partialorder %v2562, 0.0
      %v2586 = vmul.f32 %v2032, 0.01
      %v2587 = vmul.f32 %v2037, 0.01
      %v2588 = vmul.f32 %v2107, 0.01
      %v2589 = vmul.f32 %v2112, 0.01
      %v2590 = vmul.f32 %v2182, 0.01
      %v2591 = vmul.f32 %v2187, 0.01
      %v2592 = vmul.f32 %v2257, 0.01
      %v2593 = vmul.f32 %v2262, 0.01
      %v2594 = vmul.f32 %v2332, 0.01
      %v2595 = vmul.f32 %v2337, 0.01
      %v2596 = vmul.f32 %v2407, 0.01
      %v2597 = vmul.f32 %v2412, 0.01
      %v2598 = vmul.f32 %v2482, 0.01
      %v2599 = vmul.f32 %v2487, 0.01
      %v2600 = vmul.f32 %v2557, 0.01
      %v2601 = vmul.f32 %v2562, 0.01
      %v2602 = vsel %vm2570, %v2032, %v2586
      %v2603 = vsel %vm2571, %v2037, %v2587
      %v2604 = vsel %vm2572, %v2107, %v2588
      %v2605 = vsel %vm2573, %v2112, %v2589
      %v2606 = vsel %vm2574, %v2182, %v2590
      %v2607 = vsel %vm2575, %v2187, %v2591
      %v2608 = vsel %vm2576, %v2257, %v2592
      %v2609 = vsel %vm2577, %v2262, %v2593
      %v2610 = vsel %vm2578, %v2332, %v2594
      %v2611 = vsel %vm2579, %v2337, %v2595
      %v2612 = vsel %vm2580, %v2407, %v2596
      %v2613 = vsel %vm2581, %v2412, %v2597
      %v2614 = vsel %vm2582, %v2482, %v2598
      %v2615 = vsel %vm2583, %v2487, %v2599
      %v2616 = vsel %vm2584, %v2557, %v2600
      %v2617 = vsel %vm2585, %v2562, %v2601
      %v2618 = vlaneseq
      %v2619 = vshrl.u32 %v2618, 7
      %v2620 = vsub.s32 0, %v2619
      %v2621 = vrot.slane %v2569, %v2620
      %2626 = vrot.lane.b32.xlu0 %v2565, 32
      %v2627 = vpop.permute.xlu0 %2626
      %2628 = vrot.lane.b32.xlu0 %v2566, 32
      %v2629 = vpop.permute.xlu0 %2628
      %2630 = vrot.lane.b32.xlu0 %v2567, 32
      %v2631 = vpop.permute.xlu0 %2630
      %2632 = vrot.lane.b32.xlu0 %v2568, 32
      %v2633 = vpop.permute.xlu0 %2632
      %2639 = vrot.lane.b32.xlu0 %v2621, 32
      %v2640 = vpop.permute.xlu0 %2639
      %v2643 = vsel %vm225, %v2602, 0
      %v2646 = vsel %vm225, %v2603, 0
      %v2649 = vsel %vm225, %v2604, 0
      %v2652 = vsel %vm225, %v2605, 0
      %v2655 = vsel %vm225, %v2606, 0
      %v2658 = vsel %vm225, %v2607, 0
      %v2661 = vsel %vm225, %v2608, 0
      %v2664 = vsel %vm225, %v2609, 0
      %v2667 = vsel %vm225, %v2610, 0
      %v2670 = vsel %vm225, %v2611, 0
      %v2673 = vsel %vm225, %v2612, 0
      %v2676 = vsel %vm225, %v2613, 0
      %v2679 = vsel %vm225, %v2614, 0
      %v2682 = vsel %vm225, %v2615, 0
      %v2685 = vsel %vm225, %v2616, 0
      %v2688 = vsel %vm225, %v2617, 0
      %2690 = vmatprep.subr.mxu0 0.0
      %2691 = vmatpush1.msra.mxu0 %v2627
      %2692 = vmatprep.subr.mxu0 0.0
      %2693 = vmatpush1.msra.mxu0 %v2629
      %2694 = vmatprep.subr.mxu0 0.0
      %2695 = vmatpush1.msra.mxu0 %v2631
      %2696 = vmatprep.subr.mxu0 0.0
      %2697 = vmatpush1.msra.mxu0 %v2633
      %2698 = vmatprep.subr.mxu0 0.0
      %2699 = vmatpush1.msra.mxu0 0.0
      %2700 = vmatprep.subr.mxu0 0.0
      %2701 = vmatpush1.msra.mxu0 0.0
      %2702 = vmatprep.subr.mxu0 0.0
      %2703 = vmatpush1.msra.mxu0 0.0
      %2704 = vmatprep.subr.mxu0 0.0
      %2705 = vmatpush1.msra.mxu0 0.0
      %2706 = vmatprep.subr.mxu0 0.0
      %2707 = vmatpush1.msra.mxu0 0.0
      %2708 = vmatprep.subr.mxu0 0.0
      %2709 = vmatpush1.msra.mxu0 0.0
      %2710 = vmatprep.subr.mxu0 0.0
      %2711 = vmatpush1.msra.mxu0 0.0
      %2712 = vmatprep.subr.mxu0 0.0
      %2713 = vmatpush1.msra.mxu0 0.0
      %2714 = vmatprep.subr.mxu0 0.0
      %2715 = vmatpush1.msra.mxu0 0.0
      %2716 = vmatprep.subr.mxu0 0.0
      %2717 = vmatpush1.msra.mxu0 0.0
      %2718 = vmatprep.subr.mxu0 0.0
      %2719 = vmatpush1.msra.mxu0 0.0
      %2720 = vmatprep.subr.mxu0 0.0
      %2721 = vmatpush1.msra.mxu0 0.0
      %2722 = vmatprep.subr.mxu0 0.0
      %2723 = vmatpush1.msra.mxu0 0.0
      %2724 = vmatprep.subr.mxu0 0.0
      %2725 = vmatpush1.msra.mxu0 0.0
      %2726 = vmatprep.subr.mxu0 0.0
      %2727 = vmatpush1.msra.mxu0 0.0
      %2728 = vmatprep.subr.mxu0 0.0
      %2729 = vmatpush1.msra.mxu0 0.0
      %2730 = vmatprep.subr.mxu0 0.0
      %2731 = vmatpush1.msra.mxu0 0.0
      %2732 = vmatprep.subr.mxu0 0.0
      %2733 = vmatpush1.msra.mxu0 0.0
      %2734 = vmatprep.subr.mxu0 0.0
      %2735 = vmatpush1.msra.mxu0 0.0
      %2736 = vmatprep.subr.mxu0 0.0
      %2737 = vmatpush1.msra.mxu0 0.0
      %2738 = vmatprep.subr.mxu0 0.0
      %2739 = vmatpush1.msra.mxu0 0.0
      %2740 = vmatprep.subr.mxu0 0.0
      %2741 = vmatpush1.msra.mxu0 0.0
      %2742 = vmatprep.subr.mxu0 0.0
      %2743 = vmatpush1.msra.mxu0 0.0
      %2744 = vmatprep.subr.mxu0 0.0
      %2745 = vmatpush1.msra.mxu0 0.0
      %2746 = vmatprep.subr.mxu0 0.0
      %2747 = vmatpush1.msra.mxu0 0.0
      %2748 = vmatprep.subr.mxu0 0.0
      %2749 = vmatpush1.msra.mxu0 0.0
      %2750 = vmatprep.subr.mxu0 0.0
      %2751 = vmatpush1.msra.mxu0 0.0
      %2752 = vmatprep.subr.mxu0 0.0
      %2753 = vmatpush1.msra.mxu0 0.0
      %2754 = vmatprep.mubr.f32.mxu0 0.0
      %2755 = vmatmul.mubr.f32.gmra.mrb[0].mxu0 %v2643
      %v2756 = vpop.f32.mrb[0].mxu0
      %v2757 = vadd.f32 %v2640, %v2756
      %v2758 = vpop.f32.mrb[0].mxu0
      %2759 = vmatprep.mubr.f32.mxu0 0.0
      %2760 = vmatmul.mubr.f32.gmra.mrb[0].mxu0 %v2646
      %v2761 = vpop.f32.mrb[0].mxu0
      %v2762 = vadd.f32 %v2640, %v2761
      %v2763 = vpop.f32.mrb[0].mxu0
      %2764 = vmatprep.mubr.f32.mxu0 0.0
      %2765 = vmatmul.mubr.f32.gmra.mrb[0].mxu0 %v2649
      %v2766 = vpop.f32.mrb[0].mxu0
      %v2767 = vadd.f32 %v2640, %v2766
      %v2768 = vpop.f32.mrb[0].mxu0
      %2769 = vmatprep.mubr.f32.mxu0 0.0
      %2770 = vmatmul.mubr.f32.gmra.mrb[0].mxu0 %v2652
      %v2771 = vpop.f32.mrb[0].mxu0
      %v2772 = vadd.f32 %v2640, %v2771
      %v2773 = vpop.f32.mrb[0].mxu0
      %2774 = vmatprep.mubr.f32.mxu0 0.0
      %2775 = vmatmul.mubr.f32.gmra.mrb[0].mxu0 %v2655
      %v2776 = vpop.f32.mrb[0].mxu0
      %v2777 = vadd.f32 %v2640, %v2776
      %v2778 = vpop.f32.mrb[0].mxu0
      %2779 = vmatprep.mubr.f32.mxu0 0.0
      %2780 = vmatmul.mubr.f32.gmra.mrb[0].mxu0 %v2658
      %v2781 = vpop.f32.mrb[0].mxu0
      %v2782 = vadd.f32 %v2640, %v2781
      %v2783 = vpop.f32.mrb[0].mxu0
      %2784 = vmatprep.mubr.f32.mxu0 0.0
      %2785 = vmatmul.mubr.f32.gmra.mrb[0].mxu0 %v2661
      %v2786 = vpop.f32.mrb[0].mxu0
      %v2787 = vadd.f32 %v2640, %v2786
      %v2788 = vpop.f32.mrb[0].mxu0
      %2789 = vmatprep.mubr.f32.mxu0 0.0
      %2790 = vmatmul.mubr.f32.gmra.mrb[0].mxu0 %v2664
      %v2791 = vpop.f32.mrb[0].mxu0
      %v2792 = vadd.f32 %v2640, %v2791
      %v2793 = vpop.f32.mrb[0].mxu0
      %2794 = vmatprep.mubr.f32.mxu0 0.0
      %2795 = vmatmul.mubr.f32.gmra.mrb[0].mxu0 %v2667
      %v2796 = vpop.f32.mrb[0].mxu0
      %v2797 = vadd.f32 %v2640, %v2796
      %v2798 = vpop.f32.mrb[0].mxu0
      %2799 = vmatprep.mubr.f32.mxu0 0.0
      %2800 = vmatmul.mubr.f32.gmra.mrb[0].mxu0 %v2670
      %v2801 = vpop.f32.mrb[0].mxu0
      %v2802 = vadd.f32 %v2640, %v2801
      %v2803 = vpop.f32.mrb[0].mxu0
      %2804 = vmatprep.mubr.f32.mxu0 0.0
      %2805 = vmatmul.mubr.f32.gmra.mrb[0].mxu0 %v2673
      %v2806 = vpop.f32.mrb[0].mxu0
      %v2807 = vadd.f32 %v2640, %v2806
      %v2808 = vpop.f32.mrb[0].mxu0
      %2809 = vmatprep.mubr.f32.mxu0 0.0
      %2810 = vmatmul.mubr.f32.gmra.mrb[0].mxu0 %v2676
      %v2811 = vpop.f32.mrb[0].mxu0
      %v2812 = vadd.f32 %v2640, %v2811
      %v2813 = vpop.f32.mrb[0].mxu0
      %2814 = vmatprep.mubr.f32.mxu0 0.0
      %2815 = vmatmul.mubr.f32.gmra.mrb[0].mxu0 %v2679
      %v2816 = vpop.f32.mrb[0].mxu0
      %v2817 = vadd.f32 %v2640, %v2816
      %v2818 = vpop.f32.mrb[0].mxu0
      %2819 = vmatprep.mubr.f32.mxu0 0.0
      %2820 = vmatmul.mubr.f32.gmra.mrb[0].mxu0 %v2682
      %v2821 = vpop.f32.mrb[0].mxu0
      %v2822 = vadd.f32 %v2640, %v2821
      %v2823 = vpop.f32.mrb[0].mxu0
      %2824 = vmatprep.mubr.f32.mxu0 0.0
      %2825 = vmatmul.mubr.f32.gmra.mrb[0].mxu0 %v2685
      %v2826 = vpop.f32.mrb[0].mxu0
      %v2827 = vadd.f32 %v2640, %v2826
      %v2828 = vpop.f32.mrb[0].mxu0
      %2829 = vmatprep.mubr.f32.mxu0 0.0
      %2830 = vmatmul.mubr.f32.gmra.mrb[0].mxu0 %v2688
      %v2831 = vpop.f32.mrb[0].mxu0
      %v2832 = vadd.f32 %v2640, %v2831
      %v2833 = vpop.f32.mrb[0].mxu0
      %2834 = vdwg.mxu0
      %2835 = vrot.lane.b32.xlu0 %v152, 80
      %v2836 = vpop.permute.xlu0 %2835
      %2837 = vrot.lane.b32.xlu0 %v153, 80
      %v2838 = vpop.permute.xlu0 %2837
      %2839 = vrot.lane.b32.xlu0 %v154, 80
      %v2840 = vpop.permute.xlu0 %2839
      %2841 = vrot.lane.b32.xlu0 %v155, 80
      %v2842 = vpop.permute.xlu0 %2841
      %2843 = vrot.lane.b32.xlu0 %v156, 80
      %v2844 = vpop.permute.xlu0 %2843
      %2845 = vrot.lane.b32.xlu0 %v157, 80
      %v2846 = vpop.permute.xlu0 %2845
      %2847 = vrot.lane.b32.xlu0 %v158, 80
      %v2848 = vpop.permute.xlu0 %2847
      %2849 = vrot.lane.b32.xlu0 %v159, 80
      %v2850 = vpop.permute.xlu0 %2849
      %2851 = vrot.lane.b32.xlu0 %v160, 80
      %v2852 = vpop.permute.xlu0 %2851
      %2853 = vrot.lane.b32.xlu0 %v161, 80
      %v2854 = vpop.permute.xlu0 %2853
      %2855 = vrot.lane.b32.xlu0 %v162, 80
      %v2856 = vpop.permute.xlu0 %2855
      %2857 = vrot.lane.b32.xlu0 %v163, 80
      %v2858 = vpop.permute.xlu0 %2857
      %2859 = vrot.lane.b32.xlu0 %v164, 80
      %v2860 = vpop.permute.xlu0 %2859
      %2861 = vrot.lane.b32.xlu0 %v165, 80
      %v2862 = vpop.permute.xlu0 %2861
      %2863 = vrot.lane.b32.xlu0 %v166, 80
      %v2864 = vpop.permute.xlu0 %2863
      %2865 = vrot.lane.b32.xlu0 %v167, 80
      %v2866 = vpop.permute.xlu0 %2865
      %v2883 = vsub.f32 %v2757, %v2836
      %v2884 = vsub.f32 %v2762, %v2838
      %v2885 = vsub.f32 %v2767, %v2840
      %v2886 = vsub.f32 %v2772, %v2842
      %v2887 = vsub.f32 %v2777, %v2844
      %v2888 = vsub.f32 %v2782, %v2846
      %v2889 = vsub.f32 %v2787, %v2848
      %v2890 = vsub.f32 %v2792, %v2850
      %v2891 = vsub.f32 %v2797, %v2852
      %v2892 = vsub.f32 %v2802, %v2854
      %v2893 = vsub.f32 %v2807, %v2856
      %v2894 = vsub.f32 %v2812, %v2858
      %v2895 = vsub.f32 %v2817, %v2860
      %v2896 = vsub.f32 %v2822, %v2862
      %v2897 = vsub.f32 %v2827, %v2864
      %v2898 = vsub.f32 %v2832, %v2866
      %v2899 = vmul.f32 %v2883, %v2883
      %v2900 = vmul.f32 %v2884, %v2884
      %v2901 = vmul.f32 %v2885, %v2885
      %v2902 = vmul.f32 %v2886, %v2886
      %v2903 = vmul.f32 %v2887, %v2887
      %v2904 = vmul.f32 %v2888, %v2888
      %v2905 = vmul.f32 %v2889, %v2889
      %v2906 = vmul.f32 %v2890, %v2890
      %v2907 = vmul.f32 %v2891, %v2891
      %v2908 = vmul.f32 %v2892, %v2892
      %v2909 = vmul.f32 %v2893, %v2893
      %v2910 = vmul.f32 %v2894, %v2894
      %v2911 = vmul.f32 %v2895, %v2895
      %v2912 = vmul.f32 %v2896, %v2896
      %v2913 = vmul.f32 %v2897, %v2897
      %v2914 = vmul.f32 %v2898, %v2898
      %v2915 = vsel %vm1057, %v2899, 0.0
      %2916 = vadd.xlane.f32.xlu0 %v2915
      %v2917 = vpop.xlane.xlu0 %2916
      %v2918 = vsel %vm1057, %v2900, 0.0
      %2919 = vadd.xlane.f32.xlu0 %v2918
      %v2920 = vpop.xlane.xlu0 %2919
      %v2921 = vsel %vm1057, %v2901, 0.0
      %2922 = vadd.xlane.f32.xlu0 %v2921
      %v2923 = vpop.xlane.xlu0 %2922
      %v2924 = vsel %vm1057, %v2902, 0.0
      %2925 = vadd.xlane.f32.xlu0 %v2924
      %v2926 = vpop.xlane.xlu0 %2925
      %v2927 = vsel %vm1057, %v2903, 0.0
      %2928 = vadd.xlane.f32.xlu0 %v2927
      %v2929 = vpop.xlane.xlu0 %2928
      %v2930 = vsel %vm1057, %v2904, 0.0
      %2931 = vadd.xlane.f32.xlu0 %v2930
      %v2932 = vpop.xlane.xlu0 %2931
      %v2933 = vsel %vm1057, %v2905, 0.0
      %2934 = vadd.xlane.f32.xlu0 %v2933
      %v2935 = vpop.xlane.xlu0 %2934
      %v2936 = vsel %vm1057, %v2906, 0.0
      %2937 = vadd.xlane.f32.xlu0 %v2936
      %v2938 = vpop.xlane.xlu0 %2937
      %v2939 = vsel %vm1057, %v2907, 0.0
      %2940 = vadd.xlane.f32.xlu0 %v2939
      %v2941 = vpop.xlane.xlu0 %2940
      %v2942 = vsel %vm1057, %v2908, 0.0
      %2943 = vadd.xlane.f32.xlu0 %v2942
      %v2944 = vpop.xlane.xlu0 %2943
      %v2945 = vsel %vm1057, %v2909, 0.0
      %2946 = vadd.xlane.f32.xlu0 %v2945
      %v2947 = vpop.xlane.xlu0 %2946
      %v2948 = vsel %vm1057, %v2910, 0.0
      %2949 = vadd.xlane.f32.xlu0 %v2948
      %v2950 = vpop.xlane.xlu0 %2949
      %v2951 = vsel %vm1057, %v2911, 0.0
      %2952 = vadd.xlane.f32.xlu0 %v2951
      %v2953 = vpop.xlane.xlu0 %2952
      %v2954 = vsel %vm1057, %v2912, 0.0
      %2955 = vadd.xlane.f32.xlu0 %v2954
      %v2956 = vpop.xlane.xlu0 %2955
      %v2957 = vsel %vm1057, %v2913, 0.0
      %2958 = vadd.xlane.f32.xlu0 %v2957
      %v2959 = vpop.xlane.xlu0 %2958
      %v2960 = vsel %vm1057, %v2914, 0.0
      %2961 = vadd.xlane.f32.xlu0 %v2960
      %v2962 = vpop.xlane.xlu0 %2961
      %v2963 = vadd.f32 %v2917, %v2920
      %v2964 = vrot.slane %v2963, 4
      %v2965 = vadd.f32 %v2963, %v2964
      %v2966 = vrot.slane %v2965, 2
      %v2967 = vadd.f32 %v2965, %v2966
      %v2968 = vrot.slane %v2967, 1
      %v2969 = vadd.f32 %v2967, %v2968
      %v2970 = vadd.f32 %v2923, %v2926
      %v2971 = vrot.slane %v2970, 4
      %v2972 = vadd.f32 %v2970, %v2971
      %v2973 = vrot.slane %v2972, 2
      %v2974 = vadd.f32 %v2972, %v2973
      %v2975 = vrot.slane %v2974, 1
      %v2976 = vadd.f32 %v2974, %v2975
      %v2977 = vadd.f32 %v2929, %v2932
      %v2978 = vrot.slane %v2977, 4
      %v2979 = vadd.f32 %v2977, %v2978
      %v2980 = vrot.slane %v2979, 2
      %v2981 = vadd.f32 %v2979, %v2980
      %v2982 = vrot.slane %v2981, 1
      %v2983 = vadd.f32 %v2981, %v2982
      %v2984 = vadd.f32 %v2935, %v2938
      %v2985 = vrot.slane %v2984, 4
      %v2986 = vadd.f32 %v2984, %v2985
      %v2987 = vrot.slane %v2986, 2
      %v2988 = vadd.f32 %v2986, %v2987
      %v2989 = vrot.slane %v2988, 1
      %v2990 = vadd.f32 %v2988, %v2989
      %v2991 = vadd.f32 %v2941, %v2944
      %v2992 = vrot.slane %v2991, 4
      %v2993 = vadd.f32 %v2991, %v2992
      %v2994 = vrot.slane %v2993, 2
      %v2995 = vadd.f32 %v2993, %v2994
      %v2996 = vrot.slane %v2995, 1
      %v2997 = vadd.f32 %v2995, %v2996
      %v2998 = vadd.f32 %v2947, %v2950
      %v2999 = vrot.slane %v2998, 4
      %v3000 = vadd.f32 %v2998, %v2999
      %v3001 = vrot.slane %v3000, 2
      %v3002 = vadd.f32 %v3000, %v3001
      %v3003 = vrot.slane %v3002, 1
      %v3004 = vadd.f32 %v3002, %v3003
      %v3005 = vadd.f32 %v2953, %v2956
      %v3006 = vrot.slane %v3005, 4
      %v3007 = vadd.f32 %v3005, %v3006
      %v3008 = vrot.slane %v3007, 2
      %v3009 = vadd.f32 %v3007, %v3008
      %v3010 = vrot.slane %v3009, 1
      %v3011 = vadd.f32 %v3009, %v3010
      %v3012 = vadd.f32 %v2959, %v2962
      %v3013 = vrot.slane %v3012, 4
      %v3014 = vadd.f32 %v3012, %v3013
      %v3015 = vrot.slane %v3014, 2
      %v3016 = vadd.f32 %v3014, %v3015
      %v3017 = vrot.slane %v3016, 1
      %v3018 = vadd.f32 %v3016, %v3017
      %v3019 = vmul.f32 %v2969, 0.00390625
      %v3020 = vmul.f32 %v2976, 0.00390625
      %v3021 = vmul.f32 %v2983, 0.00390625
      %v3022 = vmul.f32 %v2990, 0.00390625
      %v3023 = vmul.f32 %v2997, 0.00390625
      %v3024 = vmul.f32 %v3004, 0.00390625
      %v3025 = vmul.f32 %v3011, 0.00390625
      %v3026 = vmul.f32 %v3018, 0.00390625
      %3027 = vst.msk [vmem:[%s150] sm:$0xff] %vm225, %v2032
      %3028 = vst.msk [vmem:[%s150 + $0x8] sm:$0xff] %vm225, %v2037
      %3029 = vst.msk [vmem:[%s150 + $0x10] sm:$0xff] %vm225, %v2107
      %3030 = vst.msk [vmem:[%s150 + $0x18] sm:$0xff] %vm225, %v2112
      %3031 = vst.msk [vmem:[%s150 + $0x20] sm:$0xff] %vm225, %v2182
      %3032 = vst.msk [vmem:[%s150 + $0x28] sm:$0xff] %vm225, %v2187
      %3033 = vst.msk [vmem:[%s150 + $0x30] sm:$0xff] %vm225, %v2257
      %3034 = vst.msk [vmem:[%s150 + $0x38] sm:$0xff] %vm225, %v2262
      %3035 = vst.msk [vmem:[%s150 + $0x40] sm:$0xff] %vm225, %v2332
      %3036 = vst.msk [vmem:[%s150 + $0x48] sm:$0xff] %vm225, %v2337
      %3037 = vst.msk [vmem:[%s150 + $0x50] sm:$0xff] %vm225, %v2407
      %3038 = vst.msk [vmem:[%s150 + $0x58] sm:$0xff] %vm225, %v2412
      %3039 = vst.msk [vmem:[%s150 + $0x60] sm:$0xff] %vm225, %v2482
      %3040 = vst.msk [vmem:[%s150 + $0x68] sm:$0xff] %vm225, %v2487
      %3041 = vst.msk [vmem:[%s150 + $0x70] sm:$0xff] %vm225, %v2557
      %3042 = vst.msk [vmem:[%s150 + $0x78] sm:$0xff] %vm225, %v2562
      %3059 = vrot.lane.b32.xlu0 %v2757, 32
      %v3060 = vpop.permute.xlu0 %3059
      %3061 = vrot.lane.b32.xlu0 %v2762, 32
      %v3062 = vpop.permute.xlu0 %3061
      %3063 = vrot.lane.b32.xlu0 %v2767, 32
      %v3064 = vpop.permute.xlu0 %3063
      %3065 = vrot.lane.b32.xlu0 %v2772, 32
      %v3066 = vpop.permute.xlu0 %3065
      %3067 = vrot.lane.b32.xlu0 %v2777, 32
      %v3068 = vpop.permute.xlu0 %3067
      %3069 = vrot.lane.b32.xlu0 %v2782, 32
      %v3070 = vpop.permute.xlu0 %3069
      %3071 = vrot.lane.b32.xlu0 %v2787, 32
      %v3072 = vpop.permute.xlu0 %3071
      %3073 = vrot.lane.b32.xlu0 %v2792, 32
      %v3074 = vpop.permute.xlu0 %3073
      %3075 = vrot.lane.b32.xlu0 %v2797, 32
      %v3076 = vpop.permute.xlu0 %3075
      %3077 = vrot.lane.b32.xlu0 %v2802, 32
      %v3078 = vpop.permute.xlu0 %3077
      %3079 = vrot.lane.b32.xlu0 %v2807, 32
      %v3080 = vpop.permute.xlu0 %3079
      %3081 = vrot.lane.b32.xlu0 %v2812, 32
      %v3082 = vpop.permute.xlu0 %3081
      %3083 = vrot.lane.b32.xlu0 %v2817, 32
      %v3084 = vpop.permute.xlu0 %3083
      %3085 = vrot.lane.b32.xlu0 %v2822, 32
      %v3086 = vpop.permute.xlu0 %3085
      %3087 = vrot.lane.b32.xlu0 %v2827, 32
      %v3088 = vpop.permute.xlu0 %3087
      %3089 = vrot.lane.b32.xlu0 %v2832, 32
      %v3090 = vpop.permute.xlu0 %3089
      %vm3107 = vcmask 392448
      %3108 = vst.msk [vmem:[%s150] sm:$0xff] %vm3107, %v3060
      %3109 = vst.msk [vmem:[%s150 + $0x8] sm:$0xff] %vm3107, %v3062
      %3110 = vst.msk [vmem:[%s150 + $0x10] sm:$0xff] %vm3107, %v3064
      %3111 = vst.msk [vmem:[%s150 + $0x18] sm:$0xff] %vm3107, %v3066
      %3112 = vst.msk [vmem:[%s150 + $0x20] sm:$0xff] %vm3107, %v3068
      %3113 = vst.msk [vmem:[%s150 + $0x28] sm:$0xff] %vm3107, %v3070
      %3114 = vst.msk [vmem:[%s150 + $0x30] sm:$0xff] %vm3107, %v3072
      %3115 = vst.msk [vmem:[%s150 + $0x38] sm:$0xff] %vm3107, %v3074
      %3116 = vst.msk [vmem:[%s150 + $0x40] sm:$0xff] %vm3107, %v3076
      %3117 = vst.msk [vmem:[%s150 + $0x48] sm:$0xff] %vm3107, %v3078
      %3118 = vst.msk [vmem:[%s150 + $0x50] sm:$0xff] %vm3107, %v3080
      %3119 = vst.msk [vmem:[%s150 + $0x58] sm:$0xff] %vm3107, %v3082
      %3120 = vst.msk [vmem:[%s150 + $0x60] sm:$0xff] %vm3107, %v3084
      %3121 = vst.msk [vmem:[%s150 + $0x68] sm:$0xff] %vm3107, %v3086
      %3122 = vst.msk [vmem:[%s150 + $0x70] sm:$0xff] %vm3107, %v3088
      %3123 = vst.msk [vmem:[%s150 + $0x78] sm:$0xff] %vm3107, %v3090
      %vm3124 = vcmask 523648
      %3125 = vst.msk [vmem:[%s150] sm:$0xff] %vm3124, %v3019
      %3126 = vst.msk [vmem:[%s150 + $0x8] sm:$0xff] %vm3124, %v3019
      %3127 = vst.msk [vmem:[%s150 + $0x10] sm:$0xff] %vm3124, %v3020
      %3128 = vst.msk [vmem:[%s150 + $0x18] sm:$0xff] %vm3124, %v3020
      %3129 = vst.msk [vmem:[%s150 + $0x20] sm:$0xff] %vm3124, %v3021
      %3130 = vst.msk [vmem:[%s150 + $0x28] sm:$0xff] %vm3124, %v3021
      %3131 = vst.msk [vmem:[%s150 + $0x30] sm:$0xff] %vm3124, %v3022
      %3132 = vst.msk [vmem:[%s150 + $0x38] sm:$0xff] %vm3124, %v3022
      %3133 = vst.msk [vmem:[%s150 + $0x40] sm:$0xff] %vm3124, %v3023
      %3134 = vst.msk [vmem:[%s150 + $0x48] sm:$0xff] %vm3124, %v3023
      %3135 = vst.msk [vmem:[%s150 + $0x50] sm:$0xff] %vm3124, %v3024
      %3136 = vst.msk [vmem:[%s150 + $0x58] sm:$0xff] %vm3124, %v3024
      %3137 = vst.msk [vmem:[%s150 + $0x60] sm:$0xff] %vm3124, %v3025
      %3138 = vst.msk [vmem:[%s150 + $0x68] sm:$0xff] %vm3124, %v3025
      %3139 = vst.msk [vmem:[%s150 + $0x70] sm:$0xff] %vm3124, %v3026
      %3140 = vst.msk [vmem:[%s150 + $0x78] sm:$0xff] %vm3124, %v3026
      %vm3141 = vcmask 1048064
      %3142 = vst.msk [vmem:[%s150] sm:$0xff] %vm3141, 0.0
      %3143 = vst.msk [vmem:[%s150 + $0x8] sm:$0xff] %vm3141, 0.0
      %3144 = vst.msk [vmem:[%s150 + $0x10] sm:$0xff] %vm3141, 0.0
      %3145 = vst.msk [vmem:[%s150 + $0x18] sm:$0xff] %vm3141, 0.0
      %3146 = vst.msk [vmem:[%s150 + $0x20] sm:$0xff] %vm3141, 0.0
      %3147 = vst.msk [vmem:[%s150 + $0x28] sm:$0xff] %vm3141, 0.0
      %3148 = vst.msk [vmem:[%s150 + $0x30] sm:$0xff] %vm3141, 0.0
      %3149 = vst.msk [vmem:[%s150 + $0x38] sm:$0xff] %vm3141, 0.0
      %3150 = vst.msk [vmem:[%s150 + $0x40] sm:$0xff] %vm3141, 0.0
      %3151 = vst.msk [vmem:[%s150 + $0x48] sm:$0xff] %vm3141, 0.0
      %3152 = vst.msk [vmem:[%s150 + $0x50] sm:$0xff] %vm3141, 0.0
      %3153 = vst.msk [vmem:[%s150 + $0x58] sm:$0xff] %vm3141, 0.0
      %3154 = vst.msk [vmem:[%s150 + $0x60] sm:$0xff] %vm3141, 0.0
      %3155 = vst.msk [vmem:[%s150 + $0x68] sm:$0xff] %vm3141, 0.0
      %3156 = vst.msk [vmem:[%s150 + $0x70] sm:$0xff] %vm3141, 0.0
      %3157 = vst.msk [vmem:[%s150 + $0x78] sm:$0xff] %vm3141, 0.0
      %s3158 = smul.u32 8, %s13
      %p3159 = scmp.lt.s32.totalorder %s3158, 15
      %s3160 = scalar_select %p3159, %s3158, 15
      %s3161 = smul.addr %s3160, 2
      %s3162 = smul.addr %s3161, 8
      %s3163 = scalar_lea.vmem %s2, %s3162
      // Predicated region
      $region29: #{predictor_forward_batched.1} parent=27 // pred_check
        %p3164 = pneg %p78
      $region30: #{predictor_forward_batched.1} parent=27 // pred_check_branch
        %3166 = sbr.rel (%p3164) target = $region32
      $region31: #{predictor_forward_batched.1} parent=27 // pred_region
        %s3167 = smul.u32 8, %s13
      $region32: #{predictor_forward_batched.1} parent=27 // pred_fallthru
        _
    $region28: #{predictor_forward_batched.1} parent=5 // pred_fallthru
      _
    %p3168 = scmp.le.s32.totalorder 2, %s8
    // Predicated region
    $region33: #{predictor_forward_batched.1} parent=5 // pred_check
      %p3169 = pneg %p3168
    $region34: #{predictor_forward_batched.1} parent=5 // pred_check_branch
      %3171 = sbr.rel (%p3169) target = $region36
    $region35: #{predictor_forward_batched.1} parent=5 // pred_region
      %s3172 = ssub.s32 %s8, 2
      // Predicated region
      $region37: #{predictor_forward_batched.1} parent=35 // pred_check
        %p3173 = pneg %p84
      $region38: #{predictor_forward_batched.1} parent=35 // pred_check_branch
        %3175 = sbr.rel (%p3173) target = $region40
      $region39: #{predictor_forward_batched.1} parent=35 // pred_region
        %s3176 = smul.u32 8, %s14
        %p3177 = scmp.lt.s32.totalorder %s3176, 15
        %s3178 = scalar_select %p3177, %s3176, 15
        %s3179 = smul.addr %s3178, 2
        %s3180 = smul.addr %s3179, 8
        %s3181 = scalar_lea.vmem %s2, %s3180
      $region40: #{predictor_forward_batched.1} parent=35 // pred_fallthru
        _
    $region36: #{predictor_forward_batched.1} parent=5 // pred_fallthru
      _
  $region6: #{predictor_forward_batched.1} parent=0 // loop_footer
    %s12 = sadd.s32 1, %s8
  $region7: #{predictor_forward_batched.1} parent=0 // loop_footer_branch
    %7 = sbr.rel target = $region3
  $region8: #{predictor_forward_batched.1} parent=0 // loop_exit
    _

</llo_original>
